<compile_context>
chip_gen: v6e
topology: v6e:2x2x1
jax: 0.10.0
libtpu: 0.0.40
codegen_flags: <defaults>
</compile_context>

<pallas_src>
import functools

import jax
import jax.numpy as jnp
from jax import lax
from jax.experimental import pallas as pl
from jax.experimental.pallas import tpu as pltpu

EPS = 1e-6
NUM_GROUPS = 32


# ------------------------- generation-specific config ------------------------

def _tpu_generation():
    kind = jax.devices()[0].device_kind.lower()
    for g in (7, 6, 5, 4):
        if f"v{g}" in kind:
            return g
    return 0  # unknown -> conservative defaults


def _vmem_limit_bytes(gen):
    if gen >= 7:
        return 48 << 20      # v7x: 64 MiB physical per TC -> leave headroom
    if gen in (5, 6):
        return 100 << 20     # v5e/v6e: 128 MiB physical VMEM
    return None              # unknown chip: keep the compiler default


# ----------------------------- in-kernel helpers -----------------------------

def _swish(x):
    return x * jax.nn.sigmoid(x)


def _shift_rows(x, offset):
    """y[i] = x[(i + offset) mod n] along axis 0 (static offset, XLU rotate)."""
    n = x.shape[0]
    s = (-offset) % n
    if s == 0:
        return x
    return pltpu.roll(x, shift=s, axis=0)


def _group_norm(x2d, gamma, beta, m, mt, inv_n, mxu_reduce):
    """GroupNorm over an (HW, Cp) f32 tile (f32 stats, two-pass variance).

    m  : (Cp, G) 0/1 channel->group membership (zero rows for padded channels).
    mt : (G, Cp) its transpose (precomputed; avoids an in-kernel transpose).
    mxu_reduce=True (v6e/v7x): channel->group reduction done as a big-M MXU dot
    then a narrow (HW, G) row-sum; False (v5e): cross-sublane channel sums
    followed by tiny M=1 dots.
    """
    if mxu_reduce:
        xg = jnp.dot(x2d, m, preferred_element_type=jnp.float32)            # (HW, G)
        gmean = jnp.sum(xg, axis=0, keepdims=True) * inv_n                  # (1, G)
    else:
        sum_c = jnp.sum(x2d, axis=0, keepdims=True)                         # (1, Cp)
        gmean = jnp.dot(sum_c, m, preferred_element_type=jnp.float32) * inv_n
    mean_c = jnp.dot(gmean, mt, preferred_element_type=jnp.float32)         # (1, Cp)
    d = x2d - mean_c
    if mxu_reduce:
        dg = jnp.dot(d * d, m, preferred_element_type=jnp.float32)          # (HW, G)
        gvar = jnp.sum(dg, axis=0, keepdims=True) * inv_n                   # (1, G)
    else:
        sq_c = jnp.sum(d * d, axis=0, keepdims=True)                        # (1, Cp)
        gvar = jnp.dot(sq_c, m, preferred_element_type=jnp.float32) * inv_n
    ginv = lax.rsqrt(gvar + EPS)
    inv_c = jnp.dot(ginv, mt, preferred_element_type=jnp.float32)           # (1, Cp)
    return d * (inv_c * gamma) + beta


def _conv3x3(h2d, w_ref, bias, masks, W, fuse_k):
    """3x3 / stride-1 / zero-pad-1 conv on a flattened (HW, Cp) f32 tile.

    w_ref: (3, 3*Cp, Coutp) bf16 ref packed as [ky+1, (kx+1)*Cp + cin, cout].
    Image borders are handled with 0/1 masks on the rolled taps (no padded
    copies, no unaligned window slices); the row mask is applied once per ky
    roll, only the column masks remain on the kx = +/-1 taps.
    fuse_k=True (v5e/v6e): the 3 kx taps of each ky are fused into one K=3*Cp
    bf16 MXU dot; fuse_k=False (v7x, MRB): 9 separate K=Cp dots, no concat
    buffers.  Accumulation is f32.
    """
    rowm_top, rowm_bot, colm_l, colm_r = masks       # (HW, 1) f32 in {0, 1}
    HW, Cp = h2d.shape
    n_out = w_ref.shape[-1]
    acc = jnp.zeros((HW, n_out), jnp.float32)
    for iy, ky in enumerate((-1, 0, 1)):
        xr = _shift_rows(h2d, ky * W)
        if ky == -1:                                  # image row 0 reads row -1
            xr = xr * rowm_top
        elif ky == 1:                                 # image row H-1 reads row H
            xr = xr * rowm_bot
        w_iy = w_ref[iy]                              # (3*Cp, Coutp) bf16
        taps = []
        for ix, kx in enumerate((-1, 0, 1)):
            t = _shift_rows(xr, kx)
            if kx == -1:
                t = t * colm_l
            elif kx == 1:
                t = t * colm_r
            # TODO(synk): on v6e/v7x cast h2d to bf16 once before the roll/mask
            # pipeline (instead of per-tap) once packed-dtype sublane rotates
            # are verified on the target Mosaic version.
            t = t.astype(jnp.bfloat16)
            if fuse_k:
                taps.append(t)
            else:
                acc = acc + jnp.dot(t, w_iy[ix * Cp:(ix + 1) * Cp, :],
                                    preferred_element_type=jnp.float32)
        if fuse_k:
            cat = jnp.concatenate(taps, axis=-1)      # (HW, 3*Cp) bf16
            acc = acc + jnp.dot(cat, w_iy, preferred_element_type=jnp.float32)
    return acc + bias


# --------------------------------- the kernel --------------------------------

def resnet_block_kernel(*refs, H, W, inv_n1, inv_n2,
                        has_shortcut, fuse_k, gn_mxu_reduce):
    if has_shortcut:
        (x_ref, tproj_ref,
         g1_ref, b1_ref, m1_ref, m1t_ref, w1_ref, c1b_ref,
         g2_ref, b2_ref, m2_ref, m2t_ref, w2_ref, c2b_ref,
         nw_ref, nb_ref, out_ref) = refs
    else:
        (x_ref, tproj_ref,
         g1_ref, b1_ref, m1_ref, m1t_ref, w1_ref, c1b_ref,
         g2_ref, b2_ref, m2_ref, m2t_ref, w2_ref, c2b_ref,
         out_ref) = refs

    HW = H * W
    Cp = x_ref.shape[-1]
    Cop = out_ref.shape[-1]

    # (H, W, Cp) -> (HW, Cp): free relabeling because W % 8 == 0.
    x2 = x_ref[0].reshape(HW, Cp)

    # 3x3-conv border predicates built in-kernel from an iota (no mask DMA).
    flat = lax.broadcasted_iota(jnp.int32, (HW, 1), 0)
    col = flat % W
    f32 = jnp.float32
    masks = ((flat >= W).astype(f32), (flat < HW - W).astype(f32),
             (col >= 1).astype(f32), (col <= W - 2).astype(f32))

    # norm1 -> swish -> conv1 (+ temb projection, hoisted to the wrapper).
    h = _group_norm(x2, g1_ref[...], b1_ref[...], m1_ref[...], m1t_ref[...],
                    inv_n1, gn_mxu_reduce)
    h = _swish(h)
    h = _conv3x3(h, w1_ref, c1b_ref[...], masks, W, fuse_k)
    h = h + tproj_ref[0]                              # (1, Cop) broadcast over HW

    # norm2 -> swish -> dropout (identity in eval) -> conv2.
    # TODO(synk): training-mode dropout would need pltpu.prng_seed/prng_random_bits.
    h = _group_norm(h, g2_ref[...], b2_ref[...], m2_ref[...], m2t_ref[...],
                    inv_n2, gn_mxu_reduce)
    h = _swish(h)
    h = _conv3x3(h, w2_ref, c2b_ref[...], masks, W, fuse_k)

    # nin_shortcut (1x1 conv == matmul) or identity; residual add in f32.
    if has_shortcut:
        sc = jnp.dot(x2.astype(jnp.bfloat16), nw_ref[...],
                     preferred_element_type=jnp.float32) + nb_ref[...]
    else:
        sc = x2
    out_ref[...] = (sc + h).reshape(1, H, W, Cop)


# --------------------------------- wrapper -----------------------------------

def _round_up(v, m):
    return (v + m - 1) // m * m


def resnet_block_pallas(x_nchw, temb, params, *, num_groups=NUM_GROUPS):
    """x_nchw: (N, Cin, H, W) f32, temb: (N, Tch) f32 -> (N, Cout, H, W) f32."""
    N, Cin, H, W = x_nchw.shape
    Cout = params["conv1_b"].shape[-1]
    G = num_groups
    assert Cin % G == 0 and Cout % G == 0, "GroupNorm(32) needs C % 32 == 0"
    # TODO(synk): general W needs a W-pad; the in-kernel (H,W,C)->(HW,C) merge is
    # only a free relabeling when W is a multiple of the 8-sublane tile.
    assert W % 8 == 0, "kernel assumes W % 8 == 0"

    gen = _tpu_generation()
    fuse_k = gen != 7          # fused K=3*Cp dots on v5e/v6e; 9 MRB dots on v7x
    gn_mxu_reduce = gen >= 6   # big-M MXU group reduction on v6e/v7x

    Cp = _round_up(Cin, 128)       # lane-dense padded channel counts
    Cop = _round_up(Cout, 128)
    HW = H * W
    f32, bf16 = jnp.float32, jnp.bfloat16

    # NHWC with channels zero-padded to a multiple of 128 (lane width).
    # TODO(synk): if the surrounding model can carry NHWC/padded-C activations
    # (and bf16 I/O), drop these transposes/pads - they re-touch the full
    # activation in HBM on every call.
    x = jnp.transpose(x_nchw, (0, 2, 3, 1)).astype(f32)
    x = jnp.pad(x, ((0, 0), (0, 0), (0, 0), (0, Cp - Cin)))

    # temb path hoisted out of the kernel (an M=1 matmul is MXU waste in-kernel).
    t = temb * jax.nn.sigmoid(temb)
    tproj = t @ params["temb_w"].astype(f32) + params["temb_b"].astype(f32)
    tproj = jnp.pad(tproj, ((0, 0), (0, Cop - Cout)))[:, None, :]      # (N, 1, Cop)

    def pad_c(a, cpad):
        a = a.astype(f32)
        return jnp.pad(a, ((0, 0), (0, cpad - a.shape[-1])))

    g1, b1 = pad_c(params["gn1_g"], Cp), pad_c(params["gn1_b"], Cp)
    g2, b2 = pad_c(params["gn2_g"], Cop), pad_c(params["gn2_b"], Cop)
    c1b, c2b = pad_c(params["conv1_b"], Cop), pad_c(params["conv2_b"], Cop)

    def membership(c_real, c_pad):
        cg = c_real // G
        cidx = jnp.arange(c_pad)[:, None]
        gidx = jnp.arange(G)[None, :]
        return ((cidx < c_real) & (cidx // cg == gidx)).astype(f32)    # (Cpad, G)

    m1 = membership(Cin, Cp)
    m1t = m1.T
    m2 = membership(Cout, Cop)
    m2t = m2.T

    def pack_conv(w_hwio, c_pad):
        cin = w_hwio.shape[2]
        w = jnp.pad(w_hwio.astype(f32),
                    ((0, 0), (0, 0), (0, c_pad - cin), (0, Cop - Cout)))
        # (3, 3, Cpad, Cop) -> (3, 3*Cpad, Cop): index [ky+1, (kx+1)*Cpad + ci, co]
        return w.reshape(3, 3 * c_pad, Cop).astype(bf16)

    w1 = pack_conv(params["conv1_w_hwio"], Cp)
    w2 = pack_conv(params["conv2_w_hwio"], Cop)

    has_shortcut = (Cin != Cout)
    # TODO(synk): conv_shortcut=True (3x3 shortcut conv) variant not implemented.

    def const(shape):
        nd = len(shape)
        return pl.BlockSpec(shape, lambda i: (0,) * nd)
    # TODO(synk): for production shapes, single-buffer these constant blocks via
    # pipeline_mode=pl.Buffered(1) to halve their resident VMEM.

    in_arrays = [x, tproj, g1, b1, m1, m1t, w1, c1b, g2, b2, m2, m2t, w2, c2b]
    in_specs = [
        pl.BlockSpec((1, H, W, Cp), lambda i: (i, 0, 0, 0)),    # x (one image)
        pl.BlockSpec((1, 1, Cop), lambda i: (i, 0, 0)),         # temb projection
        const(g1.shape), const(b1.shape), const(m1.shape), const(m1t.shape),
        const(w1.shape), const(c1b.shape),
        const(g2.shape), const(b2.shape), const(m2.shape), const(m2t.shape),
        const(w2.shape), const(c2b.shape),
    ]
    if has_shortcut:
        nw = jnp.pad(params["nin_w"].astype(f32),
                     ((0, Cp - Cin), (0, Cop - Cout))).astype(bf16)
        nb = pad_c(params["nin_b"], Cop)
        in_arrays += [nw, nb]
        in_specs += [const(nw.shape), const(nb.shape)]

    kernel = functools.partial(
        resnet_block_kernel, H=H, W=W,
        inv_n1=1.0 / float(HW * (Cin // G)), inv_n2=1.0 / float(HW * (Cout // G)),
        has_shortcut=has_shortcut, fuse_k=fuse_k, gn_mxu_reduce=gn_mxu_reduce)

    out = pl.pallas_call(
        kernel,
        out_shape=jax.ShapeDtypeStruct((N, H, W, Cop), f32),
        grid_spec=pltpu.PrefetchScalarGridSpec(
            num_scalar_prefetch=0,
            grid=(N,),
            in_specs=in_specs,
            out_specs=pl.BlockSpec((1, H, W, Cop), lambda i: (i, 0, 0, 0)),
        ),
        compiler_params=pltpu.CompilerParams(
            dimension_semantics=("parallel",),
            vmem_limit_bytes=_vmem_limit_bytes(gen),
        ),
    )(*in_arrays)

    out = out[..., :Cout]                    # drop padded output channels
    return jnp.transpose(out, (0, 3, 1, 2))  # back to NCHW


# --------------------------- pure-JAX reference (check) ----------------------

def _ref_group_norm(x, gamma, beta):                       # x: NCHW
    n, c, h, w = x.shape
    xg = x.reshape(n, NUM_GROUPS, c // NUM_GROUPS, h, w)
    mean = xg.mean(axis=(2, 3, 4), keepdims=True)
    var = xg.var(axis=(2, 3, 4), keepdims=True)
    xg = (xg - mean) * lax.rsqrt(var + EPS)
    x = xg.reshape(n, c, h, w)
    return x * gamma.reshape(1, c, 1, 1) + beta.reshape(1, c, 1, 1)


def _ref_conv3x3(x, w_hwio, b):                            # x: NCHW, w: (3,3,Cin,Cout)
    y = lax.conv_general_dilated(
        x, w_hwio, window_strides=(1, 1), padding=((1, 1), (1, 1)),
        dimension_numbers=("NCHW", "HWIO", "NCHW"))
    return y + b.reshape(1, -1, 1, 1)


def resnet_block_reference(x, temb, p):
    sw = lambda v: v * jax.nn.sigmoid(v)
    h = _ref_group_norm(x, p["gn1_g"][0], p["gn1_b"][0])
    h = sw(h)
    h = _ref_conv3x3(h, p["conv1_w_hwio"], p["conv1_b"][0])
    h = h + (sw(temb) @ p["temb_w"] + p["temb_b"][0])[:, :, None, None]
    h = _ref_group_norm(h, p["gn2_g"][0], p["gn2_b"][0])
    h = sw(h)
    h = _ref_conv3x3(h, p["conv2_w_hwio"], p["conv2_b"][0])
    if "nin_w" in p:
        x = jnp.einsum("nchw,cd->ndhw", x, p["nin_w"]) \
            + p["nin_b"][0][None, :, None, None]
    return x + h


# ----------------------------------- main ------------------------------------

def _make_params(key, Cin, Cout, Tch):
    ks = jax.random.split(key, 12)
    f32 = jnp.float32
    p = {
        "gn1_g": 1.0 + 0.05 * jax.random.normal(ks[0], (1, Cin), f32),
        "gn1_b": 0.05 * jax.random.normal(ks[1], (1, Cin), f32),
        "conv1_w_hwio": 0.05 * jax.random.normal(ks[2], (3, 3, Cin, Cout), f32),
        "conv1_b": 0.05 * jax.random.normal(ks[3], (1, Cout), f32),
        "temb_w": 0.05 * jax.random.normal(ks[4], (Tch, Cout), f32),
        "temb_b": 0.05 * jax.random.normal(ks[5], (1, Cout), f32),
        "gn2_g": 1.0 + 0.05 * jax.random.normal(ks[6], (1, Cout), f32),
        "gn2_b": 0.05 * jax.random.normal(ks[7], (1, Cout), f32),
        "conv2_w_hwio": 0.05 * jax.random.normal(ks[8], (3, 3, Cout, Cout), f32),
        "conv2_b": 0.05 * jax.random.normal(ks[9], (1, Cout), f32),
    }
    if Cin != Cout:
        p["nin_w"] = 0.05 * jax.random.normal(ks[10], (Cin, Cout), f32)
        p["nin_b"] = 0.05 * jax.random.normal(ks[11], (1, Cout), f32)
    return p


def _run_case(key, N, Cin, Cout, H, W, Tch, tol):
    kp, kx, kt = jax.random.split(key, 3)
    params = _make_params(kp, Cin, Cout, Tch)
    x = jax.random.normal(kx, (N, Cin, H, W), jnp.float32)
    temb = jax.random.normal(kt, (N, Tch), jnp.float32)
    out = jax.block_until_ready(resnet_block_pallas(x, temb, params))
    ref = jax.block_until_ready(resnet_block_reference(x, temb, params))
    assert out.shape == (N, Cout, H, W)
    err = float(jnp.max(jnp.abs(out - ref)))
    assert bool(jnp.all(jnp.isfinite(out))) and err < tol, (
        f"max |err| = {err:.4g} (tol {tol}) at "
        f"N={N} Cin={Cin} Cout={Cout} H={H} W={W}")
    return err


if __name__ == "__main__":
    key = jax.random.PRNGKey(0)
    k1, k2 = jax.random.split(key)
    # Case 1: nin_shortcut path (Cin != Cout), square spatial.
    _run_case(k1, N=2, Cin=32, Cout=64, H=8, W=8, Tch=64, tol=3e-2)
    # Case 2: identity-shortcut path, asymmetric H != W (catches ky/kx vs
    # packed-weight index mismatches that a square shape could hide).
    _run_case(k2, N=2, Cin=64, Cout=64, H=16, W=8, Tch=64, tol=3e-2)
    print("KERNEL_OK")
</pallas_src>

<mosaic_0001>
module attributes {stable_mosaic.version = 11 : i64} {
  func.func @resnet_block_kernel(%arg0: i32, %arg1: memref<1x8x8x128xf32, #tpu.memory_space<vmem>>, %arg2: memref<1x1x128xf32, #tpu.memory_space<vmem>>, %arg3: memref<1x128xf32, #tpu.memory_space<vmem>>, %arg4: memref<1x128xf32, #tpu.memory_space<vmem>>, %arg5: memref<128x32xf32, #tpu.memory_space<vmem>>, %arg6: memref<32x128xf32, #tpu.memory_space<vmem>>, %arg7: memref<3x384x128xbf16, #tpu.memory_space<vmem>>, %arg8: memref<1x128xf32, #tpu.memory_space<vmem>>, %arg9: memref<1x128xf32, #tpu.memory_space<vmem>>, %arg10: memref<1x128xf32, #tpu.memory_space<vmem>>, %arg11: memref<128x32xf32, #tpu.memory_space<vmem>>, %arg12: memref<32x128xf32, #tpu.memory_space<vmem>>, %arg13: memref<3x384x128xbf16, #tpu.memory_space<vmem>>, %arg14: memref<1x128xf32, #tpu.memory_space<vmem>>, %arg15: memref<128x128xbf16, #tpu.memory_space<vmem>>, %arg16: memref<1x128xf32, #tpu.memory_space<vmem>>, %arg17: memref<1x8x8x128xf32, #tpu.memory_space<vmem>>) attributes {dimension_semantics = [#tpu.dimension_semantics<parallel>], iteration_bounds = array<i64: 2>, scalar_prefetch = 0 : i64, scratch_operands = 0 : i64, tpu.core_type = #tpu.core_type<tc>, window_params = [{transform_indices = @transform_0, window_bounds = array<i64: 1, 8, 8, 128>}, {transform_indices = @transform_1, window_bounds = array<i64: 1, 1, 128>}, {pipeline_mode = #tpu.pipeline_mode<synchronous>, transform_indices = @transform_2, window_bounds = array<i64: 1, 128>}, {pipeline_mode = #tpu.pipeline_mode<synchronous>, transform_indices = @transform_3, window_bounds = array<i64: 1, 128>}, {pipeline_mode = #tpu.pipeline_mode<synchronous>, transform_indices = @transform_4, window_bounds = array<i64: 128, 32>}, {pipeline_mode = #tpu.pipeline_mode<synchronous>, transform_indices = @transform_5, window_bounds = array<i64: 32, 128>}, {pipeline_mode = #tpu.pipeline_mode<synchronous>, transform_indices = @transform_6, window_bounds = array<i64: 3, 384, 128>}, {pipeline_mode = #tpu.pipeline_mode<synchronous>, transform_indices = @transform_7, window_bounds = array<i64: 1, 128>}, {pipeline_mode = #tpu.pipeline_mode<synchronous>, transform_indices = @transform_8, window_bounds = array<i64: 1, 128>}, {pipeline_mode = #tpu.pipeline_mode<synchronous>, transform_indices = @transform_9, window_bounds = array<i64: 1, 128>}, {pipeline_mode = #tpu.pipeline_mode<synchronous>, transform_indices = @transform_10, window_bounds = array<i64: 128, 32>}, {pipeline_mode = #tpu.pipeline_mode<synchronous>, transform_indices = @transform_11, window_bounds = array<i64: 32, 128>}, {pipeline_mode = #tpu.pipeline_mode<synchronous>, transform_indices = @transform_12, window_bounds = array<i64: 3, 384, 128>}, {pipeline_mode = #tpu.pipeline_mode<synchronous>, transform_indices = @transform_13, window_bounds = array<i64: 1, 128>}, {pipeline_mode = #tpu.pipeline_mode<synchronous>, transform_indices = @transform_14, window_bounds = array<i64: 128, 128>}, {pipeline_mode = #tpu.pipeline_mode<synchronous>, transform_indices = @transform_15, window_bounds = array<i64: 1, 128>}, {transform_indices = @transform_16, window_bounds = array<i64: 1, 8, 8, 128>}]} {
    %c0 = arith.constant 0 : index
    %c0_0 = arith.constant 0 : index
    %c0_1 = arith.constant 0 : index
    %c0_2 = arith.constant 0 : index
    %0 = vector.load %arg1[%c0, %c0_0, %c0_1, %c0_2] : memref<1x8x8x128xf32, #tpu.memory_space<vmem>>, vector<1x8x8x128xf32>
    %1 = vector.shape_cast %0 : vector<1x8x8x128xf32> to vector<8x8x128xf32>
    %2 = vector.shape_cast %1 : vector<8x8x128xf32> to vector<64x128xf32>
    %3 = tpu.iota {dimensions = array<i32: 0>} : vector<64x1xi32>
    %c8_i32 = arith.constant 8 : i32
    %c0_i32 = arith.constant 0 : i32
    %4 = arith.cmpi eq, %c8_i32, %c0_i32 : i32
    %c1_i32 = arith.constant 1 : i32
    %5 = arith.select %4, %c1_i32, %c8_i32 : i32
    %6 = vector.broadcast %5 : i32 to vector<64x1xi32>
    %7 = arith.remsi %3, %6 : vector<64x1xi32>
    %c0_i32_3 = arith.constant 0 : i32
    %8 = vector.broadcast %c0_i32_3 : i32 to vector<64x1xi32>
    %9 = arith.cmpi ne, %7, %8 : vector<64x1xi32>
    %c0_i32_4 = arith.constant 0 : i32
    %10 = vector.broadcast %c0_i32_4 : i32 to vector<64x1xi32>
    %11 = arith.cmpi slt, %7, %10 : vector<64x1xi32>
    %c0_i32_5 = arith.constant 0 : i32
    %12 = arith.cmpi slt, %5, %c0_i32_5 : i32
    %13 = vector.broadcast %12 : i1 to vector<64x1xi1>
    %14 = vector.broadcast %13 : vector<64x1xi1> to vector<64x1xi1>
    %15 = arith.xori %11, %14 : vector<64x1xi1>
    %16 = arith.andi %15, %9 : vector<64x1xi1>
    %17 = vector.broadcast %5 : i32 to vector<64x1xi32>
    %18 = arith.addi %7, %17 : vector<64x1xi32>
    %19 = arith.select %16, %18, %7 : vector<64x1xi1>, vector<64x1xi32>
    %c8_i32_6 = arith.constant 8 : i32
    %20 = vector.broadcast %c8_i32_6 : i32 to vector<64x1xi32>
    %21 = arith.cmpi sge, %3, %20 : vector<64x1xi32>
    %22 = arith.extui %21 : vector<64x1xi1> to vector<64x1xi32>
    %23 = arith.sitofp %22 : vector<64x1xi32> to vector<64x1xf32>
    %c56_i32 = arith.constant 56 : i32
    %24 = vector.broadcast %c56_i32 : i32 to vector<64x1xi32>
    %25 = arith.cmpi slt, %3, %24 : vector<64x1xi32>
    %26 = arith.extui %25 : vector<64x1xi1> to vector<64x1xi32>
    %27 = arith.sitofp %26 : vector<64x1xi32> to vector<64x1xf32>
    %c1_i32_7 = arith.constant 1 : i32
    %28 = vector.broadcast %c1_i32_7 : i32 to vector<64x1xi32>
    %29 = arith.cmpi sge, %19, %28 : vector<64x1xi32>
    %30 = arith.extui %29 : vector<64x1xi1> to vector<64x1xi32>
    %31 = arith.sitofp %30 : vector<64x1xi32> to vector<64x1xf32>
    %c6_i32 = arith.constant 6 : i32
    %32 = vector.broadcast %c6_i32 : i32 to vector<64x1xi32>
    %33 = arith.cmpi sle, %19, %32 : vector<64x1xi32>
    %34 = arith.extui %33 : vector<64x1xi1> to vector<64x1xi32>
    %35 = arith.sitofp %34 : vector<64x1xi32> to vector<64x1xf32>
    %c0_8 = arith.constant 0 : index
    %c0_9 = arith.constant 0 : index
    %36 = vector.load %arg3[%c0_8, %c0_9] : memref<1x128xf32, #tpu.memory_space<vmem>>, vector<1x128xf32>
    %c0_10 = arith.constant 0 : index
    %c0_11 = arith.constant 0 : index
    %37 = vector.load %arg4[%c0_10, %c0_11] : memref<1x128xf32, #tpu.memory_space<vmem>>, vector<1x128xf32>
    %c0_12 = arith.constant 0 : index
    %c0_13 = arith.constant 0 : index
    %38 = vector.load %arg5[%c0_12, %c0_13] : memref<128x32xf32, #tpu.memory_space<vmem>>, vector<128x32xf32>
    %c0_14 = arith.constant 0 : index
    %c0_15 = arith.constant 0 : index
    %39 = vector.load %arg6[%c0_14, %c0_15] : memref<32x128xf32, #tpu.memory_space<vmem>>, vector<32x128xf32>
    %cst = arith.constant dense<0.000000e+00> : vector<128xf32>
    %40 = vector.multi_reduction <add>, %2, %cst [0] : vector<64x128xf32> to vector<128xf32>
    %41 = vector.shape_cast %40 : vector<128xf32> to vector<1x128xf32>
    %cst_16 = arith.constant dense<0.000000e+00> : vector<1x32xf32>
    %42 = tpu.matmul %41, %38, %cst_16 {dimension_numbers = #tpu.dot_dimension_numbers<[1], [0], [0], [1], [0, 0, 1, 1], [], []>} : vector<1x128xf32>, vector<128x32xf32>, vector<1x32xf32> -> vector<1x32xf32>
    %cst_17 = arith.constant 1.562500e-02 : f32
    %43 = vector.broadcast %cst_17 : f32 to vector<1x32xf32>
    %44 = arith.mulf %42, %43 : vector<1x32xf32>
    %cst_18 = arith.constant dense<0.000000e+00> : vector<1x128xf32>
    %45 = tpu.matmul %44, %39, %cst_18 {dimension_numbers = #tpu.dot_dimension_numbers<[1], [0], [0], [1], [0, 0, 1, 1], [], []>} : vector<1x32xf32>, vector<32x128xf32>, vector<1x128xf32> -> vector<1x128xf32>
    %46 = vector.broadcast %45 : vector<1x128xf32> to vector<64x128xf32>
    %47 = arith.subf %2, %46 : vector<64x128xf32>
    %48 = arith.mulf %47, %47 : vector<64x128xf32>
    %cst_19 = arith.constant dense<0.000000e+00> : vector<128xf32>
    %49 = vector.multi_reduction <add>, %48, %cst_19 [0] : vector<64x128xf32> to vector<128xf32>
    %50 = vector.shape_cast %49 : vector<128xf32> to vector<1x128xf32>
    %cst_20 = arith.constant dense<0.000000e+00> : vector<1x32xf32>
    %51 = tpu.matmul %50, %38, %cst_20 {dimension_numbers = #tpu.dot_dimension_numbers<[1], [0], [0], [1], [0, 0, 1, 1], [], []>} : vector<1x128xf32>, vector<128x32xf32>, vector<1x32xf32> -> vector<1x32xf32>
    %cst_21 = arith.constant 1.562500e-02 : f32
    %52 = vector.broadcast %cst_21 : f32 to vector<1x32xf32>
    %53 = arith.mulf %51, %52 : vector<1x32xf32>
    %cst_22 = arith.constant 9.99999997E-7 : f32
    %54 = vector.broadcast %cst_22 : f32 to vector<1x32xf32>
    %55 = arith.addf %53, %54 : vector<1x32xf32>
    %56 = math.rsqrt %55 : vector<1x32xf32>
    %cst_23 = arith.constant dense<0.000000e+00> : vector<1x128xf32>
    %57 = tpu.matmul %56, %39, %cst_23 {dimension_numbers = #tpu.dot_dimension_numbers<[1], [0], [0], [1], [0, 0, 1, 1], [], []>} : vector<1x32xf32>, vector<32x128xf32>, vector<1x128xf32> -> vector<1x128xf32>
    %58 = arith.mulf %57, %36 : vector<1x128xf32>
    %59 = vector.broadcast %58 : vector<1x128xf32> to vector<64x128xf32>
    %60 = arith.mulf %47, %59 : vector<64x128xf32>
    %61 = vector.broadcast %37 : vector<1x128xf32> to vector<64x128xf32>
    %62 = arith.addf %60, %61 : vector<64x128xf32>
    %63 = arith.negf %62 : vector<64x128xf32>
    %64 = math.exp %63 : vector<64x128xf32>
    %cst_24 = arith.constant 1.000000e+00 : f32
    %65 = vector.broadcast %cst_24 : f32 to vector<64x128xf32>
    %66 = arith.addf %65, %64 : vector<64x128xf32>
    %67 = arith.divf %65, %66 : vector<64x128xf32>
    %68 = arith.mulf %62, %67 : vector<64x128xf32>
    %c0_25 = arith.constant 0 : index
    %c0_26 = arith.constant 0 : index
    %69 = vector.load %arg8[%c0_25, %c0_26] : memref<1x128xf32, #tpu.memory_space<vmem>>, vector<1x128xf32>
    %cst_27 = arith.constant 0.000000e+00 : f32
    %70 = vector.broadcast %cst_27 : f32 to vector<64x128xf32>
    %c8_i32_28 = arith.constant 8 : i32
    %71 = tpu.dynamic_rotate %68 by %c8_i32_28 dim 0 : vector<64x128xf32>, i32 -> vector<64x128xf32>
    %72 = vector.broadcast %23 : vector<64x1xf32> to vector<64x128xf32>
    %73 = arith.mulf %71, %72 : vector<64x128xf32>
    %c0_29 = arith.constant 0 : index
    %c0_30 = arith.constant 0 : index
    %c0_31 = arith.constant 0 : index
    %74 = vector.load %arg7[%c0_29, %c0_30, %c0_31] : memref<3x384x128xbf16, #tpu.memory_space<vmem>>, vector<1x384x128xbf16>
    %75 = vector.shape_cast %74 : vector<1x384x128xbf16> to vector<384x128xbf16>
    %c1_i32_32 = arith.constant 1 : i32
    %76 = tpu.dynamic_rotate %73 by %c1_i32_32 dim 0 : vector<64x128xf32>, i32 -> vector<64x128xf32>
    %77 = vector.broadcast %31 : vector<64x1xf32> to vector<64x128xf32>
    %78 = arith.mulf %76, %77 : vector<64x128xf32>
    %79 = arith.truncf %78 : vector<64x128xf32> to vector<64x128xbf16>
    %80 = arith.truncf %73 : vector<64x128xf32> to vector<64x128xbf16>
    %c63_i32 = arith.constant 63 : i32
    %81 = tpu.dynamic_rotate %73 by %c63_i32 dim 0 : vector<64x128xf32>, i32 -> vector<64x128xf32>
    %82 = vector.broadcast %35 : vector<64x1xf32> to vector<64x128xf32>
    %83 = arith.mulf %81, %82 : vector<64x128xf32>
    %84 = arith.truncf %83 : vector<64x128xf32> to vector<64x128xbf16>
    %85 = tpu.concatenate %79, %80, %84 in 1 : vector<64x128xbf16>, vector<64x128xbf16>, vector<64x128xbf16> -> vector<64x384xbf16>
    %cst_33 = arith.constant dense<0.000000e+00> : vector<64x128xf32>
    %86 = tpu.matmul %85, %75, %cst_33 {dimension_numbers = #tpu.dot_dimension_numbers<[1], [0], [0], [1], [0, 0, 1, 1], [], []>} : vector<64x384xbf16>, vector<384x128xbf16>, vector<64x128xf32> -> vector<64x128xf32>
    %87 = arith.addf %70, %86 : vector<64x128xf32>
    %c1 = arith.constant 1 : index
    %c0_34 = arith.constant 0 : index
    %c0_35 = arith.constant 0 : index
    %88 = vector.load %arg7[%c1, %c0_34, %c0_35] : memref<3x384x128xbf16, #tpu.memory_space<vmem>>, vector<1x384x128xbf16>
    %89 = vector.shape_cast %88 : vector<1x384x128xbf16> to vector<384x128xbf16>
    %c1_i32_36 = arith.constant 1 : i32
    %90 = tpu.dynamic_rotate %68 by %c1_i32_36 dim 0 : vector<64x128xf32>, i32 -> vector<64x128xf32>
    %91 = vector.broadcast %31 : vector<64x1xf32> to vector<64x128xf32>
    %92 = arith.mulf %90, %91 : vector<64x128xf32>
    %93 = arith.truncf %92 : vector<64x128xf32> to vector<64x128xbf16>
    %94 = arith.truncf %68 : vector<64x128xf32> to vector<64x128xbf16>
    %c63_i32_37 = arith.constant 63 : i32
    %95 = tpu.dynamic_rotate %68 by %c63_i32_37 dim 0 : vector<64x128xf32>, i32 -> vector<64x128xf32>
    %96 = vector.broadcast %35 : vector<64x1xf32> to vector<64x128xf32>
    %97 = arith.mulf %95, %96 : vector<64x128xf32>
    %98 = arith.truncf %97 : vector<64x128xf32> to vector<64x128xbf16>
    %99 = tpu.concatenate %93, %94, %98 in 1 : vector<64x128xbf16>, vector<64x128xbf16>, vector<64x128xbf16> -> vector<64x384xbf16>
    %cst_38 = arith.constant dense<0.000000e+00> : vector<64x128xf32>
    %100 = tpu.matmul %99, %89, %cst_38 {dimension_numbers = #tpu.dot_dimension_numbers<[1], [0], [0], [1], [0, 0, 1, 1], [], []>} : vector<64x384xbf16>, vector<384x128xbf16>, vector<64x128xf32> -> vector<64x128xf32>
    %101 = arith.addf %87, %100 : vector<64x128xf32>
    %c56_i32_39 = arith.constant 56 : i32
    %102 = tpu.dynamic_rotate %68 by %c56_i32_39 dim 0 : vector<64x128xf32>, i32 -> vector<64x128xf32>
    %103 = vector.broadcast %27 : vector<64x1xf32> to vector<64x128xf32>
    %104 = arith.mulf %102, %103 : vector<64x128xf32>
    %c2 = arith.constant 2 : index
    %c0_40 = arith.constant 0 : index
    %c0_41 = arith.constant 0 : index
    %105 = vector.load %arg7[%c2, %c0_40, %c0_41] : memref<3x384x128xbf16, #tpu.memory_space<vmem>>, vector<1x384x128xbf16>
    %106 = vector.shape_cast %105 : vector<1x384x128xbf16> to vector<384x128xbf16>
    %c1_i32_42 = arith.constant 1 : i32
    %107 = tpu.dynamic_rotate %104 by %c1_i32_42 dim 0 : vector<64x128xf32>, i32 -> vector<64x128xf32>
    %108 = vector.broadcast %31 : vector<64x1xf32> to vector<64x128xf32>
    %109 = arith.mulf %107, %108 : vector<64x128xf32>
    %110 = arith.truncf %109 : vector<64x128xf32> to vector<64x128xbf16>
    %111 = arith.truncf %104 : vector<64x128xf32> to vector<64x128xbf16>
    %c63_i32_43 = arith.constant 63 : i32
    %112 = tpu.dynamic_rotate %104 by %c63_i32_43 dim 0 : vector<64x128xf32>, i32 -> vector<64x128xf32>
    %113 = vector.broadcast %35 : vector<64x1xf32> to vector<64x128xf32>
    %114 = arith.mulf %112, %113 : vector<64x128xf32>
    %115 = arith.truncf %114 : vector<64x128xf32> to vector<64x128xbf16>
    %116 = tpu.concatenate %110, %111, %115 in 1 : vector<64x128xbf16>, vector<64x128xbf16>, vector<64x128xbf16> -> vector<64x384xbf16>
    %cst_44 = arith.constant dense<0.000000e+00> : vector<64x128xf32>
    %117 = tpu.matmul %116, %106, %cst_44 {dimension_numbers = #tpu.dot_dimension_numbers<[1], [0], [0], [1], [0, 0, 1, 1], [], []>} : vector<64x384xbf16>, vector<384x128xbf16>, vector<64x128xf32> -> vector<64x128xf32>
    %118 = arith.addf %101, %117 : vector<64x128xf32>
    %119 = vector.broadcast %69 : vector<1x128xf32> to vector<64x128xf32>
    %120 = arith.addf %118, %119 : vector<64x128xf32>
    %c0_45 = arith.constant 0 : index
    %c0_46 = arith.constant 0 : index
    %c0_47 = arith.constant 0 : index
    %121 = vector.load %arg2[%c0_45, %c0_46, %c0_47] : memref<1x1x128xf32, #tpu.memory_space<vmem>>, vector<1x1x128xf32>
    %122 = vector.shape_cast %121 : vector<1x1x128xf32> to vector<1x128xf32>
    %123 = vector.broadcast %122 : vector<1x128xf32> to vector<64x128xf32>
    %124 = arith.addf %120, %123 : vector<64x128xf32>
    %c0_48 = arith.constant 0 : index
    %c0_49 = arith.constant 0 : index
    %125 = vector.load %arg9[%c0_48, %c0_49] : memref<1x128xf32, #tpu.memory_space<vmem>>, vector<1x128xf32>
    %c0_50 = arith.constant 0 : index
    %c0_51 = arith.constant 0 : index
    %126 = vector.load %arg10[%c0_50, %c0_51] : memref<1x128xf32, #tpu.memory_space<vmem>>, vector<1x128xf32>
    %c0_52 = arith.constant 0 : index
    %c0_53 = arith.constant 0 : index
    %127 = vector.load %arg11[%c0_52, %c0_53] : memref<128x32xf32, #tpu.memory_space<vmem>>, vector<128x32xf32>
    %c0_54 = arith.constant 0 : index
    %c0_55 = arith.constant 0 : index
    %128 = vector.load %arg12[%c0_54, %c0_55] : memref<32x128xf32, #tpu.memory_space<vmem>>, vector<32x128xf32>
    %cst_56 = arith.constant dense<0.000000e+00> : vector<128xf32>
    %129 = vector.multi_reduction <add>, %124, %cst_56 [0] : vector<64x128xf32> to vector<128xf32>
    %130 = vector.shape_cast %129 : vector<128xf32> to vector<1x128xf32>
    %cst_57 = arith.constant dense<0.000000e+00> : vector<1x32xf32>
    %131 = tpu.matmul %130, %127, %cst_57 {dimension_numbers = #tpu.dot_dimension_numbers<[1], [0], [0], [1], [0, 0, 1, 1], [], []>} : vector<1x128xf32>, vector<128x32xf32>, vector<1x32xf32> -> vector<1x32xf32>
    %cst_58 = arith.constant 7.812500e-03 : f32
    %132 = vector.broadcast %cst_58 : f32 to vector<1x32xf32>
    %133 = arith.mulf %131, %132 : vector<1x32xf32>
    %cst_59 = arith.constant dense<0.000000e+00> : vector<1x128xf32>
    %134 = tpu.matmul %133, %128, %cst_59 {dimension_numbers = #tpu.dot_dimension_numbers<[1], [0], [0], [1], [0, 0, 1, 1], [], []>} : vector<1x32xf32>, vector<32x128xf32>, vector<1x128xf32> -> vector<1x128xf32>
    %135 = vector.broadcast %134 : vector<1x128xf32> to vector<64x128xf32>
    %136 = arith.subf %124, %135 : vector<64x128xf32>
    %137 = arith.mulf %136, %136 : vector<64x128xf32>
    %cst_60 = arith.constant dense<0.000000e+00> : vector<128xf32>
    %138 = vector.multi_reduction <add>, %137, %cst_60 [0] : vector<64x128xf32> to vector<128xf32>
    %139 = vector.shape_cast %138 : vector<128xf32> to vector<1x128xf32>
    %cst_61 = arith.constant dense<0.000000e+00> : vector<1x32xf32>
    %140 = tpu.matmul %139, %127, %cst_61 {dimension_numbers = #tpu.dot_dimension_numbers<[1], [0], [0], [1], [0, 0, 1, 1], [], []>} : vector<1x128xf32>, vector<128x32xf32>, vector<1x32xf32> -> vector<1x32xf32>
    %cst_62 = arith.constant 7.812500e-03 : f32
    %141 = vector.broadcast %cst_62 : f32 to vector<1x32xf32>
    %142 = arith.mulf %140, %141 : vector<1x32xf32>
    %cst_63 = arith.constant 9.99999997E-7 : f32
    %143 = vector.broadcast %cst_63 : f32 to vector<1x32xf32>
    %144 = arith.addf %142, %143 : vector<1x32xf32>
    %145 = math.rsqrt %144 : vector<1x32xf32>
    %cst_64 = arith.constant dense<0.000000e+00> : vector<1x128xf32>
    %146 = tpu.matmul %145, %128, %cst_64 {dimension_numbers = #tpu.dot_dimension_numbers<[1], [0], [0], [1], [0, 0, 1, 1], [], []>} : vector<1x32xf32>, vector<32x128xf32>, vector<1x128xf32> -> vector<1x128xf32>
    %147 = arith.mulf %146, %125 : vector<1x128xf32>
    %148 = vector.broadcast %147 : vector<1x128xf32> to vector<64x128xf32>
    %149 = arith.mulf %136, %148 : vector<64x128xf32>
    %150 = vector.broadcast %126 : vector<1x128xf32> to vector<64x128xf32>
    %151 = arith.addf %149, %150 : vector<64x128xf32>
    %152 = arith.negf %151 : vector<64x128xf32>
    %153 = math.exp %152 : vector<64x128xf32>
    %cst_65 = arith.constant 1.000000e+00 : f32
    %154 = vector.broadcast %cst_65 : f32 to vector<64x128xf32>
    %155 = arith.addf %154, %153 : vector<64x128xf32>
    %156 = arith.divf %154, %155 : vector<64x128xf32>
    %157 = arith.mulf %151, %156 : vector<64x128xf32>
    %c0_66 = arith.constant 0 : index
    %c0_67 = arith.constant 0 : index
    %158 = vector.load %arg14[%c0_66, %c0_67] : memref<1x128xf32, #tpu.memory_space<vmem>>, vector<1x128xf32>
    %cst_68 = arith.constant 0.000000e+00 : f32
    %159 = vector.broadcast %cst_68 : f32 to vector<64x128xf32>
    %c8_i32_69 = arith.constant 8 : i32
    %160 = tpu.dynamic_rotate %157 by %c8_i32_69 dim 0 : vector<64x128xf32>, i32 -> vector<64x128xf32>
    %161 = vector.broadcast %23 : vector<64x1xf32> to vector<64x128xf32>
    %162 = arith.mulf %160, %161 : vector<64x128xf32>
    %c0_70 = arith.constant 0 : index
    %c0_71 = arith.constant 0 : index
    %c0_72 = arith.constant 0 : index
    %163 = vector.load %arg13[%c0_70, %c0_71, %c0_72] : memref<3x384x128xbf16, #tpu.memory_space<vmem>>, vector<1x384x128xbf16>
    %164 = vector.shape_cast %163 : vector<1x384x128xbf16> to vector<384x128xbf16>
    %c1_i32_73 = arith.constant 1 : i32
    %165 = tpu.dynamic_rotate %162 by %c1_i32_73 dim 0 : vector<64x128xf32>, i32 -> vector<64x128xf32>
    %166 = vector.broadcast %31 : vector<64x1xf32> to vector<64x128xf32>
    %167 = arith.mulf %165, %166 : vector<64x128xf32>
    %168 = arith.truncf %167 : vector<64x128xf32> to vector<64x128xbf16>
    %169 = arith.truncf %162 : vector<64x128xf32> to vector<64x128xbf16>
    %c63_i32_74 = arith.constant 63 : i32
    %170 = tpu.dynamic_rotate %162 by %c63_i32_74 dim 0 : vector<64x128xf32>, i32 -> vector<64x128xf32>
    %171 = vector.broadcast %35 : vector<64x1xf32> to vector<64x128xf32>
    %172 = arith.mulf %170, %171 : vector<64x128xf32>
    %173 = arith.truncf %172 : vector<64x128xf32> to vector<64x128xbf16>
    %174 = tpu.concatenate %168, %169, %173 in 1 : vector<64x128xbf16>, vector<64x128xbf16>, vector<64x128xbf16> -> vector<64x384xbf16>
    %cst_75 = arith.constant dense<0.000000e+00> : vector<64x128xf32>
    %175 = tpu.matmul %174, %164, %cst_75 {dimension_numbers = #tpu.dot_dimension_numbers<[1], [0], [0], [1], [0, 0, 1, 1], [], []>} : vector<64x384xbf16>, vector<384x128xbf16>, vector<64x128xf32> -> vector<64x128xf32>
    %176 = arith.addf %159, %175 : vector<64x128xf32>
    %c1_76 = arith.constant 1 : index
    %c0_77 = arith.constant 0 : index
    %c0_78 = arith.constant 0 : index
    %177 = vector.load %arg13[%c1_76, %c0_77, %c0_78] : memref<3x384x128xbf16, #tpu.memory_space<vmem>>, vector<1x384x128xbf16>
    %178 = vector.shape_cast %177 : vector<1x384x128xbf16> to vector<384x128xbf16>
    %c1_i32_79 = arith.constant 1 : i32
    %179 = tpu.dynamic_rotate %157 by %c1_i32_79 dim 0 : vector<64x128xf32>, i32 -> vector<64x128xf32>
    %180 = vector.broadcast %31 : vector<64x1xf32> to vector<64x128xf32>
    %181 = arith.mulf %179, %180 : vector<64x128xf32>
    %182 = arith.truncf %181 : vector<64x128xf32> to vector<64x128xbf16>
    %183 = arith.truncf %157 : vector<64x128xf32> to vector<64x128xbf16>
    %c63_i32_80 = arith.constant 63 : i32
    %184 = tpu.dynamic_rotate %157 by %c63_i32_80 dim 0 : vector<64x128xf32>, i32 -> vector<64x128xf32>
    %185 = vector.broadcast %35 : vector<64x1xf32> to vector<64x128xf32>
    %186 = arith.mulf %184, %185 : vector<64x128xf32>
    %187 = arith.truncf %186 : vector<64x128xf32> to vector<64x128xbf16>
    %188 = tpu.concatenate %182, %183, %187 in 1 : vector<64x128xbf16>, vector<64x128xbf16>, vector<64x128xbf16> -> vector<64x384xbf16>
    %cst_81 = arith.constant dense<0.000000e+00> : vector<64x128xf32>
    %189 = tpu.matmul %188, %178, %cst_81 {dimension_numbers = #tpu.dot_dimension_numbers<[1], [0], [0], [1], [0, 0, 1, 1], [], []>} : vector<64x384xbf16>, vector<384x128xbf16>, vector<64x128xf32> -> vector<64x128xf32>
    %190 = arith.addf %176, %189 : vector<64x128xf32>
    %c56_i32_82 = arith.constant 56 : i32
    %191 = tpu.dynamic_rotate %157 by %c56_i32_82 dim 0 : vector<64x128xf32>, i32 -> vector<64x128xf32>
    %192 = vector.broadcast %27 : vector<64x1xf32> to vector<64x128xf32>
    %193 = arith.mulf %191, %192 : vector<64x128xf32>
    %c2_83 = arith.constant 2 : index
    %c0_84 = arith.constant 0 : index
    %c0_85 = arith.constant 0 : index
    %194 = vector.load %arg13[%c2_83, %c0_84, %c0_85] : memref<3x384x128xbf16, #tpu.memory_space<vmem>>, vector<1x384x128xbf16>
    %195 = vector.shape_cast %194 : vector<1x384x128xbf16> to vector<384x128xbf16>
    %c1_i32_86 = arith.constant 1 : i32
    %196 = tpu.dynamic_rotate %193 by %c1_i32_86 dim 0 : vector<64x128xf32>, i32 -> vector<64x128xf32>
    %197 = vector.broadcast %31 : vector<64x1xf32> to vector<64x128xf32>
    %198 = arith.mulf %196, %197 : vector<64x128xf32>
    %199 = arith.truncf %198 : vector<64x128xf32> to vector<64x128xbf16>
    %200 = arith.truncf %193 : vector<64x128xf32> to vector<64x128xbf16>
    %c63_i32_87 = arith.constant 63 : i32
    %201 = tpu.dynamic_rotate %193 by %c63_i32_87 dim 0 : vector<64x128xf32>, i32 -> vector<64x128xf32>
    %202 = vector.broadcast %35 : vector<64x1xf32> to vector<64x128xf32>
    %203 = arith.mulf %201, %202 : vector<64x128xf32>
    %204 = arith.truncf %203 : vector<64x128xf32> to vector<64x128xbf16>
    %205 = tpu.concatenate %199, %200, %204 in 1 : vector<64x128xbf16>, vector<64x128xbf16>, vector<64x128xbf16> -> vector<64x384xbf16>
    %cst_88 = arith.constant dense<0.000000e+00> : vector<64x128xf32>
    %206 = tpu.matmul %205, %195, %cst_88 {dimension_numbers = #tpu.dot_dimension_numbers<[1], [0], [0], [1], [0, 0, 1, 1], [], []>} : vector<64x384xbf16>, vector<384x128xbf16>, vector<64x128xf32> -> vector<64x128xf32>
    %207 = arith.addf %190, %206 : vector<64x128xf32>
    %208 = vector.broadcast %158 : vector<1x128xf32> to vector<64x128xf32>
    %209 = arith.addf %207, %208 : vector<64x128xf32>
    %210 = arith.truncf %2 : vector<64x128xf32> to vector<64x128xbf16>
    %c0_89 = arith.constant 0 : index
    %c0_90 = arith.constant 0 : index
    %211 = vector.load %arg15[%c0_89, %c0_90] : memref<128x128xbf16, #tpu.memory_space<vmem>>, vector<128x128xbf16>
    %cst_91 = arith.constant dense<0.000000e+00> : vector<64x128xf32>
    %212 = tpu.matmul %210, %211, %cst_91 {dimension_numbers = #tpu.dot_dimension_numbers<[1], [0], [0], [1], [0, 0, 1, 1], [], []>} : vector<64x128xbf16>, vector<128x128xbf16>, vector<64x128xf32> -> vector<64x128xf32>
    %c0_92 = arith.constant 0 : index
    %c0_93 = arith.constant 0 : index
    %213 = vector.load %arg16[%c0_92, %c0_93] : memref<1x128xf32, #tpu.memory_space<vmem>>, vector<1x128xf32>
    %214 = vector.broadcast %213 : vector<1x128xf32> to vector<64x128xf32>
    %215 = arith.addf %212, %214 : vector<64x128xf32>
    %216 = arith.addf %215, %209 : vector<64x128xf32>
    %217 = vector.shape_cast %216 : vector<64x128xf32> to vector<1x8x8x128xf32>
    %c0_94 = arith.constant 0 : index
    %c0_95 = arith.constant 0 : index
    %c0_96 = arith.constant 0 : index
    %c0_97 = arith.constant 0 : index
    %218 = vector.load %arg17[%c0_94, %c0_95, %c0_96, %c0_97] : memref<1x8x8x128xf32, #tpu.memory_space<vmem>>, vector<1x8x8x128xf32>
    tpu.vector_store %arg17[%c0_94, %c0_95, %c0_96, %c0_97], %217 {strides = array<i32>} : memref<1x8x8x128xf32, #tpu.memory_space<vmem>>, vector<1x8x8x128xf32>,
    return
  }
  func.func @transform_0(%arg0: i32) -> (i32, i32, i32, i32) {
    %c0_i32 = arith.constant 0 : i32
    %c0_i32_0 = arith.constant 0 : i32
    %c0_i32_1 = arith.constant 0 : i32
    %c0_i32_2 = arith.constant 0 : i32
    return %arg0, %c0_i32, %c0_i32_0, %c0_i32_1 : i32, i32, i32, i32
  }
  func.func @transform_1(%arg0: i32) -> (i32, i32, i32) {
    %c0_i32 = arith.constant 0 : i32
    %c0_i32_0 = arith.constant 0 : i32
    %c0_i32_1 = arith.constant 0 : i32
    return %arg0, %c0_i32, %c0_i32_0 : i32, i32, i32
  }
  func.func @transform_2(%arg0: i32) -> (i32, i32) {
    %c0_i32 = arith.constant 0 : i32
    %c0_i32_0 = arith.constant 0 : i32
    %c0_i32_1 = arith.constant 0 : i32
    return %c0_i32, %c0_i32_0 : i32, i32
  }
  func.func @transform_3(%arg0: i32) -> (i32, i32) {
    %c0_i32 = arith.constant 0 : i32
    %c0_i32_0 = arith.constant 0 : i32
    %c0_i32_1 = arith.constant 0 : i32
    return %c0_i32, %c0_i32_0 : i32, i32
  }
  func.func @transform_4(%arg0: i32) -> (i32, i32) {
    %c0_i32 = arith.constant 0 : i32
    %c0_i32_0 = arith.constant 0 : i32
    %c0_i32_1 = arith.constant 0 : i32
    return %c0_i32, %c0_i32_0 : i32, i32
  }
  func.func @transform_5(%arg0: i32) -> (i32, i32) {
    %c0_i32 = arith.constant 0 : i32
    %c0_i32_0 = arith.constant 0 : i32
    %c0_i32_1 = arith.constant 0 : i32
    return %c0_i32, %c0_i32_0 : i32, i32
  }
  func.func @transform_6(%arg0: i32) -> (i32, i32, i32) {
    %c0_i32 = arith.constant 0 : i32
    %c0_i32_0 = arith.constant 0 : i32
    %c0_i32_1 = arith.constant 0 : i32
    %c0_i32_2 = arith.constant 0 : i32
    return %c0_i32, %c0_i32_0, %c0_i32_1 : i32, i32, i32
  }
  func.func @transform_7(%arg0: i32) -> (i32, i32) {
    %c0_i32 = arith.constant 0 : i32
    %c0_i32_0 = arith.constant 0 : i32
    %c0_i32_1 = arith.constant 0 : i32
    return %c0_i32, %c0_i32_0 : i32, i32
  }
  func.func @transform_8(%arg0: i32) -> (i32, i32) {
    %c0_i32 = arith.constant 0 : i32
    %c0_i32_0 = arith.constant 0 : i32
    %c0_i32_1 = arith.constant 0 : i32
    return %c0_i32, %c0_i32_0 : i32, i32
  }
  func.func @transform_9(%arg0: i32) -> (i32, i32) {
    %c0_i32 = arith.constant 0 : i32
    %c0_i32_0 = arith.constant 0 : i32
    %c0_i32_1 = arith.constant 0 : i32
    return %c0_i32, %c0_i32_0 : i32, i32
  }
  func.func @transform_10(%arg0: i32) -> (i32, i32) {
    %c0_i32 = arith.constant 0 : i32
    %c0_i32_0 = arith.constant 0 : i32
    %c0_i32_1 = arith.constant 0 : i32
    return %c0_i32, %c0_i32_0 : i32, i32
  }
  func.func @transform_11(%arg0: i32) -> (i32, i32) {
    %c0_i32 = arith.constant 0 : i32
    %c0_i32_0 = arith.constant 0 : i32
    %c0_i32_1 = arith.constant 0 : i32
    return %c0_i32, %c0_i32_0 : i32, i32
  }
  func.func @transform_12(%arg0: i32) -> (i32, i32, i32) {
    %c0_i32 = arith.constant 0 : i32
    %c0_i32_0 = arith.constant 0 : i32
    %c0_i32_1 = arith.constant 0 : i32
    %c0_i32_2 = arith.constant 0 : i32
    return %c0_i32, %c0_i32_0, %c0_i32_1 : i32, i32, i32
  }
  func.func @transform_13(%arg0: i32) -> (i32, i32) {
    %c0_i32 = arith.constant 0 : i32
    %c0_i32_0 = arith.constant 0 : i32
    %c0_i32_1 = arith.constant 0 : i32
    return %c0_i32, %c0_i32_0 : i32, i32
  }
  func.func @transform_14(%arg0: i32) -> (i32, i32) {
    %c0_i32 = arith.constant 0 : i32
    %c0_i32_0 = arith.constant 0 : i32
    %c0_i32_1 = arith.constant 0 : i32
    return %c0_i32, %c0_i32_0 : i32, i32
  }
  func.func @transform_15(%arg0: i32) -> (i32, i32) {
    %c0_i32 = arith.constant 0 : i32
    %c0_i32_0 = arith.constant 0 : i32
    %c0_i32_1 = arith.constant 0 : i32
    return %c0_i32, %c0_i32_0 : i32, i32
  }
  func.func @transform_16(%arg0: i32) -> (i32, i32, i32, i32) {
    %c0_i32 = arith.constant 0 : i32
    %c0_i32_0 = arith.constant 0 : i32
    %c0_i32_1 = arith.constant 0 : i32
    %c0_i32_2 = arith.constant 0 : i32
    return %arg0, %c0_i32, %c0_i32_0, %c0_i32_1 : i32, i32, i32, i32
  }
}

</mosaic_0001>

<llo_original>
// kernel: tpu_custom_call.1
$region0: #{tpu_custom_call.1}
  #allocation0 [shape = 'u32[]', space=smem, size = 0x4, offset = 0x4, fixed_abs, tag = 'smem constant byte address 0x4 - core index']
  #allocation1 [shape = 'u32[144,128]{1,0:T(1,128)}', space=vmem, size = 0x12000, scoped, tag = 'internal scratch']
  %s0 = inlined_call_operand.vmem [shape: f32[2,8,8,128], index: 0, kind: input, shape index: {}]
  %s1 = inlined_call_operand.vmem [shape: f32[2,1,128], index: 1, kind: input, shape index: {}]
  %s2 = inlined_call_operand.vmem [shape: f32[1,128], index: 2, kind: input, shape index: {}]
  %s3 = inlined_call_operand.vmem [shape: f32[1,128], index: 3, kind: input, shape index: {}]
  %s4 = inlined_call_operand.vmem [shape: f32[128,32], index: 4, kind: input, shape index: {}]
  %s5 = inlined_call_operand.vmem [shape: f32[32,128], index: 5, kind: input, shape index: {}]
  %s6 = inlined_call_operand.hbm [shape: bf16[3,384,128], index: 6, kind: input, shape index: {}]
  %s7 = inlined_call_operand.vmem [shape: f32[1,128], index: 7, kind: input, shape index: {}]
  %s8 = inlined_call_operand.vmem [shape: f32[1,128], index: 8, kind: input, shape index: {}]
  %s9 = inlined_call_operand.vmem [shape: f32[1,128], index: 9, kind: input, shape index: {}]
  %s10 = inlined_call_operand.vmem [shape: f32[128,32], index: 10, kind: input, shape index: {}]
  %s11 = inlined_call_operand.vmem [shape: f32[32,128], index: 11, kind: input, shape index: {}]
  %s12 = inlined_call_operand.hbm [shape: bf16[3,384,128], index: 12, kind: input, shape index: {}]
  %s13 = inlined_call_operand.vmem [shape: f32[1,128], index: 13, kind: input, shape index: {}]
  %s14 = inlined_call_operand.vmem [shape: bf16[128,128], index: 14, kind: input, shape index: {}]
  %s15 = inlined_call_operand.vmem [shape: f32[1,128], index: 15, kind: input, shape index: {}]
  %s16 = inlined_call_operand.hbm [shape: f32[2,8,8,128], index: 16, kind: output, shape index: {}]
  %s17 = sld [smem:[#allocation0]]
  $region105: #{tpu_custom_call.1} parent=0
    _
  %s19 = ssub.s32 1, %s17
  %s20 = scalar_select 0, %s19, %s17
  $region1: #{tpu_custom_call.1} parent=0
    #allocation2 [shape = 'u8[294912]{0}', space=vmem, size = 0x48000, scoped, tag = 'input window, operand 6, single buffered']
    #allocation3 [shape = 's32[2]{0}', space=sflag, size = 0x8, scoped, tag = 'scoped memory for tpu_custom_call.1']
    #allocation4 [shape = 's32[2]{0}', space=sflag, size = 0x8, scoped, tag = 'scoped memory for tpu_custom_call.1']
    #allocation5 [shape = 'u8[294912]{0}', space=vmem, size = 0x48000, scoped, tag = 'input window, operand 12, single buffered']
    #allocation6 [shape = 's32[1]{0}', space=sflag, size = 0x4, scoped, tag = 'scoped memory for tpu_custom_call.1']
    #allocation7 [shape = 'u8[65536]{0}', space=vmem, size = 0x10000, scoped, tag = 'output window, operand 0']
    %21 = vsyncpa [#allocation3], 0
    %22 = vsyncpa [#allocation6], 0
    %23 = vsyncpa [#allocation4], 0
    %s24 = scalar_lea.sflag [#allocation4], 1
    %25 = vsyncpa %s24, 0
    loop: start=0, step=1, limit=4
    $region2: #{tpu_custom_call.1} parent=1 // loop_pre_header
      _
    $region3: #{tpu_custom_call.1} parent=1 // loop_header
      %s27 = sphi 0, %s31
      %p28 = scmp.ge.s32.totalorder %s27, 4
      %s37 = sphi 0, %s39
      %s40 = sphi 0, %s37
      %s41 = sphi 0, %s40
      %s57 = sphi 0, %s41
      %s63 = sphi 0, %s65
      %s66 = sphi 0, %s63
      %s67 = sphi 0, %s66
      %s83 = sphi 0, %s67
      %s87 = sphi 0, %s87
      %s89 = sphi 0, %s87
      %s90 = sphi 0, %s89
      %s104 = sphi 0, %s90
      %s108 = sphi 0, %s108
      %s110 = sphi 0, %s108
      %s111 = sphi 0, %s110
      %s125 = sphi 0, %s111
      %s129 = sphi 0, %s129
      %s131 = sphi 0, %s129
      %s132 = sphi 0, %s131
      %s146 = sphi 0, %s132
      %s150 = sphi 0, %s150
      %s152 = sphi 0, %s150
      %s153 = sphi 0, %s152
      %s167 = sphi 0, %s153
      %s171 = sphi 0, %s171
      %s173 = sphi 0, %s171
      %s174 = sphi 0, %s173
      %s188 = sphi 0, %s174
      %s192 = sphi 0, %s192
      %s194 = sphi 0, %s192
      %s195 = sphi 0, %s194
      %s209 = sphi 0, %s195
      %s213 = sphi 0, %s213
      %s215 = sphi 0, %s213
      %s216 = sphi 0, %s215
      %s230 = sphi 0, %s216
      %s234 = sphi 0, %s234
      %s236 = sphi 0, %s234
      %s237 = sphi 0, %s236
      %s251 = sphi 0, %s237
      %s255 = sphi 0, %s255
      %s257 = sphi 0, %s255
      %s258 = sphi 0, %s257
      %s272 = sphi 0, %s258
      %s276 = sphi 0, %s276
      %s278 = sphi 0, %s276
      %s279 = sphi 0, %s278
      %s293 = sphi 0, %s279
      %s297 = sphi 0, %s297
      %s299 = sphi 0, %s297
      %s300 = sphi 0, %s299
      %s314 = sphi 0, %s300
      %s318 = sphi 0, %s318
      %s320 = sphi 0, %s318
      %s321 = sphi 0, %s320
      %s335 = sphi 0, %s321
      %s339 = sphi 0, %s339
      %s341 = sphi 0, %s339
      %s342 = sphi 0, %s341
      %s356 = sphi 0, %s342
      %s360 = sphi 0, %s360
      %s362 = sphi 0, %s360
      %s363 = sphi 0, %s362
      %s377 = sphi 0, %s363
      %s383 = sphi 0, %s385
      %s386 = sphi 0, %s383
      %s387 = sphi 0, %s386
      %s403 = sphi 0, %s387
    $region4: #{tpu_custom_call.1} parent=1 // loop_header_branch
      %30 = sbr.rel (%p28) target = $region8
    $region5: #{tpu_custom_call.1} parent=1 // loop_body
      %s32 = ssub.s32 %s27, 1
      %s33 = ssub.s32 %s27, 2
      %s34 = sadd.s32 %s27, 1
      %s35 = ssub.s32 %s27, %s34
      %p36 = scmp.eq.s32.totalorder %s35, 0
      %s38 = sadd.s32 %s37, 1
      %s39 = scalar_select %p36, %s37, %s38
      %p42 = pneg %p36
      %p43 = scmp.eq.s32.totalorder %s27, 1
      %p44 = por %p42, %p43
      %p45 = scmp.ne.s32.totalorder %s37, %s40
      %p46 = scmp.eq.s32.totalorder %s27, 0
      %p47 = por %p45, %p46
      %p48 = scmp.ne.s32.totalorder %s37, %s40
      %p49 = scmp.eq.s32.totalorder %s32, 1
      %p50 = por %p48, %p49
      %p51 = scmp.ne.s32.totalorder %s40, %s41
      %p52 = scmp.eq.s32.totalorder %s32, 0
      %p53 = por %p51, %p52
      %p54 = scmp.ne.s32.totalorder %s40, %s41
      %p55 = scmp.eq.s32.totalorder %s33, 1
      %p56 = por %p54, %p55
      %p58 = scmp.ne.s32.totalorder %s41, %s57
      %p59 = scmp.eq.s32.totalorder %s33, 0
      %p60 = por %p58, %p59
      %s61 = ssub.s32 %s27, %s34
      %p62 = scmp.eq.s32.totalorder %s61, 0
      %s64 = sadd.s32 %s63, 1
      %s65 = scalar_select %p62, %s63, %s64
      %p68 = pneg %p62
      %p69 = scmp.eq.s32.totalorder %s27, 1
      %p70 = por %p68, %p69
      %p71 = scmp.ne.s32.totalorder %s63, %s66
      %p72 = scmp.eq.s32.totalorder %s27, 0
      %p73 = por %p71, %p72
      %p74 = scmp.ne.s32.totalorder %s63, %s66
      %p75 = scmp.eq.s32.totalorder %s32, 1
      %p76 = por %p74, %p75
      %p77 = scmp.ne.s32.totalorder %s66, %s67
      %p78 = scmp.eq.s32.totalorder %s32, 0
      %p79 = por %p77, %p78
      %p80 = scmp.ne.s32.totalorder %s66, %s67
      %p81 = scmp.eq.s32.totalorder %s33, 1
      %p82 = por %p80, %p81
      %p84 = scmp.ne.s32.totalorder %s67, %s83
      %p85 = scmp.eq.s32.totalorder %s33, 0
      %p86 = por %p84, %p85
      %s88 = sadd.s32 %s87, 1
      %p91 = scmp.eq.s32.totalorder %s27, 1
      %p92 = scmp.ne.s32.totalorder %s87, %s89
      %p93 = scmp.eq.s32.totalorder %s27, 0
      %p94 = por %p92, %p93
      %p95 = scmp.ne.s32.totalorder %s87, %s89
      %p96 = scmp.eq.s32.totalorder %s32, 1
      %p97 = por %p95, %p96
      %p98 = scmp.ne.s32.totalorder %s89, %s90
      %p99 = scmp.eq.s32.totalorder %s32, 0
      %p100 = por %p98, %p99
      %p101 = scmp.ne.s32.totalorder %s89, %s90
      %p102 = scmp.eq.s32.totalorder %s33, 1
      %p103 = por %p101, %p102
      %p105 = scmp.ne.s32.totalorder %s90, %s104
      %p106 = scmp.eq.s32.totalorder %s33, 0
      %p107 = por %p105, %p106
      %s109 = sadd.s32 %s108, 1
      %p112 = scmp.eq.s32.totalorder %s27, 1
      %p113 = scmp.ne.s32.totalorder %s108, %s110
      %p114 = scmp.eq.s32.totalorder %s27, 0
      %p115 = por %p113, %p114
      %p116 = scmp.ne.s32.totalorder %s108, %s110
      %p117 = scmp.eq.s32.totalorder %s32, 1
      %p118 = por %p116, %p117
      %p119 = scmp.ne.s32.totalorder %s110, %s111
      %p120 = scmp.eq.s32.totalorder %s32, 0
      %p121 = por %p119, %p120
      %p122 = scmp.ne.s32.totalorder %s110, %s111
      %p123 = scmp.eq.s32.totalorder %s33, 1
      %p124 = por %p122, %p123
      %p126 = scmp.ne.s32.totalorder %s111, %s125
      %p127 = scmp.eq.s32.totalorder %s33, 0
      %p128 = por %p126, %p127
      %s130 = sadd.s32 %s129, 1
      %p133 = scmp.eq.s32.totalorder %s27, 1
      %p134 = scmp.ne.s32.totalorder %s129, %s131
      %p135 = scmp.eq.s32.totalorder %s27, 0
      %p136 = por %p134, %p135
      %p137 = scmp.ne.s32.totalorder %s129, %s131
      %p138 = scmp.eq.s32.totalorder %s32, 1
      %p139 = por %p137, %p138
      %p140 = scmp.ne.s32.totalorder %s131, %s132
      %p141 = scmp.eq.s32.totalorder %s32, 0
      %p142 = por %p140, %p141
      %p143 = scmp.ne.s32.totalorder %s131, %s132
      %p144 = scmp.eq.s32.totalorder %s33, 1
      %p145 = por %p143, %p144
      %p147 = scmp.ne.s32.totalorder %s132, %s146
      %p148 = scmp.eq.s32.totalorder %s33, 0
      %p149 = por %p147, %p148
      %s151 = sadd.s32 %s150, 1
      %p154 = scmp.eq.s32.totalorder %s27, 1
      %p155 = scmp.ne.s32.totalorder %s150, %s152
      %p156 = scmp.eq.s32.totalorder %s27, 0
      %p157 = por %p155, %p156
      %p158 = scmp.ne.s32.totalorder %s150, %s152
      %p159 = scmp.eq.s32.totalorder %s32, 1
      %p160 = por %p158, %p159
      %p161 = scmp.ne.s32.totalorder %s152, %s153
      %p162 = scmp.eq.s32.totalorder %s32, 0
      %p163 = por %p161, %p162
      %p164 = scmp.ne.s32.totalorder %s152, %s153
      %p165 = scmp.eq.s32.totalorder %s33, 1
      %p166 = por %p164, %p165
      %p168 = scmp.ne.s32.totalorder %s153, %s167
      %p169 = scmp.eq.s32.totalorder %s33, 0
      %p170 = por %p168, %p169
      %s172 = sadd.s32 %s171, 1
      %p175 = scmp.eq.s32.totalorder %s27, 1
      %p176 = scmp.ne.s32.totalorder %s171, %s173
      %p177 = scmp.eq.s32.totalorder %s27, 0
      %p178 = por %p176, %p177
      %p179 = scmp.ne.s32.totalorder %s171, %s173
      %p180 = scmp.eq.s32.totalorder %s32, 1
      %p181 = por %p179, %p180
      %p182 = scmp.ne.s32.totalorder %s173, %s174
      %p183 = scmp.eq.s32.totalorder %s32, 0
      %p184 = por %p182, %p183
      %p185 = scmp.ne.s32.totalorder %s173, %s174
      %p186 = scmp.eq.s32.totalorder %s33, 1
      %p187 = por %p185, %p186
      %p189 = scmp.ne.s32.totalorder %s174, %s188
      %p190 = scmp.eq.s32.totalorder %s33, 0
      %p191 = por %p189, %p190
      %s193 = sadd.s32 %s192, 1
      %p196 = scmp.eq.s32.totalorder %s27, 1
      %p197 = scmp.ne.s32.totalorder %s192, %s194
      %p198 = scmp.eq.s32.totalorder %s27, 0
      %p199 = por %p197, %p198
      %p200 = scmp.ne.s32.totalorder %s192, %s194
      %p201 = scmp.eq.s32.totalorder %s32, 1
      %p202 = por %p200, %p201
      %p203 = scmp.ne.s32.totalorder %s194, %s195
      %p204 = scmp.eq.s32.totalorder %s32, 0
      %p205 = por %p203, %p204
      %p206 = scmp.ne.s32.totalorder %s194, %s195
      %p207 = scmp.eq.s32.totalorder %s33, 1
      %p208 = por %p206, %p207
      %p210 = scmp.ne.s32.totalorder %s195, %s209
      %p211 = scmp.eq.s32.totalorder %s33, 0
      %p212 = por %p210, %p211
      %s214 = sadd.s32 %s213, 1
      %p217 = scmp.eq.s32.totalorder %s27, 1
      %p218 = scmp.ne.s32.totalorder %s213, %s215
      %p219 = scmp.eq.s32.totalorder %s27, 0
      %p220 = por %p218, %p219
      %p221 = scmp.ne.s32.totalorder %s213, %s215
      %p222 = scmp.eq.s32.totalorder %s32, 1
      %p223 = por %p221, %p222
      %p224 = scmp.ne.s32.totalorder %s215, %s216
      %p225 = scmp.eq.s32.totalorder %s32, 0
      %p226 = por %p224, %p225
      %p227 = scmp.ne.s32.totalorder %s215, %s216
      %p228 = scmp.eq.s32.totalorder %s33, 1
      %p229 = por %p227, %p228
      %p231 = scmp.ne.s32.totalorder %s216, %s230
      %p232 = scmp.eq.s32.totalorder %s33, 0
      %p233 = por %p231, %p232
      %s235 = sadd.s32 %s234, 1
      %p238 = scmp.eq.s32.totalorder %s27, 1
      %p239 = scmp.ne.s32.totalorder %s234, %s236
      %p240 = scmp.eq.s32.totalorder %s27, 0
      %p241 = por %p239, %p240
      %p242 = scmp.ne.s32.totalorder %s234, %s236
      %p243 = scmp.eq.s32.totalorder %s32, 1
      %p244 = por %p242, %p243
      %p245 = scmp.ne.s32.totalorder %s236, %s237
      %p246 = scmp.eq.s32.totalorder %s32, 0
      %p247 = por %p245, %p246
      %p248 = scmp.ne.s32.totalorder %s236, %s237
      %p249 = scmp.eq.s32.totalorder %s33, 1
      %p250 = por %p248, %p249
      %p252 = scmp.ne.s32.totalorder %s237, %s251
      %p253 = scmp.eq.s32.totalorder %s33, 0
      %p254 = por %p252, %p253
      %s256 = sadd.s32 %s255, 1
      %p259 = scmp.eq.s32.totalorder %s27, 1
      %p260 = scmp.ne.s32.totalorder %s255, %s257
      %p261 = scmp.eq.s32.totalorder %s27, 0
      %p262 = por %p260, %p261
      %p263 = scmp.ne.s32.totalorder %s255, %s257
      %p264 = scmp.eq.s32.totalorder %s32, 1
      %p265 = por %p263, %p264
      %p266 = scmp.ne.s32.totalorder %s257, %s258
      %p267 = scmp.eq.s32.totalorder %s32, 0
      %p268 = por %p266, %p267
      %p269 = scmp.ne.s32.totalorder %s257, %s258
      %p270 = scmp.eq.s32.totalorder %s33, 1
      %p271 = por %p269, %p270
      %p273 = scmp.ne.s32.totalorder %s258, %s272
      %p274 = scmp.eq.s32.totalorder %s33, 0
      %p275 = por %p273, %p274
      %s277 = sadd.s32 %s276, 1
      %p280 = scmp.eq.s32.totalorder %s27, 1
      %p281 = scmp.ne.s32.totalorder %s276, %s278
      %p282 = scmp.eq.s32.totalorder %s27, 0
      %p283 = por %p281, %p282
      %p284 = scmp.ne.s32.totalorder %s276, %s278
      %p285 = scmp.eq.s32.totalorder %s32, 1
      %p286 = por %p284, %p285
      %p287 = scmp.ne.s32.totalorder %s278, %s279
      %p288 = scmp.eq.s32.totalorder %s32, 0
      %p289 = por %p287, %p288
      %p290 = scmp.ne.s32.totalorder %s278, %s279
      %p291 = scmp.eq.s32.totalorder %s33, 1
      %p292 = por %p290, %p291
      %p294 = scmp.ne.s32.totalorder %s279, %s293
      %p295 = scmp.eq.s32.totalorder %s33, 0
      %p296 = por %p294, %p295
      %s298 = sadd.s32 %s297, 1
      %p301 = scmp.eq.s32.totalorder %s27, 1
      %p302 = scmp.ne.s32.totalorder %s297, %s299
      %p303 = scmp.eq.s32.totalorder %s27, 0
      %p304 = por %p302, %p303
      %p305 = scmp.ne.s32.totalorder %s297, %s299
      %p306 = scmp.eq.s32.totalorder %s32, 1
      %p307 = por %p305, %p306
      %p308 = scmp.ne.s32.totalorder %s299, %s300
      %p309 = scmp.eq.s32.totalorder %s32, 0
      %p310 = por %p308, %p309
      %p311 = scmp.ne.s32.totalorder %s299, %s300
      %p312 = scmp.eq.s32.totalorder %s33, 1
      %p313 = por %p311, %p312
      %p315 = scmp.ne.s32.totalorder %s300, %s314
      %p316 = scmp.eq.s32.totalorder %s33, 0
      %p317 = por %p315, %p316
      %s319 = sadd.s32 %s318, 1
      %p322 = scmp.eq.s32.totalorder %s27, 1
      %p323 = scmp.ne.s32.totalorder %s318, %s320
      %p324 = scmp.eq.s32.totalorder %s27, 0
      %p325 = por %p323, %p324
      %p326 = scmp.ne.s32.totalorder %s318, %s320
      %p327 = scmp.eq.s32.totalorder %s32, 1
      %p328 = por %p326, %p327
      %p329 = scmp.ne.s32.totalorder %s320, %s321
      %p330 = scmp.eq.s32.totalorder %s32, 0
      %p331 = por %p329, %p330
      %p332 = scmp.ne.s32.totalorder %s320, %s321
      %p333 = scmp.eq.s32.totalorder %s33, 1
      %p334 = por %p332, %p333
      %p336 = scmp.ne.s32.totalorder %s321, %s335
      %p337 = scmp.eq.s32.totalorder %s33, 0
      %p338 = por %p336, %p337
      %s340 = sadd.s32 %s339, 1
      %p343 = scmp.eq.s32.totalorder %s27, 1
      %p344 = scmp.ne.s32.totalorder %s339, %s341
      %p345 = scmp.eq.s32.totalorder %s27, 0
      %p346 = por %p344, %p345
      %p347 = scmp.ne.s32.totalorder %s339, %s341
      %p348 = scmp.eq.s32.totalorder %s32, 1
      %p349 = por %p347, %p348
      %p350 = scmp.ne.s32.totalorder %s341, %s342
      %p351 = scmp.eq.s32.totalorder %s32, 0
      %p352 = por %p350, %p351
      %p353 = scmp.ne.s32.totalorder %s341, %s342
      %p354 = scmp.eq.s32.totalorder %s33, 1
      %p355 = por %p353, %p354
      %p357 = scmp.ne.s32.totalorder %s342, %s356
      %p358 = scmp.eq.s32.totalorder %s33, 0
      %p359 = por %p357, %p358
      %s361 = sadd.s32 %s360, 1
      %p364 = scmp.eq.s32.totalorder %s27, 1
      %p365 = scmp.ne.s32.totalorder %s360, %s362
      %p366 = scmp.eq.s32.totalorder %s27, 0
      %p367 = por %p365, %p366
      %p368 = scmp.ne.s32.totalorder %s360, %s362
      %p369 = scmp.eq.s32.totalorder %s32, 1
      %p370 = por %p368, %p369
      %p371 = scmp.ne.s32.totalorder %s362, %s363
      %p372 = scmp.eq.s32.totalorder %s32, 0
      %p373 = por %p371, %p372
      %p374 = scmp.ne.s32.totalorder %s362, %s363
      %p375 = scmp.eq.s32.totalorder %s33, 1
      %p376 = por %p374, %p375
      %p378 = scmp.ne.s32.totalorder %s363, %s377
      %p379 = scmp.eq.s32.totalorder %s33, 0
      %p380 = por %p378, %p379
      %s381 = ssub.s32 %s27, %s34
      %p382 = scmp.eq.s32.totalorder %s381, 0
      %s384 = sadd.s32 %s383, 1
      %s385 = scalar_select %p382, %s383, %s384
      %p388 = pneg %p382
      %p389 = scmp.eq.s32.totalorder %s27, 1
      %p390 = por %p388, %p389
      %p391 = scmp.ne.s32.totalorder %s383, %s386
      %p392 = scmp.eq.s32.totalorder %s27, 0
      %p393 = por %p391, %p392
      %p394 = scmp.ne.s32.totalorder %s383, %s386
      %p395 = scmp.eq.s32.totalorder %s32, 1
      %p396 = por %p394, %p395
      %p397 = scmp.ne.s32.totalorder %s386, %s387
      %p398 = scmp.eq.s32.totalorder %s32, 0
      %p399 = por %p397, %p398
      %p400 = scmp.ne.s32.totalorder %s386, %s387
      %p401 = scmp.eq.s32.totalorder %s33, 1
      %p402 = por %p400, %p401
      %p404 = scmp.ne.s32.totalorder %s387, %s403
      %p405 = scmp.eq.s32.totalorder %s33, 0
      %p406 = por %p404, %p405
      %p407 = scmp.le.s32.totalorder 1, %s27
      %p408 = scmp.lt.s32.totalorder %s27, 3
      %p409 = pnand %p407, %p408
      %p410 = pneg %p409
      // Predicated region
      $region9: #{tpu_custom_call.1} parent=5 // pred_check
        _
      $region10: #{tpu_custom_call.1} parent=5 // pred_check_branch
        %412 = sbr.rel (%p409) target = $region12
      $region11: #{tpu_custom_call.1} parent=5 // pred_region
        %s413 = ssub.s32 %s27, 1
        // Predicated region
        $region13: #{tpu_custom_call.1} parent=11 // pred_check
          %p414 = pneg %p100
        $region14: #{tpu_custom_call.1} parent=11 // pred_check_branch
          %416 = sbr.rel (%p414) target = $region16
        $region15: #{tpu_custom_call.1} parent=11 // pred_region
          _
        $region16: #{tpu_custom_call.1} parent=11 // pred_fallthru
          _
        // Predicated region
        $region17: #{tpu_custom_call.1} parent=11 // pred_check
          %p417 = pneg %p121
        $region18: #{tpu_custom_call.1} parent=11 // pred_check_branch
          %419 = sbr.rel (%p417) target = $region20
        $region19: #{tpu_custom_call.1} parent=11 // pred_region
          _
        $region20: #{tpu_custom_call.1} parent=11 // pred_fallthru
          _
        // Predicated region
        $region21: #{tpu_custom_call.1} parent=11 // pred_check
          %p420 = pneg %p142
        $region22: #{tpu_custom_call.1} parent=11 // pred_check_branch
          %422 = sbr.rel (%p420) target = $region24
        $region23: #{tpu_custom_call.1} parent=11 // pred_region
          _
        $region24: #{tpu_custom_call.1} parent=11 // pred_fallthru
          _
        // Predicated region
        $region25: #{tpu_custom_call.1} parent=11 // pred_check
          %p423 = pneg %p163
        $region26: #{tpu_custom_call.1} parent=11 // pred_check_branch
          %425 = sbr.rel (%p423) target = $region28
        $region27: #{tpu_custom_call.1} parent=11 // pred_region
          _
        $region28: #{tpu_custom_call.1} parent=11 // pred_fallthru
          _
        // Predicated region
        $region29: #{tpu_custom_call.1} parent=11 // pred_check
          %p426 = pneg %p184
        $region30: #{tpu_custom_call.1} parent=11 // pred_check_branch
          %428 = sbr.rel (%p426) target = $region32
        $region31: #{tpu_custom_call.1} parent=11 // pred_region
          %s430 = ssub.s32 9216, 9216
          %431 = vsyncadd [#allocation3], %s430
          %s432 = sshll.u32 [#allocation2], 4
          %s433 = int_to_ptr.vmem [resolvable:$true] %s432
          %438 = dma.hbm_to_vmem [thread:$0]  %s6, 9216, %s433, [#allocation3], 64, 64, 4
        $region32: #{tpu_custom_call.1} parent=11 // pred_fallthru
          _
        // Predicated region
        $region33: #{tpu_custom_call.1} parent=11 // pred_check
          %p439 = pneg %p205
        $region34: #{tpu_custom_call.1} parent=11 // pred_check_branch
          %441 = sbr.rel (%p439) target = $region36
        $region35: #{tpu_custom_call.1} parent=11 // pred_region
          _
        $region36: #{tpu_custom_call.1} parent=11 // pred_fallthru
          _
        // Predicated region
        $region37: #{tpu_custom_call.1} parent=11 // pred_check
          %p442 = pneg %p226
        $region38: #{tpu_custom_call.1} parent=11 // pred_check_branch
          %444 = sbr.rel (%p442) target = $region40
        $region39: #{tpu_custom_call.1} parent=11 // pred_region
          _
        $region40: #{tpu_custom_call.1} parent=11 // pred_fallthru
          _
        // Predicated region
        $region41: #{tpu_custom_call.1} parent=11 // pred_check
          %p445 = pneg %p247
        $region42: #{tpu_custom_call.1} parent=11 // pred_check_branch
          %447 = sbr.rel (%p445) target = $region44
        $region43: #{tpu_custom_call.1} parent=11 // pred_region
          _
        $region44: #{tpu_custom_call.1} parent=11 // pred_fallthru
          _
        // Predicated region
        $region45: #{tpu_custom_call.1} parent=11 // pred_check
          %p448 = pneg %p268
        $region46: #{tpu_custom_call.1} parent=11 // pred_check_branch
          %450 = sbr.rel (%p448) target = $region48
        $region47: #{tpu_custom_call.1} parent=11 // pred_region
          _
        $region48: #{tpu_custom_call.1} parent=11 // pred_fallthru
          _
        // Predicated region
        $region49: #{tpu_custom_call.1} parent=11 // pred_check
          %p451 = pneg %p289
        $region50: #{tpu_custom_call.1} parent=11 // pred_check_branch
          %453 = sbr.rel (%p451) target = $region52
        $region51: #{tpu_custom_call.1} parent=11 // pred_region
          _
        $region52: #{tpu_custom_call.1} parent=11 // pred_fallthru
          _
        // Predicated region
        $region53: #{tpu_custom_call.1} parent=11 // pred_check
          %p454 = pneg %p310
        $region54: #{tpu_custom_call.1} parent=11 // pred_check_branch
          %456 = sbr.rel (%p454) target = $region56
        $region55: #{tpu_custom_call.1} parent=11 // pred_region
          %s458 = ssub.s32 9216, 9216
          %459 = vsyncadd [#allocation6], %s458
          %s460 = sshll.u32 [#allocation5], 4
          %s461 = int_to_ptr.vmem [resolvable:$true] %s460
          %466 = dma.hbm_to_vmem [thread:$0]  %s12, 9216, %s461, [#allocation6], 64, 64, 4
        $region56: #{tpu_custom_call.1} parent=11 // pred_fallthru
          _
        // Predicated region
        $region57: #{tpu_custom_call.1} parent=11 // pred_check
          %p467 = pneg %p331
        $region58: #{tpu_custom_call.1} parent=11 // pred_check_branch
          %469 = sbr.rel (%p467) target = $region60
        $region59: #{tpu_custom_call.1} parent=11 // pred_region
          _
        $region60: #{tpu_custom_call.1} parent=11 // pred_fallthru
          _
        // Predicated region
        $region61: #{tpu_custom_call.1} parent=11 // pred_check
          %p470 = pneg %p352
        $region62: #{tpu_custom_call.1} parent=11 // pred_check_branch
          %472 = sbr.rel (%p470) target = $region64
        $region63: #{tpu_custom_call.1} parent=11 // pred_region
          _
        $region64: #{tpu_custom_call.1} parent=11 // pred_fallthru
          _
        // Predicated region
        $region65: #{tpu_custom_call.1} parent=11 // pred_check
          %p473 = pneg %p373
        $region66: #{tpu_custom_call.1} parent=11 // pred_check_branch
          %475 = sbr.rel (%p473) target = $region68
        $region67: #{tpu_custom_call.1} parent=11 // pred_region
          _
        $region68: #{tpu_custom_call.1} parent=11 // pred_fallthru
          _
      $region12: #{tpu_custom_call.1} parent=5 // pred_fallthru
        _
      %p476 = scmp.lt.s32.totalorder %s27, 2
      // Predicated region
      $region69: #{tpu_custom_call.1} parent=5 // pred_check
        %p477 = pneg %p476
      $region70: #{tpu_custom_call.1} parent=5 // pred_check_branch
        %479 = sbr.rel (%p477) target = $region72
      $region71: #{tpu_custom_call.1} parent=5 // pred_region
        // Predicated region
        $region73: #{tpu_custom_call.1} parent=71 // pred_check
          %p480 = pneg %p47
        $region74: #{tpu_custom_call.1} parent=71 // pred_check_branch
          %482 = sbr.rel (%p480) target = $region76
        $region75: #{tpu_custom_call.1} parent=71 // pred_region
          %p483 = scmp.lt.s32.totalorder %s27, 1
          %s484 = scalar_select %p483, %s27, 1
          %s485 = smul.addr %s484, 8
          %s486 = smul.addr %s485, 8
          %s487 = scalar_lea.vmem %s0, %s486
        $region76: #{tpu_custom_call.1} parent=71 // pred_fallthru
          _
        // Predicated region
        $region77: #{tpu_custom_call.1} parent=71 // pred_check
          %p488 = pneg %p73
        $region78: #{tpu_custom_call.1} parent=71 // pred_check_branch
          %490 = sbr.rel (%p488) target = $region80
        $region79: #{tpu_custom_call.1} parent=71 // pred_region
          %p491 = scmp.lt.s32.totalorder %s27, 1
          %s492 = scalar_select %p491, %s27, 1
          %s493 = scalar_lea.vmem %s1, %s492
        $region80: #{tpu_custom_call.1} parent=71 // pred_fallthru
          _
      $region72: #{tpu_custom_call.1} parent=5 // pred_fallthru
        _
      %p494 = scmp.le.s32.totalorder 1, %s27
      %p495 = scmp.lt.s32.totalorder %s27, 3
      %p496 = pnand %p494, %p495
      %p497 = pneg %p496
      // Predicated region
      $region81: #{tpu_custom_call.1} parent=5 // pred_check
        _
      $region82: #{tpu_custom_call.1} parent=5 // pred_check_branch
        %499 = sbr.rel (%p496) target = $region84
      $region83: #{tpu_custom_call.1} parent=5 // pred_region
        %s500 = ssub.s32 %s27, 1
        // Predicated region
        $region85: #{tpu_custom_call.1} parent=83 // pred_check
          %p501 = pneg %p184
        $region86: #{tpu_custom_call.1} parent=83 // pred_check_branch
          %503 = sbr.rel (%p501) target = $region88
        $region87: #{tpu_custom_call.1} parent=83 // pred_region
          %504 = dma.done [#allocation3], 9216
        $region88: #{tpu_custom_call.1} parent=83 // pred_fallthru
          _
        // Predicated region
        $region89: #{tpu_custom_call.1} parent=83 // pred_check
          %p505 = pneg %p310
        $region90: #{tpu_custom_call.1} parent=83 // pred_check_branch
          %507 = sbr.rel (%p505) target = $region92
        $region91: #{tpu_custom_call.1} parent=83 // pred_region
          %508 = dma.done [#allocation6], 9216
        $region92: #{tpu_custom_call.1} parent=83 // pred_fallthru
          _
        %p509 = scmp.lt.s32.totalorder %s32, 1
        %s510 = scalar_select %p509, %s32, 1
        %s511 = smul.addr %s510, 8
        %s512 = smul.addr %s511, 8
        %s513 = scalar_lea.vmem %s0, %s512
        %p514 = pneg %p53
        %p515 = pneg %p50
        %p516 = scmp.lt.s32.totalorder %s32, 1
        %s517 = scalar_select %p516, %s32, 1
        %s518 = scalar_lea.vmem %s1, %s517
        %p519 = pneg %p79
        %p520 = pneg %p76
        %p521 = pneg %p100
        %p522 = pneg %p97
        %p523 = pneg %p121
        %p524 = pneg %p118
        %p525 = pneg %p142
        %p526 = pneg %p139
        %p527 = pneg %p163
        %p528 = pneg %p160
        %p529 = pneg %p184
        %p530 = pneg %p181
        %p531 = pneg %p205
        %p532 = pneg %p202
        %p533 = pneg %p226
        %p534 = pneg %p223
        %p535 = pneg %p247
        %p536 = pneg %p244
        %p537 = pneg %p268
        %p538 = pneg %p265
        %p539 = pneg %p289
        %p540 = pneg %p286
        %p541 = pneg %p310
        %p542 = pneg %p307
        %p543 = pneg %p331
        %p544 = pneg %p328
        %p545 = pneg %p352
        %p546 = pneg %p349
        %p547 = pneg %p373
        %p548 = pneg %p370
        %p549 = pneg %p399
        %p550 = pneg %p396
        %s551 = sand.u32 %s386, 1
        %s552 = scalar_lea.sflag [#allocation4], %s551
        %s553 = sand.u32 %s386, 1
        %s554 = smul.addr %s553, 64
        %s555 = scalar_lea.vmem [#allocation7], %s554
        %p556 = scmp.lt.s32.totalorder %s32, 1
        %s557 = scalar_select %p556, %s32, 1
        %s558 = smul.addr %s557, 8
        %s559 = smul.addr %s558, 8
        %s560 = scalar_lea.vmem %s0, %s559
        %p561 = scmp.lt.s32.totalorder %s32, 1
        %s562 = scalar_select %p561, %s32, 1
        %s563 = scalar_lea.vmem %s1, %s562
        %v565 = vld [vmem:[%s560] sm:$0xff]
        %v566 = vld [vmem:[%s560 + $0x8] sm:$0xff]
        %v567 = vld [vmem:[%s560 + $0x10] sm:$0xff]
        %v568 = vld [vmem:[%s560 + $0x18] sm:$0xff]
        %v569 = vld [vmem:[%s560 + $0x20] sm:$0xff]
        %v570 = vld [vmem:[%s560 + $0x28] sm:$0xff]
        %v571 = vld [vmem:[%s560 + $0x30] sm:$0xff]
        %v572 = vld [vmem:[%s560 + $0x38] sm:$0xff]
        %v573 = vlaneseq
        %v574 = vshrl.u32 %v573, 7
        %v575 = vadd.s32 %v574, 8
        %v576 = vadd.s32 %v574, 16
        %v577 = vadd.s32 %v574, 24
        %v578 = vadd.s32 %v574, 32
        %v579 = vadd.s32 %v574, 40
        %v580 = vadd.s32 %v574, 48
        %v581 = vadd.s32 %v574, 56
        %vm582 = vcmp.lt.s32.totalorder %v574, 0
        %v583 = vsub.s32 0, %v574
        %v584 = vsel %vm582, %v583, %v574
        %v585 = vshrl.u32 %v584, 3
        %v586 = vand.u32 %v584, 7
        %v587 = vsub.s32 0, %v586
        %v588 = vsel %vm582, %v587, %v586
        %vm589 = vcmp.lt.s32.totalorder %v575, 0
        %v590 = vsub.s32 0, %v575
        %v591 = vsel %vm589, %v590, %v575
        %v592 = vshrl.u32 %v591, 3
        %v593 = vand.u32 %v591, 7
        %v594 = vsub.s32 0, %v593
        %v595 = vsel %vm589, %v594, %v593
        %vm596 = vcmp.lt.s32.totalorder %v576, 0
        %v597 = vsub.s32 0, %v576
        %v598 = vsel %vm596, %v597, %v576
        %v599 = vshrl.u32 %v598, 3
        %v600 = vand.u32 %v598, 7
        %v601 = vsub.s32 0, %v600
        %v602 = vsel %vm596, %v601, %v600
        %vm603 = vcmp.lt.s32.totalorder %v577, 0
        %v604 = vsub.s32 0, %v577
        %v605 = vsel %vm603, %v604, %v577
        %v606 = vshrl.u32 %v605, 3
        %v607 = vand.u32 %v605, 7
        %v608 = vsub.s32 0, %v607
        %v609 = vsel %vm603, %v608, %v607
        %vm610 = vcmp.lt.s32.totalorder %v578, 0
        %v611 = vsub.s32 0, %v578
        %v612 = vsel %vm610, %v611, %v578
        %v613 = vshrl.u32 %v612, 3
        %v614 = vand.u32 %v612, 7
        %v615 = vsub.s32 0, %v614
        %v616 = vsel %vm610, %v615, %v614
        %vm617 = vcmp.lt.s32.totalorder %v579, 0
        %v618 = vsub.s32 0, %v579
        %v619 = vsel %vm617, %v618, %v579
        %v620 = vshrl.u32 %v619, 3
        %v621 = vand.u32 %v619, 7
        %v622 = vsub.s32 0, %v621
        %v623 = vsel %vm617, %v622, %v621
        %vm624 = vcmp.lt.s32.totalorder %v580, 0
        %v625 = vsub.s32 0, %v580
        %v626 = vsel %vm624, %v625, %v580
        %v627 = vshrl.u32 %v626, 3
        %v628 = vand.u32 %v626, 7
        %v629 = vsub.s32 0, %v628
        %v630 = vsel %vm624, %v629, %v628
        %vm631 = vcmp.lt.s32.totalorder %v581, 0
        %v632 = vsub.s32 0, %v581
        %v633 = vsel %vm631, %v632, %v581
        %v634 = vshrl.u32 %v633, 3
        %v635 = vand.u32 %v633, 7
        %v636 = vsub.s32 0, %v635
        %v637 = vsel %vm631, %v636, %v635
        %vm638 = vcmp.ne.s32.totalorder %v588, 0
        %vm639 = vcmp.ne.s32.totalorder %v595, 0
        %vm640 = vcmp.ne.s32.totalorder %v602, 0
        %vm641 = vcmp.ne.s32.totalorder %v609, 0
        %vm642 = vcmp.ne.s32.totalorder %v616, 0
        %vm643 = vcmp.ne.s32.totalorder %v623, 0
        %vm644 = vcmp.ne.s32.totalorder %v630, 0
        %vm645 = vcmp.ne.s32.totalorder %v637, 0
        %vm646 = vcmp.lt.s32.totalorder %v588, 0
        %vm647 = vcmp.lt.s32.totalorder %v595, 0
        %vm648 = vcmp.lt.s32.totalorder %v602, 0
        %vm649 = vcmp.lt.s32.totalorder %v609, 0
        %vm650 = vcmp.lt.s32.totalorder %v616, 0
        %vm651 = vcmp.lt.s32.totalorder %v623, 0
        %vm652 = vcmp.lt.s32.totalorder %v630, 0
        %vm653 = vcmp.lt.s32.totalorder %v637, 0
        %vm654 = vmand %vm646, %vm638
        %vm655 = vmand %vm647, %vm639
        %vm656 = vmand %vm648, %vm640
        %vm657 = vmand %vm649, %vm641
        %vm658 = vmand %vm650, %vm642
        %vm659 = vmand %vm651, %vm643
        %vm660 = vmand %vm652, %vm644
        %vm661 = vmand %vm653, %vm645
        %v662 = vadd.s32 %v588, 8
        %v663 = vadd.s32 %v595, 8
        %v664 = vadd.s32 %v602, 8
        %v665 = vadd.s32 %v609, 8
        %v666 = vadd.s32 %v616, 8
        %v667 = vadd.s32 %v623, 8
        %v668 = vadd.s32 %v630, 8
        %v669 = vadd.s32 %v637, 8
        %v670 = vsel %vm654, %v662, %v588
        %v671 = vsel %vm655, %v663, %v595
        %v672 = vsel %vm656, %v664, %v602
        %v673 = vsel %vm657, %v665, %v609
        %v674 = vsel %vm658, %v666, %v616
        %v675 = vsel %vm659, %v667, %v623
        %v676 = vsel %vm660, %v668, %v630
        %v677 = vsel %vm661, %v669, %v637
        %vm678 = vcmp.ge.s32.totalorder %v574, 8
        %vm679 = vcmp.ge.s32.totalorder %v575, 8
        %vm680 = vcmp.ge.s32.totalorder %v576, 8
        %vm681 = vcmp.ge.s32.totalorder %v577, 8
        %vm682 = vcmp.ge.s32.totalorder %v578, 8
        %vm683 = vcmp.ge.s32.totalorder %v579, 8
        %vm684 = vcmp.ge.s32.totalorder %v580, 8
        %vm685 = vcmp.ge.s32.totalorder %v581, 8
        %v686 = vsel %vm678, 1, 0
        %v687 = vsel %vm679, 1, 0
        %v688 = vsel %vm680, 1, 0
        %v689 = vsel %vm681, 1, 0
        %v690 = vsel %vm682, 1, 0
        %v691 = vsel %vm683, 1, 0
        %v692 = vsel %vm684, 1, 0
        %v693 = vsel %vm685, 1, 0
        %v694 = vcvt.s32.f32 %v686
        %v695 = vcvt.s32.f32 %v687
        %v696 = vcvt.s32.f32 %v688
        %v697 = vcvt.s32.f32 %v689
        %v698 = vcvt.s32.f32 %v690
        %v699 = vcvt.s32.f32 %v691
        %v700 = vcvt.s32.f32 %v692
        %v701 = vcvt.s32.f32 %v693
        %vm702 = vcmp.lt.s32.totalorder %v574, 56
        %vm703 = vcmp.lt.s32.totalorder %v575, 56
        %vm704 = vcmp.lt.s32.totalorder %v576, 56
        %vm705 = vcmp.lt.s32.totalorder %v577, 56
        %vm706 = vcmp.lt.s32.totalorder %v578, 56
        %vm707 = vcmp.lt.s32.totalorder %v579, 56
        %vm708 = vcmp.lt.s32.totalorder %v580, 56
        %vm709 = vcmp.lt.s32.totalorder %v581, 56
        %v710 = vsel %vm702, 1, 0
        %v711 = vsel %vm703, 1, 0
        %v712 = vsel %vm704, 1, 0
        %v713 = vsel %vm705, 1, 0
        %v714 = vsel %vm706, 1, 0
        %v715 = vsel %vm707, 1, 0
        %v716 = vsel %vm708, 1, 0
        %v717 = vsel %vm709, 1, 0
        %v718 = vcvt.s32.f32 %v710
        %v719 = vcvt.s32.f32 %v711
        %v720 = vcvt.s32.f32 %v712
        %v721 = vcvt.s32.f32 %v713
        %v722 = vcvt.s32.f32 %v714
        %v723 = vcvt.s32.f32 %v715
        %v724 = vcvt.s32.f32 %v716
        %v725 = vcvt.s32.f32 %v717
        %vm726 = vcmp.ge.s32.totalorder %v670, 1
        %vm727 = vcmp.ge.s32.totalorder %v671, 1
        %vm728 = vcmp.ge.s32.totalorder %v672, 1
        %vm729 = vcmp.ge.s32.totalorder %v673, 1
        %vm730 = vcmp.ge.s32.totalorder %v674, 1
        %vm731 = vcmp.ge.s32.totalorder %v675, 1
        %vm732 = vcmp.ge.s32.totalorder %v676, 1
        %vm733 = vcmp.ge.s32.totalorder %v677, 1
        %v734 = vsel %vm726, 1, 0
        %v735 = vsel %vm727, 1, 0
        %v736 = vsel %vm728, 1, 0
        %v737 = vsel %vm729, 1, 0
        %v738 = vsel %vm730, 1, 0
        %v739 = vsel %vm731, 1, 0
        %v740 = vsel %vm732, 1, 0
        %v741 = vsel %vm733, 1, 0
        %v742 = vcvt.s32.f32 %v734
        %v743 = vcvt.s32.f32 %v735
        %v744 = vcvt.s32.f32 %v736
        %v745 = vcvt.s32.f32 %v737
        %v746 = vcvt.s32.f32 %v738
        %v747 = vcvt.s32.f32 %v739
        %v748 = vcvt.s32.f32 %v740
        %v749 = vcvt.s32.f32 %v741
        %vm750 = vcmp.le.s32.totalorder %v670, 6
        %vm751 = vcmp.le.s32.totalorder %v671, 6
        %vm752 = vcmp.le.s32.totalorder %v672, 6
        %vm753 = vcmp.le.s32.totalorder %v673, 6
        %vm754 = vcmp.le.s32.totalorder %v674, 6
        %vm755 = vcmp.le.s32.totalorder %v675, 6
        %vm756 = vcmp.le.s32.totalorder %v676, 6
        %vm757 = vcmp.le.s32.totalorder %v677, 6
        %v758 = vsel %vm750, 1, 0
        %v759 = vsel %vm751, 1, 0
        %v760 = vsel %vm752, 1, 0
        %v761 = vsel %vm753, 1, 0
        %v762 = vsel %vm754, 1, 0
        %v763 = vsel %vm755, 1, 0
        %v764 = vsel %vm756, 1, 0
        %v765 = vsel %vm757, 1, 0
        %v766 = vcvt.s32.f32 %v758
        %v767 = vcvt.s32.f32 %v759
        %v768 = vcvt.s32.f32 %v760
        %v769 = vcvt.s32.f32 %v761
        %v770 = vcvt.s32.f32 %v762
        %v771 = vcvt.s32.f32 %v763
        %v772 = vcvt.s32.f32 %v764
        %v773 = vcvt.s32.f32 %v765
        %v774 = vld [vmem:[%s2] sm:$0x1]
        %v775 = vld [vmem:[%s3] sm:$0x1]
        %v776 = vld [vmem:[%s4] sm:$0xff]
        %v777 = vld [vmem:[%s4 + $0x8] sm:$0xff]
        %v778 = vld [vmem:[%s4 + $0x10] sm:$0xff]
        %v779 = vld [vmem:[%s4 + $0x18] sm:$0xff]
        %v780 = vld [vmem:[%s4 + $0x20] sm:$0xff]
        %v781 = vld [vmem:[%s4 + $0x28] sm:$0xff]
        %v782 = vld [vmem:[%s4 + $0x30] sm:$0xff]
        %v783 = vld [vmem:[%s4 + $0x38] sm:$0xff]
        %v784 = vld [vmem:[%s4 + $0x40] sm:$0xff]
        %v785 = vld [vmem:[%s4 + $0x48] sm:$0xff]
        %v786 = vld [vmem:[%s4 + $0x50] sm:$0xff]
        %v787 = vld [vmem:[%s4 + $0x58] sm:$0xff]
        %v788 = vld [vmem:[%s4 + $0x60] sm:$0xff]
        %v789 = vld [vmem:[%s4 + $0x68] sm:$0xff]
        %v790 = vld [vmem:[%s4 + $0x70] sm:$0xff]
        %v791 = vld [vmem:[%s4 + $0x78] sm:$0xff]
        %v792 = vld [vmem:[%s5] sm:$0xff]
        %v793 = vld [vmem:[%s5 + $0x8] sm:$0xff]
        %v794 = vld [vmem:[%s5 + $0x10] sm:$0xff]
        %v795 = vld [vmem:[%s5 + $0x18] sm:$0xff]
        %v796 = vadd.f32 %v565, %v566
        %v797 = vadd.f32 %v796, %v567
        %v798 = vadd.f32 %v797, %v568
        %v799 = vadd.f32 %v798, %v569
        %v800 = vadd.f32 %v799, %v570
        %v801 = vadd.f32 %v800, %v571
        %v802 = vadd.f32 %v801, %v572
        %v803 = vrot.slane %v802, 4
        %v804 = vadd.f32 %v802, %v803
        %v805 = vrot.slane %v804, 2
        %v806 = vadd.f32 %v804, %v805
        %v807 = vrot.slane %v806, 1
        %v808 = vadd.f32 %v806, %v807
        %809 = vmatprep.subr.mxu0 0.0
        %810 = vmatpush1.msra.mxu0 %v791
        %811 = vmatprep.subr.mxu0 0.0
        %812 = vmatpush1.msra.mxu0 %v790
        %813 = vmatprep.subr.mxu0 0.0
        %814 = vmatpush1.msra.mxu0 %v789
        %815 = vmatprep.subr.mxu0 0.0
        %816 = vmatpush1.msra.mxu0 %v788
        %817 = vmatprep.subr.mxu0 0.0
        %818 = vmatpush1.msra.mxu0 %v787
        %819 = vmatprep.subr.mxu0 0.0
        %820 = vmatpush1.msra.mxu0 %v786
        %821 = vmatprep.subr.mxu0 0.0
        %822 = vmatpush1.msra.mxu0 %v785
        %823 = vmatprep.subr.mxu0 0.0
        %824 = vmatpush1.msra.mxu0 %v784
        %825 = vmatprep.subr.mxu0 0.0
        %826 = vmatpush1.msra.mxu0 %v783
        %827 = vmatprep.subr.mxu0 0.0
        %828 = vmatpush1.msra.mxu0 %v782
        %829 = vmatprep.subr.mxu0 0.0
        %830 = vmatpush1.msra.mxu0 %v781
        %831 = vmatprep.subr.mxu0 0.0
        %832 = vmatpush1.msra.mxu0 %v780
        %833 = vmatprep.subr.mxu0 0.0
        %834 = vmatpush1.msra.mxu0 %v779
        %835 = vmatprep.subr.mxu0 0.0
        %836 = vmatpush1.msra.mxu0 %v778
        %837 = vmatprep.subr.mxu0 0.0
        %838 = vmatpush1.msra.mxu0 %v777
        %839 = vmatprep.subr.mxu0 0.0
        %840 = vmatpush1.msra.mxu0 %v776
        %841 = vmatprep.subr.mxu0 0.0
        %842 = vmatpush2.msra.mxu0 0.0
        %843 = vmatprep.subr.mxu0 0.0
        %844 = vmatpush2.msra.mxu0 0.0
        %845 = vmatprep.subr.mxu0 0.0
        %846 = vmatpush2.msra.mxu0 0.0
        %847 = vmatprep.subr.mxu0 0.0
        %848 = vmatpush2.msra.mxu0 0.0
        %849 = vmatprep.subr.mxu0 0.0
        %850 = vmatpush2.msra.mxu0 0.0
        %851 = vmatprep.subr.mxu0 0.0
        %852 = vmatpush2.msra.mxu0 0.0
        %853 = vmatprep.subr.mxu0 0.0
        %854 = vmatpush2.msra.mxu0 0.0
        %855 = vmatprep.subr.mxu0 0.0
        %856 = vmatpush2.msra.mxu0 0.0
        %857 = vmatprep.subr.mxu0 0.0
        %858 = vmatpush2.msra.mxu0 0.0
        %859 = vmatprep.subr.mxu0 0.0
        %860 = vmatpush2.msra.mxu0 0.0
        %861 = vmatprep.subr.mxu0 0.0
        %862 = vmatpush2.msra.mxu0 0.0
        %863 = vmatprep.subr.mxu0 0.0
        %864 = vmatpush2.msra.mxu0 0.0
        %865 = vmatprep.subr.mxu0 0.0
        %866 = vmatpush2.msra.mxu0 0.0
        %867 = vmatprep.subr.mxu0 0.0
        %868 = vmatpush2.msra.mxu0 0.0
        %869 = vmatprep.subr.mxu0 0.0
        %870 = vmatpush2.msra.mxu0 0.0
        %871 = vmatprep.subr.mxu0 0.0
        %872 = vmatpush2.msra.mxu0 0.0
        %873 = vmatprep.mubr.f32.mxu0 0.0
        %874 = vmatmul.mubr.f32.gmra.mxu0 %v808
        %v875 = vpop.f32.mrf.mxu0
        %v876 = vadd.f32 0.0, %v875
        %v877 = vpop.f32.mrf.mxu0
        %878 = vdwg.mxu0
        %v879 = vmul.f32 %v876, 0.015625
        %vm880 = vcmask 261120
        %v882 = vsel %vm880, %v879, 0
        %884 = vmatprep.subr.mxu0 0.0
        %885 = vmatpush1.msra.mxu0 0.0
        %886 = vmatprep.subr.mxu0 0.0
        %887 = vmatpush1.msra.mxu0 0.0
        %888 = vmatprep.subr.mxu0 0.0
        %889 = vmatpush1.msra.mxu0 0.0
        %890 = vmatprep.subr.mxu0 0.0
        %891 = vmatpush1.msra.mxu0 0.0
        %892 = vmatprep.subr.mxu0 0.0
        %893 = vmatpush1.msra.mxu0 0.0
        %894 = vmatprep.subr.mxu0 0.0
        %895 = vmatpush1.msra.mxu0 0.0
        %896 = vmatprep.subr.mxu0 0.0
        %897 = vmatpush1.msra.mxu0 0.0
        %898 = vmatprep.subr.mxu0 0.0
        %899 = vmatpush1.msra.mxu0 0.0
        %900 = vmatprep.subr.mxu0 0.0
        %901 = vmatpush1.msra.mxu0 0.0
        %902 = vmatprep.subr.mxu0 0.0
        %903 = vmatpush1.msra.mxu0 0.0
        %904 = vmatprep.subr.mxu0 0.0
        %905 = vmatpush1.msra.mxu0 0.0
        %906 = vmatprep.subr.mxu0 0.0
        %907 = vmatpush1.msra.mxu0 0.0
        %908 = vmatprep.subr.mxu0 0.0
        %909 = vmatpush1.msra.mxu0 %v795
        %910 = vmatprep.subr.mxu0 0.0
        %911 = vmatpush1.msra.mxu0 %v794
        %912 = vmatprep.subr.mxu0 0.0
        %913 = vmatpush1.msra.mxu0 %v793
        %914 = vmatprep.subr.mxu0 0.0
        %915 = vmatpush1.msra.mxu0 %v792
        %916 = vmatprep.subr.mxu0 0.0
        %917 = vmatpush2.msra.mxu0 0.0
        %918 = vmatprep.subr.mxu0 0.0
        %919 = vmatpush2.msra.mxu0 0.0
        %920 = vmatprep.subr.mxu0 0.0
        %921 = vmatpush2.msra.mxu0 0.0
        %922 = vmatprep.subr.mxu0 0.0
        %923 = vmatpush2.msra.mxu0 0.0
        %924 = vmatprep.subr.mxu0 0.0
        %925 = vmatpush2.msra.mxu0 0.0
        %926 = vmatprep.subr.mxu0 0.0
        %927 = vmatpush2.msra.mxu0 0.0
        %928 = vmatprep.subr.mxu0 0.0
        %929 = vmatpush2.msra.mxu0 0.0
        %930 = vmatprep.subr.mxu0 0.0
        %931 = vmatpush2.msra.mxu0 0.0
        %932 = vmatprep.subr.mxu0 0.0
        %933 = vmatpush2.msra.mxu0 0.0
        %934 = vmatprep.subr.mxu0 0.0
        %935 = vmatpush2.msra.mxu0 0.0
        %936 = vmatprep.subr.mxu0 0.0
        %937 = vmatpush2.msra.mxu0 0.0
        %938 = vmatprep.subr.mxu0 0.0
        %939 = vmatpush2.msra.mxu0 0.0
        %940 = vmatprep.subr.mxu0 0.0
        %941 = vmatpush2.msra.mxu0 0.0
        %942 = vmatprep.subr.mxu0 0.0
        %943 = vmatpush2.msra.mxu0 0.0
        %944 = vmatprep.subr.mxu0 0.0
        %945 = vmatpush2.msra.mxu0 0.0
        %946 = vmatprep.subr.mxu0 0.0
        %947 = vmatpush2.msra.mxu0 0.0
        %948 = vmatprep.mubr.f32.mxu0 0.0
        %949 = vmatmul.mubr.f32.gmra.mxu0 %v882
        %v950 = vpop.f32.mrf.mxu0
        %v951 = vadd.f32 0.0, %v950
        %v952 = vpop.f32.mrf.mxu0
        %953 = vdwg.mxu0
        %v954 = vlaneseq
        %v955 = vshrl.u32 %v954, 7
        %v956 = vsub.s32 0, %v955
        %v957 = vrot.slane %v951, %v956
        %v958 = vsub.f32 %v565, %v957
        %v959 = vsub.f32 %v566, %v957
        %v960 = vsub.f32 %v567, %v957
        %v961 = vsub.f32 %v568, %v957
        %v962 = vsub.f32 %v569, %v957
        %v963 = vsub.f32 %v570, %v957
        %v964 = vsub.f32 %v571, %v957
        %v965 = vsub.f32 %v572, %v957
        %v966 = vmul.f32 %v958, %v958
        %v967 = vmul.f32 %v959, %v959
        %v968 = vmul.f32 %v960, %v960
        %v969 = vmul.f32 %v961, %v961
        %v970 = vmul.f32 %v962, %v962
        %v971 = vmul.f32 %v963, %v963
        %v972 = vmul.f32 %v964, %v964
        %v973 = vmul.f32 %v965, %v965
        %v974 = vadd.f32 %v966, %v967
        %v975 = vadd.f32 %v974, %v968
        %v976 = vadd.f32 %v975, %v969
        %v977 = vadd.f32 %v976, %v970
        %v978 = vadd.f32 %v977, %v971
        %v979 = vadd.f32 %v978, %v972
        %v980 = vadd.f32 %v979, %v973
        %v981 = vrot.slane %v980, 4
        %v982 = vadd.f32 %v980, %v981
        %v983 = vrot.slane %v982, 2
        %v984 = vadd.f32 %v982, %v983
        %v985 = vrot.slane %v984, 1
        %v986 = vadd.f32 %v984, %v985
        %987 = vmatprep.subr.mxu0 0.0
        %988 = vmatpush1.msra.mxu0 %v791
        %989 = vmatprep.subr.mxu0 0.0
        %990 = vmatpush1.msra.mxu0 %v790
        %991 = vmatprep.subr.mxu0 0.0
        %992 = vmatpush1.msra.mxu0 %v789
        %993 = vmatprep.subr.mxu0 0.0
        %994 = vmatpush1.msra.mxu0 %v788
        %995 = vmatprep.subr.mxu0 0.0
        %996 = vmatpush1.msra.mxu0 %v787
        %997 = vmatprep.subr.mxu0 0.0
        %998 = vmatpush1.msra.mxu0 %v786
        %999 = vmatprep.subr.mxu0 0.0
        %1000 = vmatpush1.msra.mxu0 %v785
        %1001 = vmatprep.subr.mxu0 0.0
        %1002 = vmatpush1.msra.mxu0 %v784
        %1003 = vmatprep.subr.mxu0 0.0
        %1004 = vmatpush1.msra.mxu0 %v783
        %1005 = vmatprep.subr.mxu0 0.0
        %1006 = vmatpush1.msra.mxu0 %v782
        %1007 = vmatprep.subr.mxu0 0.0
        %1008 = vmatpush1.msra.mxu0 %v781
        %1009 = vmatprep.subr.mxu0 0.0
        %1010 = vmatpush1.msra.mxu0 %v780
        %1011 = vmatprep.subr.mxu0 0.0
        %1012 = vmatpush1.msra.mxu0 %v779
        %1013 = vmatprep.subr.mxu0 0.0
        %1014 = vmatpush1.msra.mxu0 %v778
        %1015 = vmatprep.subr.mxu0 0.0
        %1016 = vmatpush1.msra.mxu0 %v777
        %1017 = vmatprep.subr.mxu0 0.0
        %1018 = vmatpush1.msra.mxu0 %v776
        %1019 = vmatprep.subr.mxu0 0.0
        %1020 = vmatpush2.msra.mxu0 0.0
        %1021 = vmatprep.subr.mxu0 0.0
        %1022 = vmatpush2.msra.mxu0 0.0
        %1023 = vmatprep.subr.mxu0 0.0
        %1024 = vmatpush2.msra.mxu0 0.0
        %1025 = vmatprep.subr.mxu0 0.0
        %1026 = vmatpush2.msra.mxu0 0.0
        %1027 = vmatprep.subr.mxu0 0.0
        %1028 = vmatpush2.msra.mxu0 0.0
        %1029 = vmatprep.subr.mxu0 0.0
        %1030 = vmatpush2.msra.mxu0 0.0
        %1031 = vmatprep.subr.mxu0 0.0
        %1032 = vmatpush2.msra.mxu0 0.0
        %1033 = vmatprep.subr.mxu0 0.0
        %1034 = vmatpush2.msra.mxu0 0.0
        %1035 = vmatprep.subr.mxu0 0.0
        %1036 = vmatpush2.msra.mxu0 0.0
        %1037 = vmatprep.subr.mxu0 0.0
        %1038 = vmatpush2.msra.mxu0 0.0
        %1039 = vmatprep.subr.mxu0 0.0
        %1040 = vmatpush2.msra.mxu0 0.0
        %1041 = vmatprep.subr.mxu0 0.0
        %1042 = vmatpush2.msra.mxu0 0.0
        %1043 = vmatprep.subr.mxu0 0.0
        %1044 = vmatpush2.msra.mxu0 0.0
        %1045 = vmatprep.subr.mxu0 0.0
        %1046 = vmatpush2.msra.mxu0 0.0
        %1047 = vmatprep.subr.mxu0 0.0
        %1048 = vmatpush2.msra.mxu0 0.0
        %1049 = vmatprep.subr.mxu0 0.0
        %1050 = vmatpush2.msra.mxu0 0.0
        %1051 = vmatprep.mubr.f32.mxu0 0.0
        %1052 = vmatmul.mubr.f32.gmra.mxu0 %v986
        %v1053 = vpop.f32.mrf.mxu0
        %v1054 = vadd.f32 0.0, %v1053
        %v1055 = vpop.f32.mrf.mxu0
        %1056 = vdwg.mxu0
        %v1057 = vmul.f32 %v1054, 0.015625
        %v1058 = vadd.f32 %v1057, 1e-06
        %v1059 = vrsqrt.pop %v1058
        %v1061 = vsel %vm880, %v1059, 0
        %1063 = vmatprep.subr.mxu0 0.0
        %1064 = vmatpush1.msra.mxu0 0.0
        %1065 = vmatprep.subr.mxu0 0.0
        %1066 = vmatpush1.msra.mxu0 0.0
        %1067 = vmatprep.subr.mxu0 0.0
        %1068 = vmatpush1.msra.mxu0 0.0
        %1069 = vmatprep.subr.mxu0 0.0
        %1070 = vmatpush1.msra.mxu0 0.0
        %1071 = vmatprep.subr.mxu0 0.0
        %1072 = vmatpush1.msra.mxu0 0.0
        %1073 = vmatprep.subr.mxu0 0.0
        %1074 = vmatpush1.msra.mxu0 0.0
        %1075 = vmatprep.subr.mxu0 0.0
        %1076 = vmatpush1.msra.mxu0 0.0
        %1077 = vmatprep.subr.mxu0 0.0
        %1078 = vmatpush1.msra.mxu0 0.0
        %1079 = vmatprep.subr.mxu0 0.0
        %1080 = vmatpush1.msra.mxu0 0.0
        %1081 = vmatprep.subr.mxu0 0.0
        %1082 = vmatpush1.msra.mxu0 0.0
        %1083 = vmatprep.subr.mxu0 0.0
        %1084 = vmatpush1.msra.mxu0 0.0
        %1085 = vmatprep.subr.mxu0 0.0
        %1086 = vmatpush1.msra.mxu0 0.0
        %1087 = vmatprep.subr.mxu0 0.0
        %1088 = vmatpush1.msra.mxu0 %v795
        %1089 = vmatprep.subr.mxu0 0.0
        %1090 = vmatpush1.msra.mxu0 %v794
        %1091 = vmatprep.subr.mxu0 0.0
        %1092 = vmatpush1.msra.mxu0 %v793
        %1093 = vmatprep.subr.mxu0 0.0
        %1094 = vmatpush1.msra.mxu0 %v792
        %1095 = vmatprep.subr.mxu0 0.0
        %1096 = vmatpush2.msra.mxu0 0.0
        %1097 = vmatprep.subr.mxu0 0.0
        %1098 = vmatpush2.msra.mxu0 0.0
        %1099 = vmatprep.subr.mxu0 0.0
        %1100 = vmatpush2.msra.mxu0 0.0
        %1101 = vmatprep.subr.mxu0 0.0
        %1102 = vmatpush2.msra.mxu0 0.0
        %1103 = vmatprep.subr.mxu0 0.0
        %1104 = vmatpush2.msra.mxu0 0.0
        %1105 = vmatprep.subr.mxu0 0.0
        %1106 = vmatpush2.msra.mxu0 0.0
        %1107 = vmatprep.subr.mxu0 0.0
        %1108 = vmatpush2.msra.mxu0 0.0
        %1109 = vmatprep.subr.mxu0 0.0
        %1110 = vmatpush2.msra.mxu0 0.0
        %1111 = vmatprep.subr.mxu0 0.0
        %1112 = vmatpush2.msra.mxu0 0.0
        %1113 = vmatprep.subr.mxu0 0.0
        %1114 = vmatpush2.msra.mxu0 0.0
        %1115 = vmatprep.subr.mxu0 0.0
        %1116 = vmatpush2.msra.mxu0 0.0
        %1117 = vmatprep.subr.mxu0 0.0
        %1118 = vmatpush2.msra.mxu0 0.0
        %1119 = vmatprep.subr.mxu0 0.0
        %1120 = vmatpush2.msra.mxu0 0.0
        %1121 = vmatprep.subr.mxu0 0.0
        %1122 = vmatpush2.msra.mxu0 0.0
        %1123 = vmatprep.subr.mxu0 0.0
        %1124 = vmatpush2.msra.mxu0 0.0
        %1125 = vmatprep.subr.mxu0 0.0
        %1126 = vmatpush2.msra.mxu0 0.0
        %1127 = vmatprep.mubr.f32.mxu0 0.0
        %1128 = vmatmul.mubr.f32.gmra.mxu0 %v1061
        %v1129 = vpop.f32.mrf.mxu0
        %v1130 = vadd.f32 0.0, %v1129
        %v1131 = vpop.f32.mrf.mxu0
        %1132 = vdwg.mxu0
        %v1133 = vmul.f32 %v1130, %v774
        %v1134 = vlaneseq
        %v1135 = vshrl.u32 %v1134, 7
        %v1136 = vsub.s32 0, %v1135
        %v1137 = vrot.slane %v1133, %v1136
        %v1138 = vmul.f32 %v958, %v1137
        %v1139 = vmul.f32 %v959, %v1137
        %v1140 = vmul.f32 %v960, %v1137
        %v1141 = vmul.f32 %v961, %v1137
        %v1142 = vmul.f32 %v962, %v1137
        %v1143 = vmul.f32 %v963, %v1137
        %v1144 = vmul.f32 %v964, %v1137
        %v1145 = vmul.f32 %v965, %v1137
        %v1147 = vlaneseq
        %v1148 = vshrl.u32 %v1147, 7
        %v1149 = vsub.s32 0, %v1148
        %v1150 = vrot.slane %v775, %v1149
        %v1152 = vadd.f32 %v1138, %v1150
        %v1153 = vadd.f32 %v1139, %v1150
        %v1154 = vadd.f32 %v1140, %v1150
        %v1155 = vadd.f32 %v1141, %v1150
        %v1156 = vadd.f32 %v1142, %v1150
        %v1157 = vadd.f32 %v1143, %v1150
        %v1158 = vadd.f32 %v1144, %v1150
        %v1159 = vadd.f32 %v1145, %v1150
        %v1160 = vxor.u32 %v1152, 2147483648
        %v1161 = vxor.u32 %v1153, 2147483648
        %v1162 = vxor.u32 %v1154, 2147483648
        %v1163 = vxor.u32 %v1155, 2147483648
        %v1164 = vxor.u32 %v1156, 2147483648
        %v1165 = vxor.u32 %v1157, 2147483648
        %v1166 = vxor.u32 %v1158, 2147483648
        %v1167 = vxor.u32 %v1159, 2147483648
        %v1168 = vmul.f32 %v1160, 1.442695
        %v1169 = vpow.pop %v1168
        %v1170 = vmul.f32 %v1161, 1.442695
        %v1171 = vpow.pop %v1170
        %v1172 = vmul.f32 %v1162, 1.442695
        %v1173 = vpow.pop %v1172
        %v1174 = vmul.f32 %v1163, 1.442695
        %v1175 = vpow.pop %v1174
        %v1176 = vmul.f32 %v1164, 1.442695
        %v1177 = vpow.pop %v1176
        %v1178 = vmul.f32 %v1165, 1.442695
        %v1179 = vpow.pop %v1178
        %v1180 = vmul.f32 %v1166, 1.442695
        %v1181 = vpow.pop %v1180
        %v1182 = vmul.f32 %v1167, 1.442695
        %v1183 = vpow.pop %v1182
        %v1184 = vadd.f32 %v1169, 1.0
        %v1185 = vadd.f32 %v1171, 1.0
        %v1186 = vadd.f32 %v1173, 1.0
        %v1187 = vadd.f32 %v1175, 1.0
        %v1188 = vadd.f32 %v1177, 1.0
        %v1189 = vadd.f32 %v1179, 1.0
        %v1190 = vadd.f32 %v1181, 1.0
        %v1191 = vadd.f32 %v1183, 1.0
        %v1192 = vrcp.pop %v1184
        %v1193 = vmul.f32 1.0, %v1192
        %v1194 = vrcp.pop %v1185
        %v1195 = vmul.f32 1.0, %v1194
        %v1196 = vrcp.pop %v1186
        %v1197 = vmul.f32 1.0, %v1196
        %v1198 = vrcp.pop %v1187
        %v1199 = vmul.f32 1.0, %v1198
        %v1200 = vrcp.pop %v1188
        %v1201 = vmul.f32 1.0, %v1200
        %v1202 = vrcp.pop %v1189
        %v1203 = vmul.f32 1.0, %v1202
        %v1204 = vrcp.pop %v1190
        %v1205 = vmul.f32 1.0, %v1204
        %v1206 = vrcp.pop %v1191
        %v1207 = vmul.f32 1.0, %v1206
        %v1208 = vmul.f32 %v1152, %v1193
        %v1209 = vmul.f32 %v1153, %v1195
        %v1210 = vmul.f32 %v1154, %v1197
        %v1211 = vmul.f32 %v1155, %v1199
        %v1212 = vmul.f32 %v1156, %v1201
        %v1213 = vmul.f32 %v1157, %v1203
        %v1214 = vmul.f32 %v1158, %v1205
        %v1215 = vmul.f32 %v1159, %v1207
        %v1216 = vld [vmem:[%s7] sm:$0x1]
        %v1217 = vmul.f32 %v1215, %v694
        %v1218 = vmul.f32 %v1208, %v695
        %v1219 = vmul.f32 %v1209, %v696
        %v1220 = vmul.f32 %v1210, %v697
        %v1221 = vmul.f32 %v1211, %v698
        %v1222 = vmul.f32 %v1212, %v699
        %v1223 = vmul.f32 %v1213, %v700
        %v1224 = vmul.f32 %v1214, %v701
        %v1225 = vld [vmem:[#allocation2] sm:$0xf]
        %v1226 = vld [vmem:[#allocation2 + $0x4] sm:$0xf]
        %v1227 = vld [vmem:[#allocation2 + $0x8] sm:$0xf]
        %v1228 = vld [vmem:[#allocation2 + $0xc] sm:$0xf]
        %v1229 = vld [vmem:[#allocation2 + $0x10] sm:$0xf]
        %v1230 = vld [vmem:[#allocation2 + $0x14] sm:$0xf]
        %v1231 = vld [vmem:[#allocation2 + $0x18] sm:$0xf]
        %v1232 = vld [vmem:[#allocation2 + $0x1c] sm:$0xf]
        %v1233 = vld [vmem:[#allocation2 + $0x20] sm:$0xf]
        %v1234 = vld [vmem:[#allocation2 + $0x24] sm:$0xf]
        %v1235 = vld [vmem:[#allocation2 + $0x28] sm:$0xf]
        %v1236 = vld [vmem:[#allocation2 + $0x2c] sm:$0xf]
        %v1237 = vld [vmem:[#allocation2 + $0x30] sm:$0xf]
        %v1238 = vld [vmem:[#allocation2 + $0x34] sm:$0xf]
        %v1239 = vld [vmem:[#allocation2 + $0x38] sm:$0xf]
        %v1240 = vld [vmem:[#allocation2 + $0x3c] sm:$0xf]
        %v1241 = vld [vmem:[#allocation2 + $0x40] sm:$0xf]
        %v1242 = vld [vmem:[#allocation2 + $0x44] sm:$0xf]
        %v1243 = vld [vmem:[#allocation2 + $0x48] sm:$0xf]
        %v1244 = vld [vmem:[#allocation2 + $0x4c] sm:$0xf]
        %v1245 = vld [vmem:[#allocation2 + $0x50] sm:$0xf]
        %v1246 = vld [vmem:[#allocation2 + $0x54] sm:$0xf]
        %v1247 = vld [vmem:[#allocation2 + $0x58] sm:$0xf]
        %v1248 = vld [vmem:[#allocation2 + $0x5c] sm:$0xf]
        %v1249 = vld [vmem:[#allocation2 + $0x60] sm:$0xf]
        %v1250 = vld [vmem:[#allocation2 + $0x64] sm:$0xf]
        %v1251 = vld [vmem:[#allocation2 + $0x68] sm:$0xf]
        %v1252 = vld [vmem:[#allocation2 + $0x6c] sm:$0xf]
        %v1253 = vld [vmem:[#allocation2 + $0x70] sm:$0xf]
        %v1254 = vld [vmem:[#allocation2 + $0x74] sm:$0xf]
        %v1255 = vld [vmem:[#allocation2 + $0x78] sm:$0xf]
        %v1256 = vld [vmem:[#allocation2 + $0x7c] sm:$0xf]
        %v1257 = vld [vmem:[#allocation2 + $0x80] sm:$0xf]
        %v1258 = vld [vmem:[#allocation2 + $0x84] sm:$0xf]
        %v1259 = vld [vmem:[#allocation2 + $0x88] sm:$0xf]
        %v1260 = vld [vmem:[#allocation2 + $0x8c] sm:$0xf]
        %v1261 = vld [vmem:[#allocation2 + $0x90] sm:$0xf]
        %v1262 = vld [vmem:[#allocation2 + $0x94] sm:$0xf]
        %v1263 = vld [vmem:[#allocation2 + $0x98] sm:$0xf]
        %v1264 = vld [vmem:[#allocation2 + $0x9c] sm:$0xf]
        %v1265 = vld [vmem:[#allocation2 + $0xa0] sm:$0xf]
        %v1266 = vld [vmem:[#allocation2 + $0xa4] sm:$0xf]
        %v1267 = vld [vmem:[#allocation2 + $0xa8] sm:$0xf]
        %v1268 = vld [vmem:[#allocation2 + $0xac] sm:$0xf]
        %v1269 = vld [vmem:[#allocation2 + $0xb0] sm:$0xf]
        %v1270 = vld [vmem:[#allocation2 + $0xb4] sm:$0xf]
        %v1271 = vld [vmem:[#allocation2 + $0xb8] sm:$0xf]
        %v1272 = vld [vmem:[#allocation2 + $0xbc] sm:$0xf]
        %v1273 = vrot.slane %v1217, 7
        %v1274 = vrot.slane %v1218, 7
        %v1275 = vrot.slane %v1219, 7
        %v1276 = vrot.slane %v1220, 7
        %v1277 = vrot.slane %v1221, 7
        %v1278 = vrot.slane %v1222, 7
        %v1279 = vrot.slane %v1223, 7
        %v1280 = vrot.slane %v1224, 7
        %vm1281 = vcmp.lt.s32.totalorder %v574, 1
        %v1282 = vsel %vm1281, %v1279, %v1280
        %v1283 = vsel %vm1281, %v1278, %v1279
        %v1284 = vsel %vm1281, %v1277, %v1278
        %v1285 = vsel %vm1281, %v1276, %v1277
        %v1286 = vsel %vm1281, %v1275, %v1276
        %v1287 = vsel %vm1281, %v1274, %v1275
        %v1288 = vsel %vm1281, %v1273, %v1274
        %v1289 = vsel %vm1281, %v1280, %v1273
        %v1290 = vmul.f32 %v1289, %v742
        %v1291 = vmul.f32 %v1288, %v743
        %v1292 = vmul.f32 %v1287, %v744
        %v1293 = vmul.f32 %v1286, %v745
        %v1294 = vmul.f32 %v1285, %v746
        %v1295 = vmul.f32 %v1284, %v747
        %v1296 = vmul.f32 %v1283, %v748
        %v1297 = vmul.f32 %v1282, %v749
        %v1298 = vpack.c.bf16 %v1291, %v1290
        %v1299 = vpack.c.bf16 %v1293, %v1292
        %v1300 = vpack.c.bf16 %v1295, %v1294
        %v1301 = vpack.c.bf16 %v1297, %v1296
        %v1302 = vpack.c.bf16 %v1218, %v1217
        %v1303 = vpack.c.bf16 %v1220, %v1219
        %v1304 = vpack.c.bf16 %v1222, %v1221
        %v1305 = vpack.c.bf16 %v1224, %v1223
        %v1306 = vrot.slane %v1217, 1
        %v1307 = vrot.slane %v1218, 1
        %v1308 = vrot.slane %v1219, 1
        %v1309 = vrot.slane %v1220, 1
        %v1310 = vrot.slane %v1221, 1
        %v1311 = vrot.slane %v1222, 1
        %v1312 = vrot.slane %v1223, 1
        %v1313 = vrot.slane %v1224, 1
        %vm1314 = vcmp.lt.s32.totalorder %v574, 7
        %v1315 = vsel %vm1314, %v1312, %v1313
        %v1316 = vsel %vm1314, %v1311, %v1312
        %v1317 = vsel %vm1314, %v1310, %v1311
        %v1318 = vsel %vm1314, %v1309, %v1310
        %v1319 = vsel %vm1314, %v1308, %v1309
        %v1320 = vsel %vm1314, %v1307, %v1308
        %v1321 = vsel %vm1314, %v1306, %v1307
        %v1322 = vsel %vm1314, %v1313, %v1306
        %v1323 = vmul.f32 %v1321, %v766
        %v1324 = vmul.f32 %v1320, %v767
        %v1325 = vmul.f32 %v1319, %v768
        %v1326 = vmul.f32 %v1318, %v769
        %v1327 = vmul.f32 %v1317, %v770
        %v1328 = vmul.f32 %v1316, %v771
        %v1329 = vmul.f32 %v1315, %v772
        %v1330 = vmul.f32 %v1322, %v773
        %v1331 = vpack.c.bf16 %v1324, %v1323
        %v1332 = vpack.c.bf16 %v1326, %v1325
        %v1333 = vpack.c.bf16 %v1328, %v1327
        %v1334 = vpack.c.bf16 %v1330, %v1329
        %s1335 = scalar_lea.vmem [#allocation2], 192
        %v1336 = vld [vmem:[%s1335] sm:$0xf]
        %v1337 = vld [vmem:[%s1335 + $0x4] sm:$0xf]
        %v1338 = vld [vmem:[%s1335 + $0x8] sm:$0xf]
        %v1339 = vld [vmem:[%s1335 + $0xc] sm:$0xf]
        %v1340 = vld [vmem:[%s1335 + $0x10] sm:$0xf]
        %v1341 = vld [vmem:[%s1335 + $0x14] sm:$0xf]
        %v1342 = vld [vmem:[%s1335 + $0x18] sm:$0xf]
        %v1343 = vld [vmem:[%s1335 + $0x1c] sm:$0xf]
        %v1344 = vld [vmem:[%s1335 + $0x20] sm:$0xf]
        %v1345 = vld [vmem:[%s1335 + $0x24] sm:$0xf]
        %v1346 = vld [vmem:[%s1335 + $0x28] sm:$0xf]
        %v1347 = vld [vmem:[%s1335 + $0x2c] sm:$0xf]
        %v1348 = vld [vmem:[%s1335 + $0x30] sm:$0xf]
        %v1349 = vld [vmem:[%s1335 + $0x34] sm:$0xf]
        %v1350 = vld [vmem:[%s1335 + $0x38] sm:$0xf]
        %v1351 = vld [vmem:[%s1335 + $0x3c] sm:$0xf]
        %v1352 = vld [vmem:[%s1335 + $0x40] sm:$0xf]
        %v1353 = vld [vmem:[%s1335 + $0x44] sm:$0xf]
        %v1354 = vld [vmem:[%s1335 + $0x48] sm:$0xf]
        %v1355 = vld [vmem:[%s1335 + $0x4c] sm:$0xf]
        %v1356 = vld [vmem:[%s1335 + $0x50] sm:$0xf]
        %v1357 = vld [vmem:[%s1335 + $0x54] sm:$0xf]
        %v1358 = vld [vmem:[%s1335 + $0x58] sm:$0xf]
        %v1359 = vld [vmem:[%s1335 + $0x5c] sm:$0xf]
        %v1360 = vld [vmem:[%s1335 + $0x60] sm:$0xf]
        %v1361 = vld [vmem:[%s1335 + $0x64] sm:$0xf]
        %v1362 = vld [vmem:[%s1335 + $0x68] sm:$0xf]
        %v1363 = vld [vmem:[%s1335 + $0x6c] sm:$0xf]
        %v1364 = vld [vmem:[%s1335 + $0x70] sm:$0xf]
        %v1365 = vld [vmem:[%s1335 + $0x74] sm:$0xf]
        %v1366 = vld [vmem:[%s1335 + $0x78] sm:$0xf]
        %v1367 = vld [vmem:[%s1335 + $0x7c] sm:$0xf]
        %v1368 = vld [vmem:[%s1335 + $0x80] sm:$0xf]
        %v1369 = vld [vmem:[%s1335 + $0x84] sm:$0xf]
        %v1370 = vld [vmem:[%s1335 + $0x88] sm:$0xf]
        %v1371 = vld [vmem:[%s1335 + $0x8c] sm:$0xf]
        %v1372 = vld [vmem:[%s1335 + $0x90] sm:$0xf]
        %v1373 = vld [vmem:[%s1335 + $0x94] sm:$0xf]
        %v1374 = vld [vmem:[%s1335 + $0x98] sm:$0xf]
        %v1375 = vld [vmem:[%s1335 + $0x9c] sm:$0xf]
        %v1376 = vld [vmem:[%s1335 + $0xa0] sm:$0xf]
        %v1377 = vld [vmem:[%s1335 + $0xa4] sm:$0xf]
        %v1378 = vld [vmem:[%s1335 + $0xa8] sm:$0xf]
        %v1379 = vld [vmem:[%s1335 + $0xac] sm:$0xf]
        %v1380 = vld [vmem:[%s1335 + $0xb0] sm:$0xf]
        %v1381 = vld [vmem:[%s1335 + $0xb4] sm:$0xf]
        %v1382 = vld [vmem:[%s1335 + $0xb8] sm:$0xf]
        %v1383 = vld [vmem:[%s1335 + $0xbc] sm:$0xf]
        %v1384 = vrot.slane %v1208, 7
        %v1385 = vrot.slane %v1209, 7
        %v1386 = vrot.slane %v1210, 7
        %v1387 = vrot.slane %v1211, 7
        %v1388 = vrot.slane %v1212, 7
        %v1389 = vrot.slane %v1213, 7
        %v1390 = vrot.slane %v1214, 7
        %v1391 = vrot.slane %v1215, 7
        %v1392 = vsel %vm1281, %v1390, %v1391
        %v1393 = vsel %vm1281, %v1389, %v1390
        %v1394 = vsel %vm1281, %v1388, %v1389
        %v1395 = vsel %vm1281, %v1387, %v1388
        %v1396 = vsel %vm1281, %v1386, %v1387
        %v1397 = vsel %vm1281, %v1385, %v1386
        %v1398 = vsel %vm1281, %v1384, %v1385
        %v1399 = vsel %vm1281, %v1391, %v1384
        %v1400 = vmul.f32 %v1399, %v742
        %v1401 = vmul.f32 %v1398, %v743
        %v1402 = vmul.f32 %v1397, %v744
        %v1403 = vmul.f32 %v1396, %v745
        %v1404 = vmul.f32 %v1395, %v746
        %v1405 = vmul.f32 %v1394, %v747
        %v1406 = vmul.f32 %v1393, %v748
        %v1407 = vmul.f32 %v1392, %v749
        %v1408 = vpack.c.bf16 %v1401, %v1400
        %v1409 = vpack.c.bf16 %v1403, %v1402
        %v1410 = vpack.c.bf16 %v1405, %v1404
        %v1411 = vpack.c.bf16 %v1407, %v1406
        %v1412 = vpack.c.bf16 %v1209, %v1208
        %v1413 = vpack.c.bf16 %v1211, %v1210
        %v1414 = vpack.c.bf16 %v1213, %v1212
        %v1415 = vpack.c.bf16 %v1215, %v1214
        %v1416 = vrot.slane %v1208, 1
        %v1417 = vrot.slane %v1209, 1
        %v1418 = vrot.slane %v1210, 1
        %v1419 = vrot.slane %v1211, 1
        %v1420 = vrot.slane %v1212, 1
        %v1421 = vrot.slane %v1213, 1
        %v1422 = vrot.slane %v1214, 1
        %v1423 = vrot.slane %v1215, 1
        %v1424 = vsel %vm1314, %v1422, %v1423
        %v1425 = vsel %vm1314, %v1421, %v1422
        %v1426 = vsel %vm1314, %v1420, %v1421
        %v1427 = vsel %vm1314, %v1419, %v1420
        %v1428 = vsel %vm1314, %v1418, %v1419
        %v1429 = vsel %vm1314, %v1417, %v1418
        %v1430 = vsel %vm1314, %v1416, %v1417
        %v1431 = vsel %vm1314, %v1423, %v1416
        %v1432 = vmul.f32 %v1430, %v766
        %v1433 = vmul.f32 %v1429, %v767
        %v1434 = vmul.f32 %v1428, %v768
        %v1435 = vmul.f32 %v1427, %v769
        %v1436 = vmul.f32 %v1426, %v770
        %v1437 = vmul.f32 %v1425, %v771
        %v1438 = vmul.f32 %v1424, %v772
        %v1439 = vmul.f32 %v1431, %v773
        %v1440 = vpack.c.bf16 %v1433, %v1432
        %v1441 = vpack.c.bf16 %v1435, %v1434
        %v1442 = vpack.c.bf16 %v1437, %v1436
        %v1443 = vpack.c.bf16 %v1439, %v1438
        %v1492 = vunpack.c.l.b16 %v1336
        %v1493 = vunpack.c.l.b16 %v1337
        %v1494 = vunpack.c.l.b16 %v1338
        %v1495 = vunpack.c.l.b16 %v1339
        %v1496 = vunpack.c.l.b16 %v1340
        %v1497 = vunpack.c.l.b16 %v1341
        %v1498 = vunpack.c.l.b16 %v1342
        %v1499 = vunpack.c.l.b16 %v1343
        %v1500 = vunpack.c.l.b16 %v1344
        %v1501 = vunpack.c.l.b16 %v1345
        %v1502 = vunpack.c.l.b16 %v1346
        %v1503 = vunpack.c.l.b16 %v1347
        %v1504 = vunpack.c.l.b16 %v1348
        %v1505 = vunpack.c.l.b16 %v1349
        %v1506 = vunpack.c.l.b16 %v1350
        %v1507 = vunpack.c.l.b16 %v1351
        %v1508 = vunpack.c.l.b16 %v1352
        %v1509 = vunpack.c.l.b16 %v1353
        %v1510 = vunpack.c.l.b16 %v1354
        %v1511 = vunpack.c.l.b16 %v1355
        %v1512 = vunpack.c.l.b16 %v1356
        %v1513 = vunpack.c.l.b16 %v1357
        %v1514 = vunpack.c.l.b16 %v1358
        %v1515 = vunpack.c.l.b16 %v1359
        %v1516 = vunpack.c.l.b16 %v1360
        %v1517 = vunpack.c.l.b16 %v1361
        %v1518 = vunpack.c.l.b16 %v1362
        %v1519 = vunpack.c.l.b16 %v1363
        %v1520 = vunpack.c.l.b16 %v1364
        %v1521 = vunpack.c.l.b16 %v1365
        %v1522 = vunpack.c.l.b16 %v1366
        %v1523 = vunpack.c.l.b16 %v1367
        %v1524 = vunpack.c.l.b16 %v1368
        %v1525 = vunpack.c.l.b16 %v1369
        %v1526 = vunpack.c.l.b16 %v1370
        %v1527 = vunpack.c.l.b16 %v1371
        %v1528 = vunpack.c.l.b16 %v1372
        %v1529 = vunpack.c.l.b16 %v1373
        %v1530 = vunpack.c.l.b16 %v1374
        %v1531 = vunpack.c.l.b16 %v1375
        %v1532 = vunpack.c.l.b16 %v1376
        %v1533 = vunpack.c.l.b16 %v1377
        %v1534 = vunpack.c.l.b16 %v1378
        %v1535 = vunpack.c.l.b16 %v1379
        %v1536 = vunpack.c.l.b16 %v1380
        %v1537 = vunpack.c.l.b16 %v1381
        %v1538 = vunpack.c.l.b16 %v1382
        %v1539 = vunpack.c.l.b16 %v1383
        %v1540 = vpack.c.b16 %v1493, %v1492
        %v1541 = vpack.c.b16 %v1495, %v1494
        %v1542 = vpack.c.b16 %v1497, %v1496
        %v1543 = vpack.c.b16 %v1499, %v1498
        %v1544 = vpack.c.b16 %v1501, %v1500
        %v1545 = vpack.c.b16 %v1503, %v1502
        %v1546 = vpack.c.b16 %v1505, %v1504
        %v1547 = vpack.c.b16 %v1507, %v1506
        %v1548 = vpack.c.b16 %v1509, %v1508
        %v1549 = vpack.c.b16 %v1511, %v1510
        %v1550 = vpack.c.b16 %v1513, %v1512
        %v1551 = vpack.c.b16 %v1515, %v1514
        %v1552 = vpack.c.b16 %v1517, %v1516
        %v1553 = vpack.c.b16 %v1519, %v1518
        %v1554 = vpack.c.b16 %v1521, %v1520
        %v1555 = vpack.c.b16 %v1523, %v1522
        %v1556 = vpack.c.b16 %v1525, %v1524
        %v1557 = vpack.c.b16 %v1527, %v1526
        %v1558 = vpack.c.b16 %v1529, %v1528
        %v1559 = vpack.c.b16 %v1531, %v1530
        %v1560 = vpack.c.b16 %v1533, %v1532
        %v1561 = vpack.c.b16 %v1535, %v1534
        %v1562 = vpack.c.b16 %v1537, %v1536
        %v1563 = vpack.c.b16 %v1539, %v1538
        %1588 = vmatprep.subr.bf16.mxu0 0
        %1589 = vmatpush1.bf16.msra.mxu0 %v1547
        %1590 = vmatprep.subr.bf16.mxu0 0
        %1591 = vmatpush1.bf16.msra.mxu0 %v1546
        %1592 = vmatprep.subr.bf16.mxu0 0
        %1593 = vmatpush1.bf16.msra.mxu0 %v1545
        %1594 = vmatprep.subr.bf16.mxu0 0
        %1595 = vmatpush1.bf16.msra.mxu0 %v1544
        %1596 = vmatprep.subr.bf16.mxu0 0
        %1597 = vmatpush1.bf16.msra.mxu0 %v1543
        %1598 = vmatprep.subr.bf16.mxu0 0
        %1599 = vmatpush1.bf16.msra.mxu0 %v1542
        %1600 = vmatprep.subr.bf16.mxu0 0
        %1601 = vmatpush1.bf16.msra.mxu0 %v1541
        %1602 = vmatprep.subr.bf16.mxu0 0
        %1603 = vmatpush1.bf16.msra.mxu0 %v1540
        %1604 = vmatprep.subr.bf16.mxu0 0
        %1605 = vmatpush2.bf16.msra.mxu0 %v1555
        %1606 = vmatprep.subr.bf16.mxu0 0
        %1607 = vmatpush2.bf16.msra.mxu0 %v1554
        %1608 = vmatprep.subr.bf16.mxu0 0
        %1609 = vmatpush2.bf16.msra.mxu0 %v1553
        %1610 = vmatprep.subr.bf16.mxu0 0
        %1611 = vmatpush2.bf16.msra.mxu0 %v1552
        %1612 = vmatprep.subr.bf16.mxu0 0
        %1613 = vmatpush2.bf16.msra.mxu0 %v1551
        %1614 = vmatprep.subr.bf16.mxu0 0
        %1615 = vmatpush2.bf16.msra.mxu0 %v1550
        %1616 = vmatprep.subr.bf16.mxu0 0
        %1617 = vmatpush2.bf16.msra.mxu0 %v1549
        %1618 = vmatprep.subr.bf16.mxu0 0
        %1619 = vmatpush2.bf16.msra.mxu0 %v1548
        %1620 = vmatprep.mubr.bf16.mxu0 %v1412
        %1621 = vmatmul.mubr.bf16.gmra.mxu0 %v1408
        %v1622 = vpop.f32.mrf.mxu0
        %v1623 = vadd.f32 0.0, %v1622
        %v1624 = vpop.f32.mrf.mxu0
        %v1625 = vpop.f32.mrf.mxu0
        %v1626 = vadd.f32 0.0, %v1625
        %v1627 = vpop.f32.mrf.mxu0
        %1628 = vmatprep.mubr.bf16.mxu0 %v1413
        %1629 = vmatmul.mubr.bf16.gmra.mxu0 %v1409
        %v1630 = vpop.f32.mrf.mxu0
        %v1631 = vadd.f32 0.0, %v1630
        %v1632 = vpop.f32.mrf.mxu0
        %v1633 = vpop.f32.mrf.mxu0
        %v1634 = vadd.f32 0.0, %v1633
        %v1635 = vpop.f32.mrf.mxu0
        %1636 = vmatprep.mubr.bf16.mxu0 %v1414
        %1637 = vmatmul.mubr.bf16.gmra.mxu0 %v1410
        %v1638 = vpop.f32.mrf.mxu0
        %v1639 = vadd.f32 0.0, %v1638
        %v1640 = vpop.f32.mrf.mxu0
        %v1641 = vpop.f32.mrf.mxu0
        %v1642 = vadd.f32 0.0, %v1641
        %v1643 = vpop.f32.mrf.mxu0
        %1644 = vmatprep.mubr.bf16.mxu0 %v1415
        %1645 = vmatmul.mubr.bf16.gmra.mxu0 %v1411
        %v1646 = vpop.f32.mrf.mxu0
        %v1647 = vadd.f32 0.0, %v1646
        %v1648 = vpop.f32.mrf.mxu0
        %v1649 = vpop.f32.mrf.mxu0
        %v1650 = vadd.f32 0.0, %v1649
        %v1651 = vpop.f32.mrf.mxu0
        %1652 = vdwg.mxu0
        %1653 = vmatprep.subr.bf16.mxu0 0
        %1654 = vmatpush1.bf16.msra.mxu0 %v1563
        %1655 = vmatprep.subr.bf16.mxu0 0
        %1656 = vmatpush1.bf16.msra.mxu0 %v1562
        %1657 = vmatprep.subr.bf16.mxu0 0
        %1658 = vmatpush1.bf16.msra.mxu0 %v1561
        %1659 = vmatprep.subr.bf16.mxu0 0
        %1660 = vmatpush1.bf16.msra.mxu0 %v1560
        %1661 = vmatprep.subr.bf16.mxu0 0
        %1662 = vmatpush1.bf16.msra.mxu0 %v1559
        %1663 = vmatprep.subr.bf16.mxu0 0
        %1664 = vmatpush1.bf16.msra.mxu0 %v1558
        %1665 = vmatprep.subr.bf16.mxu0 0
        %1666 = vmatpush1.bf16.msra.mxu0 %v1557
        %1667 = vmatprep.subr.bf16.mxu0 0
        %1668 = vmatpush1.bf16.msra.mxu0 %v1556
        %1669 = vmatprep.subr.bf16.mxu0 0
        %1670 = vmatpush2.bf16.msra.mxu0 0
        %1671 = vmatprep.subr.bf16.mxu0 0
        %1672 = vmatpush2.bf16.msra.mxu0 0
        %1673 = vmatprep.subr.bf16.mxu0 0
        %1674 = vmatpush2.bf16.msra.mxu0 0
        %1675 = vmatprep.subr.bf16.mxu0 0
        %1676 = vmatpush2.bf16.msra.mxu0 0
        %1677 = vmatprep.subr.bf16.mxu0 0
        %1678 = vmatpush2.bf16.msra.mxu0 0
        %1679 = vmatprep.subr.bf16.mxu0 0
        %1680 = vmatpush2.bf16.msra.mxu0 0
        %1681 = vmatprep.subr.bf16.mxu0 0
        %1682 = vmatpush2.bf16.msra.mxu0 0
        %1683 = vmatprep.subr.bf16.mxu0 0
        %1684 = vmatpush2.bf16.msra.mxu0 0
        %1685 = vmatprep.mubr.bf16.mxu0 0
        %1686 = vmatmul.mubr.bf16.gmra.mxu0 %v1440
        %v1687 = vpop.f32.mrf.mxu0
        %v1688 = vadd.f32 %v1623, %v1687
        %v1689 = vpop.f32.mrf.mxu0
        %v1690 = vpop.f32.mrf.mxu0
        %v1691 = vadd.f32 %v1626, %v1690
        %v1692 = vpop.f32.mrf.mxu0
        %1693 = vmatprep.mubr.bf16.mxu0 0
        %1694 = vmatmul.mubr.bf16.gmra.mxu0 %v1441
        %v1695 = vpop.f32.mrf.mxu0
        %v1696 = vadd.f32 %v1631, %v1695
        %v1697 = vpop.f32.mrf.mxu0
        %v1698 = vpop.f32.mrf.mxu0
        %v1699 = vadd.f32 %v1634, %v1698
        %v1700 = vpop.f32.mrf.mxu0
        %1701 = vmatprep.mubr.bf16.mxu0 0
        %1702 = vmatmul.mubr.bf16.gmra.mxu0 %v1442
        %v1703 = vpop.f32.mrf.mxu0
        %v1704 = vadd.f32 %v1639, %v1703
        %v1705 = vpop.f32.mrf.mxu0
        %v1706 = vpop.f32.mrf.mxu0
        %v1707 = vadd.f32 %v1642, %v1706
        %v1708 = vpop.f32.mrf.mxu0
        %1709 = vmatprep.mubr.bf16.mxu0 0
        %1710 = vmatmul.mubr.bf16.gmra.mxu0 %v1443
        %v1711 = vpop.f32.mrf.mxu0
        %v1712 = vadd.f32 %v1647, %v1711
        %v1713 = vpop.f32.mrf.mxu0
        %v1714 = vpop.f32.mrf.mxu0
        %v1715 = vadd.f32 %v1650, %v1714
        %v1716 = vpop.f32.mrf.mxu0
        %1717 = vdwg.mxu0
        %v1766 = vunpack.c.l.b16 %v1225
        %v1767 = vunpack.c.l.b16 %v1226
        %v1768 = vunpack.c.l.b16 %v1227
        %v1769 = vunpack.c.l.b16 %v1228
        %v1770 = vunpack.c.l.b16 %v1229
        %v1771 = vunpack.c.l.b16 %v1230
        %v1772 = vunpack.c.l.b16 %v1231
        %v1773 = vunpack.c.l.b16 %v1232
        %v1774 = vunpack.c.l.b16 %v1233
        %v1775 = vunpack.c.l.b16 %v1234
        %v1776 = vunpack.c.l.b16 %v1235
        %v1777 = vunpack.c.l.b16 %v1236
        %v1778 = vunpack.c.l.b16 %v1237
        %v1779 = vunpack.c.l.b16 %v1238
        %v1780 = vunpack.c.l.b16 %v1239
        %v1781 = vunpack.c.l.b16 %v1240
        %v1782 = vunpack.c.l.b16 %v1241
        %v1783 = vunpack.c.l.b16 %v1242
        %v1784 = vunpack.c.l.b16 %v1243
        %v1785 = vunpack.c.l.b16 %v1244
        %v1786 = vunpack.c.l.b16 %v1245
        %v1787 = vunpack.c.l.b16 %v1246
        %v1788 = vunpack.c.l.b16 %v1247
        %v1789 = vunpack.c.l.b16 %v1248
        %v1790 = vunpack.c.l.b16 %v1249
        %v1791 = vunpack.c.l.b16 %v1250
        %v1792 = vunpack.c.l.b16 %v1251
        %v1793 = vunpack.c.l.b16 %v1252
        %v1794 = vunpack.c.l.b16 %v1253
        %v1795 = vunpack.c.l.b16 %v1254
        %v1796 = vunpack.c.l.b16 %v1255
        %v1797 = vunpack.c.l.b16 %v1256
        %v1798 = vunpack.c.l.b16 %v1257
        %v1799 = vunpack.c.l.b16 %v1258
        %v1800 = vunpack.c.l.b16 %v1259
        %v1801 = vunpack.c.l.b16 %v1260
        %v1802 = vunpack.c.l.b16 %v1261
        %v1803 = vunpack.c.l.b16 %v1262
        %v1804 = vunpack.c.l.b16 %v1263
        %v1805 = vunpack.c.l.b16 %v1264
        %v1806 = vunpack.c.l.b16 %v1265
        %v1807 = vunpack.c.l.b16 %v1266
        %v1808 = vunpack.c.l.b16 %v1267
        %v1809 = vunpack.c.l.b16 %v1268
        %v1810 = vunpack.c.l.b16 %v1269
        %v1811 = vunpack.c.l.b16 %v1270
        %v1812 = vunpack.c.l.b16 %v1271
        %v1813 = vunpack.c.l.b16 %v1272
        %v1814 = vpack.c.b16 %v1767, %v1766
        %v1815 = vpack.c.b16 %v1769, %v1768
        %v1816 = vpack.c.b16 %v1771, %v1770
        %v1817 = vpack.c.b16 %v1773, %v1772
        %v1818 = vpack.c.b16 %v1775, %v1774
        %v1819 = vpack.c.b16 %v1777, %v1776
        %v1820 = vpack.c.b16 %v1779, %v1778
        %v1821 = vpack.c.b16 %v1781, %v1780
        %v1822 = vpack.c.b16 %v1783, %v1782
        %v1823 = vpack.c.b16 %v1785, %v1784
        %v1824 = vpack.c.b16 %v1787, %v1786
        %v1825 = vpack.c.b16 %v1789, %v1788
        %v1826 = vpack.c.b16 %v1791, %v1790
        %v1827 = vpack.c.b16 %v1793, %v1792
        %v1828 = vpack.c.b16 %v1795, %v1794
        %v1829 = vpack.c.b16 %v1797, %v1796
        %v1830 = vpack.c.b16 %v1799, %v1798
        %v1831 = vpack.c.b16 %v1801, %v1800
        %v1832 = vpack.c.b16 %v1803, %v1802
        %v1833 = vpack.c.b16 %v1805, %v1804
        %v1834 = vpack.c.b16 %v1807, %v1806
        %v1835 = vpack.c.b16 %v1809, %v1808
        %v1836 = vpack.c.b16 %v1811, %v1810
        %v1837 = vpack.c.b16 %v1813, %v1812
        %1862 = vmatprep.subr.bf16.mxu0 0
        %1863 = vmatpush1.bf16.msra.mxu0 %v1821
        %1864 = vmatprep.subr.bf16.mxu0 0
        %1865 = vmatpush1.bf16.msra.mxu0 %v1820
        %1866 = vmatprep.subr.bf16.mxu0 0
        %1867 = vmatpush1.bf16.msra.mxu0 %v1819
        %1868 = vmatprep.subr.bf16.mxu0 0
        %1869 = vmatpush1.bf16.msra.mxu0 %v1818
        %1870 = vmatprep.subr.bf16.mxu0 0
        %1871 = vmatpush1.bf16.msra.mxu0 %v1817
        %1872 = vmatprep.subr.bf16.mxu0 0
        %1873 = vmatpush1.bf16.msra.mxu0 %v1816
        %1874 = vmatprep.subr.bf16.mxu0 0
        %1875 = vmatpush1.bf16.msra.mxu0 %v1815
        %1876 = vmatprep.subr.bf16.mxu0 0
        %1877 = vmatpush1.bf16.msra.mxu0 %v1814
        %1878 = vmatprep.subr.bf16.mxu0 0
        %1879 = vmatpush2.bf16.msra.mxu0 %v1829
        %1880 = vmatprep.subr.bf16.mxu0 0
        %1881 = vmatpush2.bf16.msra.mxu0 %v1828
        %1882 = vmatprep.subr.bf16.mxu0 0
        %1883 = vmatpush2.bf16.msra.mxu0 %v1827
        %1884 = vmatprep.subr.bf16.mxu0 0
        %1885 = vmatpush2.bf16.msra.mxu0 %v1826
        %1886 = vmatprep.subr.bf16.mxu0 0
        %1887 = vmatpush2.bf16.msra.mxu0 %v1825
        %1888 = vmatprep.subr.bf16.mxu0 0
        %1889 = vmatpush2.bf16.msra.mxu0 %v1824
        %1890 = vmatprep.subr.bf16.mxu0 0
        %1891 = vmatpush2.bf16.msra.mxu0 %v1823
        %1892 = vmatprep.subr.bf16.mxu0 0
        %1893 = vmatpush2.bf16.msra.mxu0 %v1822
        %1894 = vmatprep.mubr.bf16.mxu0 %v1302
        %1895 = vmatmul.mubr.bf16.gmra.mxu0 %v1298
        %v1896 = vpop.f32.mrf.mxu0
        %v1897 = vadd.f32 %v1688, %v1896
        %v1898 = vpop.f32.mrf.mxu0
        %v1899 = vpop.f32.mrf.mxu0
        %v1900 = vadd.f32 %v1691, %v1899
        %v1901 = vpop.f32.mrf.mxu0
        %1902 = vmatprep.mubr.bf16.mxu0 %v1303
        %1903 = vmatmul.mubr.bf16.gmra.mxu0 %v1299
        %v1904 = vpop.f32.mrf.mxu0
        %v1905 = vadd.f32 %v1696, %v1904
        %v1906 = vpop.f32.mrf.mxu0
        %v1907 = vpop.f32.mrf.mxu0
        %v1908 = vadd.f32 %v1699, %v1907
        %v1909 = vpop.f32.mrf.mxu0
        %1910 = vmatprep.mubr.bf16.mxu0 %v1304
        %1911 = vmatmul.mubr.bf16.gmra.mxu0 %v1300
        %v1912 = vpop.f32.mrf.mxu0
        %v1913 = vadd.f32 %v1704, %v1912
        %v1914 = vpop.f32.mrf.mxu0
        %v1915 = vpop.f32.mrf.mxu0
        %v1916 = vadd.f32 %v1707, %v1915
        %v1917 = vpop.f32.mrf.mxu0
        %1918 = vmatprep.mubr.bf16.mxu0 %v1305
        %1919 = vmatmul.mubr.bf16.gmra.mxu0 %v1301
        %v1920 = vpop.f32.mrf.mxu0
        %v1921 = vadd.f32 %v1712, %v1920
        %v1922 = vpop.f32.mrf.mxu0
        %v1923 = vpop.f32.mrf.mxu0
        %v1924 = vadd.f32 %v1715, %v1923
        %v1925 = vpop.f32.mrf.mxu0
        %1926 = vdwg.mxu0
        %1927 = vmatprep.subr.bf16.mxu0 0
        %1928 = vmatpush1.bf16.msra.mxu0 %v1837
        %1929 = vmatprep.subr.bf16.mxu0 0
        %1930 = vmatpush1.bf16.msra.mxu0 %v1836
        %1931 = vmatprep.subr.bf16.mxu0 0
        %1932 = vmatpush1.bf16.msra.mxu0 %v1835
        %1933 = vmatprep.subr.bf16.mxu0 0
        %1934 = vmatpush1.bf16.msra.mxu0 %v1834
        %1935 = vmatprep.subr.bf16.mxu0 0
        %1936 = vmatpush1.bf16.msra.mxu0 %v1833
        %1937 = vmatprep.subr.bf16.mxu0 0
        %1938 = vmatpush1.bf16.msra.mxu0 %v1832
        %1939 = vmatprep.subr.bf16.mxu0 0
        %1940 = vmatpush1.bf16.msra.mxu0 %v1831
        %1941 = vmatprep.subr.bf16.mxu0 0
        %1942 = vmatpush1.bf16.msra.mxu0 %v1830
        %1943 = vmatprep.subr.bf16.mxu0 0
        %1944 = vmatpush2.bf16.msra.mxu0 0
        %1945 = vmatprep.subr.bf16.mxu0 0
        %1946 = vmatpush2.bf16.msra.mxu0 0
        %1947 = vmatprep.subr.bf16.mxu0 0
        %1948 = vmatpush2.bf16.msra.mxu0 0
        %1949 = vmatprep.subr.bf16.mxu0 0
        %1950 = vmatpush2.bf16.msra.mxu0 0
        %1951 = vmatprep.subr.bf16.mxu0 0
        %1952 = vmatpush2.bf16.msra.mxu0 0
        %1953 = vmatprep.subr.bf16.mxu0 0
        %1954 = vmatpush2.bf16.msra.mxu0 0
        %1955 = vmatprep.subr.bf16.mxu0 0
        %1956 = vmatpush2.bf16.msra.mxu0 0
        %1957 = vmatprep.subr.bf16.mxu0 0
        %1958 = vmatpush2.bf16.msra.mxu0 0
        %1959 = vmatprep.mubr.bf16.mxu0 0
        %1960 = vmatmul.mubr.bf16.gmra.mxu0 %v1331
        %v1961 = vpop.f32.mrf.mxu0
        %v1962 = vadd.f32 %v1897, %v1961
        %v1963 = vpop.f32.mrf.mxu0
        %v1964 = vpop.f32.mrf.mxu0
        %v1965 = vadd.f32 %v1900, %v1964
        %v1966 = vpop.f32.mrf.mxu0
        %1967 = vmatprep.mubr.bf16.mxu0 0
        %1968 = vmatmul.mubr.bf16.gmra.mxu0 %v1332
        %v1969 = vpop.f32.mrf.mxu0
        %v1970 = vadd.f32 %v1905, %v1969
        %v1971 = vpop.f32.mrf.mxu0
        %v1972 = vpop.f32.mrf.mxu0
        %v1973 = vadd.f32 %v1908, %v1972
        %v1974 = vpop.f32.mrf.mxu0
        %1975 = vmatprep.mubr.bf16.mxu0 0
        %1976 = vmatmul.mubr.bf16.gmra.mxu0 %v1333
        %v1977 = vpop.f32.mrf.mxu0
        %v1978 = vadd.f32 %v1913, %v1977
        %v1979 = vpop.f32.mrf.mxu0
        %v1980 = vpop.f32.mrf.mxu0
        %v1981 = vadd.f32 %v1916, %v1980
        %v1982 = vpop.f32.mrf.mxu0
        %1983 = vmatprep.mubr.bf16.mxu0 0
        %1984 = vmatmul.mubr.bf16.gmra.mxu0 %v1334
        %v1985 = vpop.f32.mrf.mxu0
        %v1986 = vadd.f32 %v1921, %v1985
        %v1987 = vpop.f32.mrf.mxu0
        %v1988 = vpop.f32.mrf.mxu0
        %v1989 = vadd.f32 %v1924, %v1988
        %v1990 = vpop.f32.mrf.mxu0
        %1991 = vdwg.mxu0
        %v1992 = vmul.f32 %v1209, %v718
        %v1993 = vmul.f32 %v1210, %v719
        %v1994 = vmul.f32 %v1211, %v720
        %v1995 = vmul.f32 %v1212, %v721
        %v1996 = vmul.f32 %v1213, %v722
        %v1997 = vmul.f32 %v1214, %v723
        %v1998 = vmul.f32 %v1215, %v724
        %v1999 = vmul.f32 %v1208, %v725
        %s2000 = scalar_lea.vmem [#allocation2], 384
        %v2001 = vld [vmem:[%s2000] sm:$0xf]
        %v2002 = vld [vmem:[%s2000 + $0x4] sm:$0xf]
        %v2003 = vld [vmem:[%s2000 + $0x8] sm:$0xf]
        %v2004 = vld [vmem:[%s2000 + $0xc] sm:$0xf]
        %v2005 = vld [vmem:[%s2000 + $0x10] sm:$0xf]
        %v2006 = vld [vmem:[%s2000 + $0x14] sm:$0xf]
        %v2007 = vld [vmem:[%s2000 + $0x18] sm:$0xf]
        %v2008 = vld [vmem:[%s2000 + $0x1c] sm:$0xf]
        %v2009 = vld [vmem:[%s2000 + $0x20] sm:$0xf]
        %v2010 = vld [vmem:[%s2000 + $0x24] sm:$0xf]
        %v2011 = vld [vmem:[%s2000 + $0x28] sm:$0xf]
        %v2012 = vld [vmem:[%s2000 + $0x2c] sm:$0xf]
        %v2013 = vld [vmem:[%s2000 + $0x30] sm:$0xf]
        %v2014 = vld [vmem:[%s2000 + $0x34] sm:$0xf]
        %v2015 = vld [vmem:[%s2000 + $0x38] sm:$0xf]
        %v2016 = vld [vmem:[%s2000 + $0x3c] sm:$0xf]
        %v2017 = vld [vmem:[%s2000 + $0x40] sm:$0xf]
        %v2018 = vld [vmem:[%s2000 + $0x44] sm:$0xf]
        %v2019 = vld [vmem:[%s2000 + $0x48] sm:$0xf]
        %v2020 = vld [vmem:[%s2000 + $0x4c] sm:$0xf]
        %v2021 = vld [vmem:[%s2000 + $0x50] sm:$0xf]
        %v2022 = vld [vmem:[%s2000 + $0x54] sm:$0xf]
        %v2023 = vld [vmem:[%s2000 + $0x58] sm:$0xf]
        %v2024 = vld [vmem:[%s2000 + $0x5c] sm:$0xf]
        %v2025 = vld [vmem:[%s2000 + $0x60] sm:$0xf]
        %v2026 = vld [vmem:[%s2000 + $0x64] sm:$0xf]
        %v2027 = vld [vmem:[%s2000 + $0x68] sm:$0xf]
        %v2028 = vld [vmem:[%s2000 + $0x6c] sm:$0xf]
        %v2029 = vld [vmem:[%s2000 + $0x70] sm:$0xf]
        %v2030 = vld [vmem:[%s2000 + $0x74] sm:$0xf]
        %v2031 = vld [vmem:[%s2000 + $0x78] sm:$0xf]
        %v2032 = vld [vmem:[%s2000 + $0x7c] sm:$0xf]
        %v2033 = vld [vmem:[%s2000 + $0x80] sm:$0xf]
        %v2034 = vld [vmem:[%s2000 + $0x84] sm:$0xf]
        %v2035 = vld [vmem:[%s2000 + $0x88] sm:$0xf]
        %v2036 = vld [vmem:[%s2000 + $0x8c] sm:$0xf]
        %v2037 = vld [vmem:[%s2000 + $0x90] sm:$0xf]
        %v2038 = vld [vmem:[%s2000 + $0x94] sm:$0xf]
        %v2039 = vld [vmem:[%s2000 + $0x98] sm:$0xf]
        %v2040 = vld [vmem:[%s2000 + $0x9c] sm:$0xf]
        %v2041 = vld [vmem:[%s2000 + $0xa0] sm:$0xf]
        %v2042 = vld [vmem:[%s2000 + $0xa4] sm:$0xf]
        %v2043 = vld [vmem:[%s2000 + $0xa8] sm:$0xf]
        %v2044 = vld [vmem:[%s2000 + $0xac] sm:$0xf]
        %v2045 = vld [vmem:[%s2000 + $0xb0] sm:$0xf]
        %v2046 = vld [vmem:[%s2000 + $0xb4] sm:$0xf]
        %v2047 = vld [vmem:[%s2000 + $0xb8] sm:$0xf]
        %v2048 = vld [vmem:[%s2000 + $0xbc] sm:$0xf]
        %v2049 = vrot.slane %v1992, 7
        %v2050 = vrot.slane %v1993, 7
        %v2051 = vrot.slane %v1994, 7
        %v2052 = vrot.slane %v1995, 7
        %v2053 = vrot.slane %v1996, 7
        %v2054 = vrot.slane %v1997, 7
        %v2055 = vrot.slane %v1998, 7
        %v2056 = vrot.slane %v1999, 7
        %v2057 = vsel %vm1281, %v2055, %v2056
        %v2058 = vsel %vm1281, %v2054, %v2055
        %v2059 = vsel %vm1281, %v2053, %v2054
        %v2060 = vsel %vm1281, %v2052, %v2053
        %v2061 = vsel %vm1281, %v2051, %v2052
        %v2062 = vsel %vm1281, %v2050, %v2051
        %v2063 = vsel %vm1281, %v2049, %v2050
        %v2064 = vsel %vm1281, %v2056, %v2049
        %v2065 = vmul.f32 %v2064, %v742
        %v2066 = vmul.f32 %v2063, %v743
        %v2067 = vmul.f32 %v2062, %v744
        %v2068 = vmul.f32 %v2061, %v745
        %v2069 = vmul.f32 %v2060, %v746
        %v2070 = vmul.f32 %v2059, %v747
        %v2071 = vmul.f32 %v2058, %v748
        %v2072 = vmul.f32 %v2057, %v749
        %v2073 = vpack.c.bf16 %v2066, %v2065
        %v2074 = vpack.c.bf16 %v2068, %v2067
        %v2075 = vpack.c.bf16 %v2070, %v2069
        %v2076 = vpack.c.bf16 %v2072, %v2071
        %v2077 = vpack.c.bf16 %v1993, %v1992
        %v2078 = vpack.c.bf16 %v1995, %v1994
        %v2079 = vpack.c.bf16 %v1997, %v1996
        %v2080 = vpack.c.bf16 %v1999, %v1998
        %v2081 = vrot.slane %v1992, 1
        %v2082 = vrot.slane %v1993, 1
        %v2083 = vrot.slane %v1994, 1
        %v2084 = vrot.slane %v1995, 1
        %v2085 = vrot.slane %v1996, 1
        %v2086 = vrot.slane %v1997, 1
        %v2087 = vrot.slane %v1998, 1
        %v2088 = vrot.slane %v1999, 1
        %v2089 = vsel %vm1314, %v2087, %v2088
        %v2090 = vsel %vm1314, %v2086, %v2087
        %v2091 = vsel %vm1314, %v2085, %v2086
        %v2092 = vsel %vm1314, %v2084, %v2085
        %v2093 = vsel %vm1314, %v2083, %v2084
        %v2094 = vsel %vm1314, %v2082, %v2083
        %v2095 = vsel %vm1314, %v2081, %v2082
        %v2096 = vsel %vm1314, %v2088, %v2081
        %v2097 = vmul.f32 %v2095, %v766
        %v2098 = vmul.f32 %v2094, %v767
        %v2099 = vmul.f32 %v2093, %v768
        %v2100 = vmul.f32 %v2092, %v769
        %v2101 = vmul.f32 %v2091, %v770
        %v2102 = vmul.f32 %v2090, %v771
        %v2103 = vmul.f32 %v2089, %v772
        %v2104 = vmul.f32 %v2096, %v773
        %v2105 = vpack.c.bf16 %v2098, %v2097
        %v2106 = vpack.c.bf16 %v2100, %v2099
        %v2107 = vpack.c.bf16 %v2102, %v2101
        %v2108 = vpack.c.bf16 %v2104, %v2103
        %v2157 = vunpack.c.l.b16 %v2001
        %v2158 = vunpack.c.l.b16 %v2002
        %v2159 = vunpack.c.l.b16 %v2003
        %v2160 = vunpack.c.l.b16 %v2004
        %v2161 = vunpack.c.l.b16 %v2005
        %v2162 = vunpack.c.l.b16 %v2006
        %v2163 = vunpack.c.l.b16 %v2007
        %v2164 = vunpack.c.l.b16 %v2008
        %v2165 = vunpack.c.l.b16 %v2009
        %v2166 = vunpack.c.l.b16 %v2010
        %v2167 = vunpack.c.l.b16 %v2011
        %v2168 = vunpack.c.l.b16 %v2012
        %v2169 = vunpack.c.l.b16 %v2013
        %v2170 = vunpack.c.l.b16 %v2014
        %v2171 = vunpack.c.l.b16 %v2015
        %v2172 = vunpack.c.l.b16 %v2016
        %v2173 = vunpack.c.l.b16 %v2017
        %v2174 = vunpack.c.l.b16 %v2018
        %v2175 = vunpack.c.l.b16 %v2019
        %v2176 = vunpack.c.l.b16 %v2020
        %v2177 = vunpack.c.l.b16 %v2021
        %v2178 = vunpack.c.l.b16 %v2022
        %v2179 = vunpack.c.l.b16 %v2023
        %v2180 = vunpack.c.l.b16 %v2024
        %v2181 = vunpack.c.l.b16 %v2025
        %v2182 = vunpack.c.l.b16 %v2026
        %v2183 = vunpack.c.l.b16 %v2027
        %v2184 = vunpack.c.l.b16 %v2028
        %v2185 = vunpack.c.l.b16 %v2029
        %v2186 = vunpack.c.l.b16 %v2030
        %v2187 = vunpack.c.l.b16 %v2031
        %v2188 = vunpack.c.l.b16 %v2032
        %v2189 = vunpack.c.l.b16 %v2033
        %v2190 = vunpack.c.l.b16 %v2034
        %v2191 = vunpack.c.l.b16 %v2035
        %v2192 = vunpack.c.l.b16 %v2036
        %v2193 = vunpack.c.l.b16 %v2037
        %v2194 = vunpack.c.l.b16 %v2038
        %v2195 = vunpack.c.l.b16 %v2039
        %v2196 = vunpack.c.l.b16 %v2040
        %v2197 = vunpack.c.l.b16 %v2041
        %v2198 = vunpack.c.l.b16 %v2042
        %v2199 = vunpack.c.l.b16 %v2043
        %v2200 = vunpack.c.l.b16 %v2044
        %v2201 = vunpack.c.l.b16 %v2045
        %v2202 = vunpack.c.l.b16 %v2046
        %v2203 = vunpack.c.l.b16 %v2047
        %v2204 = vunpack.c.l.b16 %v2048
        %v2205 = vpack.c.b16 %v2158, %v2157
        %v2206 = vpack.c.b16 %v2160, %v2159
        %v2207 = vpack.c.b16 %v2162, %v2161
        %v2208 = vpack.c.b16 %v2164, %v2163
        %v2209 = vpack.c.b16 %v2166, %v2165
        %v2210 = vpack.c.b16 %v2168, %v2167
        %v2211 = vpack.c.b16 %v2170, %v2169
        %v2212 = vpack.c.b16 %v2172, %v2171
        %v2213 = vpack.c.b16 %v2174, %v2173
        %v2214 = vpack.c.b16 %v2176, %v2175
        %v2215 = vpack.c.b16 %v2178, %v2177
        %v2216 = vpack.c.b16 %v2180, %v2179
        %v2217 = vpack.c.b16 %v2182, %v2181
        %v2218 = vpack.c.b16 %v2184, %v2183
        %v2219 = vpack.c.b16 %v2186, %v2185
        %v2220 = vpack.c.b16 %v2188, %v2187
        %v2221 = vpack.c.b16 %v2190, %v2189
        %v2222 = vpack.c.b16 %v2192, %v2191
        %v2223 = vpack.c.b16 %v2194, %v2193
        %v2224 = vpack.c.b16 %v2196, %v2195
        %v2225 = vpack.c.b16 %v2198, %v2197
        %v2226 = vpack.c.b16 %v2200, %v2199
        %v2227 = vpack.c.b16 %v2202, %v2201
        %v2228 = vpack.c.b16 %v2204, %v2203
        %2253 = vmatprep.subr.bf16.mxu0 0
        %2254 = vmatpush1.bf16.msra.mxu0 %v2212
        %2255 = vmatprep.subr.bf16.mxu0 0
        %2256 = vmatpush1.bf16.msra.mxu0 %v2211
        %2257 = vmatprep.subr.bf16.mxu0 0
        %2258 = vmatpush1.bf16.msra.mxu0 %v2210
        %2259 = vmatprep.subr.bf16.mxu0 0
        %2260 = vmatpush1.bf16.msra.mxu0 %v2209
        %2261 = vmatprep.subr.bf16.mxu0 0
        %2262 = vmatpush1.bf16.msra.mxu0 %v2208
        %2263 = vmatprep.subr.bf16.mxu0 0
        %2264 = vmatpush1.bf16.msra.mxu0 %v2207
        %2265 = vmatprep.subr.bf16.mxu0 0
        %2266 = vmatpush1.bf16.msra.mxu0 %v2206
        %2267 = vmatprep.subr.bf16.mxu0 0
        %2268 = vmatpush1.bf16.msra.mxu0 %v2205
        %2269 = vmatprep.subr.bf16.mxu0 0
        %2270 = vmatpush2.bf16.msra.mxu0 %v2220
        %2271 = vmatprep.subr.bf16.mxu0 0
        %2272 = vmatpush2.bf16.msra.mxu0 %v2219
        %2273 = vmatprep.subr.bf16.mxu0 0
        %2274 = vmatpush2.bf16.msra.mxu0 %v2218
        %2275 = vmatprep.subr.bf16.mxu0 0
        %2276 = vmatpush2.bf16.msra.mxu0 %v2217
        %2277 = vmatprep.subr.bf16.mxu0 0
        %2278 = vmatpush2.bf16.msra.mxu0 %v2216
        %2279 = vmatprep.subr.bf16.mxu0 0
        %2280 = vmatpush2.bf16.msra.mxu0 %v2215
        %2281 = vmatprep.subr.bf16.mxu0 0
        %2282 = vmatpush2.bf16.msra.mxu0 %v2214
        %2283 = vmatprep.subr.bf16.mxu0 0
        %2284 = vmatpush2.bf16.msra.mxu0 %v2213
        %2285 = vmatprep.mubr.bf16.mxu0 %v2077
        %2286 = vmatmul.mubr.bf16.gmra.mxu0 %v2073
        %v2287 = vpop.f32.mrf.mxu0
        %v2288 = vadd.f32 0.0, %v2287
        %v2289 = vpop.f32.mrf.mxu0
        %v2290 = vpop.f32.mrf.mxu0
        %v2291 = vadd.f32 0.0, %v2290
        %v2292 = vpop.f32.mrf.mxu0
        %2293 = vmatprep.mubr.bf16.mxu0 %v2078
        %2294 = vmatmul.mubr.bf16.gmra.mxu0 %v2074
        %v2295 = vpop.f32.mrf.mxu0
        %v2296 = vadd.f32 0.0, %v2295
        %v2297 = vpop.f32.mrf.mxu0
        %v2298 = vpop.f32.mrf.mxu0
        %v2299 = vadd.f32 0.0, %v2298
        %v2300 = vpop.f32.mrf.mxu0
        %2301 = vmatprep.mubr.bf16.mxu0 %v2079
        %2302 = vmatmul.mubr.bf16.gmra.mxu0 %v2075
        %v2303 = vpop.f32.mrf.mxu0
        %v2304 = vadd.f32 0.0, %v2303
        %v2305 = vpop.f32.mrf.mxu0
        %v2306 = vpop.f32.mrf.mxu0
        %v2307 = vadd.f32 0.0, %v2306
        %v2308 = vpop.f32.mrf.mxu0
        %2309 = vmatprep.mubr.bf16.mxu0 %v2080
        %2310 = vmatmul.mubr.bf16.gmra.mxu0 %v2076
        %v2311 = vpop.f32.mrf.mxu0
        %v2312 = vadd.f32 0.0, %v2311
        %v2313 = vpop.f32.mrf.mxu0
        %v2314 = vpop.f32.mrf.mxu0
        %v2315 = vadd.f32 0.0, %v2314
        %v2316 = vpop.f32.mrf.mxu0
        %2317 = vdwg.mxu0
        %2318 = vmatprep.subr.bf16.mxu0 0
        %2319 = vmatpush1.bf16.msra.mxu0 %v2228
        %2320 = vmatprep.subr.bf16.mxu0 0
        %2321 = vmatpush1.bf16.msra.mxu0 %v2227
        %2322 = vmatprep.subr.bf16.mxu0 0
        %2323 = vmatpush1.bf16.msra.mxu0 %v2226
        %2324 = vmatprep.subr.bf16.mxu0 0
        %2325 = vmatpush1.bf16.msra.mxu0 %v2225
        %2326 = vmatprep.subr.bf16.mxu0 0
        %2327 = vmatpush1.bf16.msra.mxu0 %v2224
        %2328 = vmatprep.subr.bf16.mxu0 0
        %2329 = vmatpush1.bf16.msra.mxu0 %v2223
        %2330 = vmatprep.subr.bf16.mxu0 0
        %2331 = vmatpush1.bf16.msra.mxu0 %v2222
        %2332 = vmatprep.subr.bf16.mxu0 0
        %2333 = vmatpush1.bf16.msra.mxu0 %v2221
        %2334 = vmatprep.subr.bf16.mxu0 0
        %2335 = vmatpush2.bf16.msra.mxu0 0
        %2336 = vmatprep.subr.bf16.mxu0 0
        %2337 = vmatpush2.bf16.msra.mxu0 0
        %2338 = vmatprep.subr.bf16.mxu0 0
        %2339 = vmatpush2.bf16.msra.mxu0 0
        %2340 = vmatprep.subr.bf16.mxu0 0
        %2341 = vmatpush2.bf16.msra.mxu0 0
        %2342 = vmatprep.subr.bf16.mxu0 0
        %2343 = vmatpush2.bf16.msra.mxu0 0
        %2344 = vmatprep.subr.bf16.mxu0 0
        %2345 = vmatpush2.bf16.msra.mxu0 0
        %2346 = vmatprep.subr.bf16.mxu0 0
        %2347 = vmatpush2.bf16.msra.mxu0 0
        %2348 = vmatprep.subr.bf16.mxu0 0
        %2349 = vmatpush2.bf16.msra.mxu0 0
        %2350 = vmatprep.mubr.bf16.mxu0 0
        %2351 = vmatmul.mubr.bf16.gmra.mxu0 %v2105
        %v2352 = vpop.f32.mrf.mxu0
        %v2353 = vadd.f32 %v2288, %v2352
        %v2354 = vpop.f32.mrf.mxu0
        %v2355 = vpop.f32.mrf.mxu0
        %v2356 = vadd.f32 %v2291, %v2355
        %v2357 = vpop.f32.mrf.mxu0
        %2358 = vmatprep.mubr.bf16.mxu0 0
        %2359 = vmatmul.mubr.bf16.gmra.mxu0 %v2106
        %v2360 = vpop.f32.mrf.mxu0
        %v2361 = vadd.f32 %v2296, %v2360
        %v2362 = vpop.f32.mrf.mxu0
        %v2363 = vpop.f32.mrf.mxu0
        %v2364 = vadd.f32 %v2299, %v2363
        %v2365 = vpop.f32.mrf.mxu0
        %2366 = vmatprep.mubr.bf16.mxu0 0
        %2367 = vmatmul.mubr.bf16.gmra.mxu0 %v2107
        %v2368 = vpop.f32.mrf.mxu0
        %v2369 = vadd.f32 %v2304, %v2368
        %v2370 = vpop.f32.mrf.mxu0
        %v2371 = vpop.f32.mrf.mxu0
        %v2372 = vadd.f32 %v2307, %v2371
        %v2373 = vpop.f32.mrf.mxu0
        %2374 = vmatprep.mubr.bf16.mxu0 0
        %2375 = vmatmul.mubr.bf16.gmra.mxu0 %v2108
        %v2376 = vpop.f32.mrf.mxu0
        %v2377 = vadd.f32 %v2312, %v2376
        %v2378 = vpop.f32.mrf.mxu0
        %v2379 = vpop.f32.mrf.mxu0
        %v2380 = vadd.f32 %v2315, %v2379
        %v2381 = vpop.f32.mrf.mxu0
        %2382 = vdwg.mxu0
        %v2383 = vadd.f32 %v1962, %v2353
        %v2384 = vadd.f32 %v1965, %v2356
        %v2385 = vadd.f32 %v1970, %v2361
        %v2386 = vadd.f32 %v1973, %v2364
        %v2387 = vadd.f32 %v1978, %v2369
        %v2388 = vadd.f32 %v1981, %v2372
        %v2389 = vadd.f32 %v1986, %v2377
        %v2390 = vadd.f32 %v1989, %v2380
        %v2392 = vlaneseq
        %v2393 = vshrl.u32 %v2392, 7
        %v2394 = vsub.s32 0, %v2393
        %v2395 = vrot.slane %v1216, %v2394
        %v2397 = vadd.f32 %v2383, %v2395
        %v2398 = vadd.f32 %v2384, %v2395
        %v2399 = vadd.f32 %v2385, %v2395
        %v2400 = vadd.f32 %v2386, %v2395
        %v2401 = vadd.f32 %v2387, %v2395
        %v2402 = vadd.f32 %v2388, %v2395
        %v2403 = vadd.f32 %v2389, %v2395
        %v2404 = vadd.f32 %v2390, %v2395
        %v2405 = vld [vmem:[%s563] sm:$0x1]
        %v2407 = vlaneseq
        %v2408 = vshrl.u32 %v2407, 7
        %v2409 = vsub.s32 0, %v2408
        %v2410 = vrot.slane %v2405, %v2409
        %v2412 = vadd.f32 %v2397, %v2410
        %v2413 = vadd.f32 %v2398, %v2410
        %v2414 = vadd.f32 %v2399, %v2410
        %v2415 = vadd.f32 %v2400, %v2410
        %v2416 = vadd.f32 %v2401, %v2410
        %v2417 = vadd.f32 %v2402, %v2410
        %v2418 = vadd.f32 %v2403, %v2410
        %v2419 = vadd.f32 %v2404, %v2410
        %v2420 = vld [vmem:[%s8] sm:$0x1]
        %v2421 = vld [vmem:[%s9] sm:$0x1]
        %v2422 = vld [vmem:[%s10] sm:$0xff]
        %v2423 = vld [vmem:[%s10 + $0x8] sm:$0xff]
        %v2424 = vld [vmem:[%s10 + $0x10] sm:$0xff]
        %v2425 = vld [vmem:[%s10 + $0x18] sm:$0xff]
        %v2426 = vld [vmem:[%s10 + $0x20] sm:$0xff]
        %v2427 = vld [vmem:[%s10 + $0x28] sm:$0xff]
        %v2428 = vld [vmem:[%s10 + $0x30] sm:$0xff]
        %v2429 = vld [vmem:[%s10 + $0x38] sm:$0xff]
        %v2430 = vld [vmem:[%s10 + $0x40] sm:$0xff]
        %v2431 = vld [vmem:[%s10 + $0x48] sm:$0xff]
        %v2432 = vld [vmem:[%s10 + $0x50] sm:$0xff]
        %v2433 = vld [vmem:[%s10 + $0x58] sm:$0xff]
        %v2434 = vld [vmem:[%s10 + $0x60] sm:$0xff]
        %v2435 = vld [vmem:[%s10 + $0x68] sm:$0xff]
        %v2436 = vld [vmem:[%s10 + $0x70] sm:$0xff]
        %v2437 = vld [vmem:[%s10 + $0x78] sm:$0xff]
        %v2438 = vld [vmem:[%s11] sm:$0xff]
        %v2439 = vld [vmem:[%s11 + $0x8] sm:$0xff]
        %v2440 = vld [vmem:[%s11 + $0x10] sm:$0xff]
        %v2441 = vld [vmem:[%s11 + $0x18] sm:$0xff]
        %v2442 = vadd.f32 %v2412, %v2413
        %v2443 = vadd.f32 %v2442, %v2414
        %v2444 = vadd.f32 %v2443, %v2415
        %v2445 = vadd.f32 %v2444, %v2416
        %v2446 = vadd.f32 %v2445, %v2417
        %v2447 = vadd.f32 %v2446, %v2418
        %v2448 = vadd.f32 %v2447, %v2419
        %v2449 = vrot.slane %v2448, 4
        %v2450 = vadd.f32 %v2448, %v2449
        %v2451 = vrot.slane %v2450, 2
        %v2452 = vadd.f32 %v2450, %v2451
        %v2453 = vrot.slane %v2452, 1
        %v2454 = vadd.f32 %v2452, %v2453
        %2455 = vmatprep.subr.mxu0 0.0
        %2456 = vmatpush1.msra.mxu0 %v2437
        %2457 = vmatprep.subr.mxu0 0.0
        %2458 = vmatpush1.msra.mxu0 %v2436
        %2459 = vmatprep.subr.mxu0 0.0
        %2460 = vmatpush1.msra.mxu0 %v2435
        %2461 = vmatprep.subr.mxu0 0.0
        %2462 = vmatpush1.msra.mxu0 %v2434
        %2463 = vmatprep.subr.mxu0 0.0
        %2464 = vmatpush1.msra.mxu0 %v2433
        %2465 = vmatprep.subr.mxu0 0.0
        %2466 = vmatpush1.msra.mxu0 %v2432
        %2467 = vmatprep.subr.mxu0 0.0
        %2468 = vmatpush1.msra.mxu0 %v2431
        %2469 = vmatprep.subr.mxu0 0.0
        %2470 = vmatpush1.msra.mxu0 %v2430
        %2471 = vmatprep.subr.mxu0 0.0
        %2472 = vmatpush1.msra.mxu0 %v2429
        %2473 = vmatprep.subr.mxu0 0.0
        %2474 = vmatpush1.msra.mxu0 %v2428
        %2475 = vmatprep.subr.mxu0 0.0
        %2476 = vmatpush1.msra.mxu0 %v2427
        %2477 = vmatprep.subr.mxu0 0.0
        %2478 = vmatpush1.msra.mxu0 %v2426
        %2479 = vmatprep.subr.mxu0 0.0
        %2480 = vmatpush1.msra.mxu0 %v2425
        %2481 = vmatprep.subr.mxu0 0.0
        %2482 = vmatpush1.msra.mxu0 %v2424
        %2483 = vmatprep.subr.mxu0 0.0
        %2484 = vmatpush1.msra.mxu0 %v2423
        %2485 = vmatprep.subr.mxu0 0.0
        %2486 = vmatpush1.msra.mxu0 %v2422
        %2487 = vmatprep.subr.mxu0 0.0
        %2488 = vmatpush2.msra.mxu0 0.0
        %2489 = vmatprep.subr.mxu0 0.0
        %2490 = vmatpush2.msra.mxu0 0.0
        %2491 = vmatprep.subr.mxu0 0.0
        %2492 = vmatpush2.msra.mxu0 0.0
        %2493 = vmatprep.subr.mxu0 0.0
        %2494 = vmatpush2.msra.mxu0 0.0
        %2495 = vmatprep.subr.mxu0 0.0
        %2496 = vmatpush2.msra.mxu0 0.0
        %2497 = vmatprep.subr.mxu0 0.0
        %2498 = vmatpush2.msra.mxu0 0.0
        %2499 = vmatprep.subr.mxu0 0.0
        %2500 = vmatpush2.msra.mxu0 0.0
        %2501 = vmatprep.subr.mxu0 0.0
        %2502 = vmatpush2.msra.mxu0 0.0
        %2503 = vmatprep.subr.mxu0 0.0
        %2504 = vmatpush2.msra.mxu0 0.0
        %2505 = vmatprep.subr.mxu0 0.0
        %2506 = vmatpush2.msra.mxu0 0.0
        %2507 = vmatprep.subr.mxu0 0.0
        %2508 = vmatpush2.msra.mxu0 0.0
        %2509 = vmatprep.subr.mxu0 0.0
        %2510 = vmatpush2.msra.mxu0 0.0
        %2511 = vmatprep.subr.mxu0 0.0
        %2512 = vmatpush2.msra.mxu0 0.0
        %2513 = vmatprep.subr.mxu0 0.0
        %2514 = vmatpush2.msra.mxu0 0.0
        %2515 = vmatprep.subr.mxu0 0.0
        %2516 = vmatpush2.msra.mxu0 0.0
        %2517 = vmatprep.subr.mxu0 0.0
        %2518 = vmatpush2.msra.mxu0 0.0
        %2519 = vmatprep.mubr.f32.mxu0 0.0
        %2520 = vmatmul.mubr.f32.gmra.mxu0 %v2454
        %v2521 = vpop.f32.mrf.mxu0
        %v2522 = vadd.f32 0.0, %v2521
        %v2523 = vpop.f32.mrf.mxu0
        %2524 = vdwg.mxu0
        %v2525 = vmul.f32 %v2522, 0.0078125
        %v2527 = vsel %vm880, %v2525, 0
        %2529 = vmatprep.subr.mxu0 0.0
        %2530 = vmatpush1.msra.mxu0 0.0
        %2531 = vmatprep.subr.mxu0 0.0
        %2532 = vmatpush1.msra.mxu0 0.0
        %2533 = vmatprep.subr.mxu0 0.0
        %2534 = vmatpush1.msra.mxu0 0.0
        %2535 = vmatprep.subr.mxu0 0.0
        %2536 = vmatpush1.msra.mxu0 0.0
        %2537 = vmatprep.subr.mxu0 0.0
        %2538 = vmatpush1.msra.mxu0 0.0
        %2539 = vmatprep.subr.mxu0 0.0
        %2540 = vmatpush1.msra.mxu0 0.0
        %2541 = vmatprep.subr.mxu0 0.0
        %2542 = vmatpush1.msra.mxu0 0.0
        %2543 = vmatprep.subr.mxu0 0.0
        %2544 = vmatpush1.msra.mxu0 0.0
        %2545 = vmatprep.subr.mxu0 0.0
        %2546 = vmatpush1.msra.mxu0 0.0
        %2547 = vmatprep.subr.mxu0 0.0
        %2548 = vmatpush1.msra.mxu0 0.0
        %2549 = vmatprep.subr.mxu0 0.0
        %2550 = vmatpush1.msra.mxu0 0.0
        %2551 = vmatprep.subr.mxu0 0.0
        %2552 = vmatpush1.msra.mxu0 0.0
        %2553 = vmatprep.subr.mxu0 0.0
        %2554 = vmatpush1.msra.mxu0 %v2441
        %2555 = vmatprep.subr.mxu0 0.0
        %2556 = vmatpush1.msra.mxu0 %v2440
        %2557 = vmatprep.subr.mxu0 0.0
        %2558 = vmatpush1.msra.mxu0 %v2439
        %2559 = vmatprep.subr.mxu0 0.0
        %2560 = vmatpush1.msra.mxu0 %v2438
        %2561 = vmatprep.subr.mxu0 0.0
        %2562 = vmatpush2.msra.mxu0 0.0
        %2563 = vmatprep.subr.mxu0 0.0
        %2564 = vmatpush2.msra.mxu0 0.0
        %2565 = vmatprep.subr.mxu0 0.0
        %2566 = vmatpush2.msra.mxu0 0.0
        %2567 = vmatprep.subr.mxu0 0.0
        %2568 = vmatpush2.msra.mxu0 0.0
        %2569 = vmatprep.subr.mxu0 0.0
        %2570 = vmatpush2.msra.mxu0 0.0
        %2571 = vmatprep.subr.mxu0 0.0
        %2572 = vmatpush2.msra.mxu0 0.0
        %2573 = vmatprep.subr.mxu0 0.0
        %2574 = vmatpush2.msra.mxu0 0.0
        %2575 = vmatprep.subr.mxu0 0.0
        %2576 = vmatpush2.msra.mxu0 0.0
        %2577 = vmatprep.subr.mxu0 0.0
        %2578 = vmatpush2.msra.mxu0 0.0
        %2579 = vmatprep.subr.mxu0 0.0
        %2580 = vmatpush2.msra.mxu0 0.0
        %2581 = vmatprep.subr.mxu0 0.0
        %2582 = vmatpush2.msra.mxu0 0.0
        %2583 = vmatprep.subr.mxu0 0.0
        %2584 = vmatpush2.msra.mxu0 0.0
        %2585 = vmatprep.subr.mxu0 0.0
        %2586 = vmatpush2.msra.mxu0 0.0
        %2587 = vmatprep.subr.mxu0 0.0
        %2588 = vmatpush2.msra.mxu0 0.0
        %2589 = vmatprep.subr.mxu0 0.0
        %2590 = vmatpush2.msra.mxu0 0.0
        %2591 = vmatprep.subr.mxu0 0.0
        %2592 = vmatpush2.msra.mxu0 0.0
        %2593 = vmatprep.mubr.f32.mxu0 0.0
        %2594 = vmatmul.mubr.f32.gmra.mxu0 %v2527
        %v2595 = vpop.f32.mrf.mxu0
        %v2596 = vadd.f32 0.0, %v2595
        %v2597 = vpop.f32.mrf.mxu0
        %2598 = vdwg.mxu0
        %v2599 = vlaneseq
        %v2600 = vshrl.u32 %v2599, 7
        %v2601 = vsub.s32 0, %v2600
        %v2602 = vrot.slane %v2596, %v2601
        %v2603 = vsub.f32 %v2412, %v2602
        %v2604 = vsub.f32 %v2413, %v2602
        %v2605 = vsub.f32 %v2414, %v2602
        %v2606 = vsub.f32 %v2415, %v2602
        %v2607 = vsub.f32 %v2416, %v2602
        %v2608 = vsub.f32 %v2417, %v2602
        %v2609 = vsub.f32 %v2418, %v2602
        %v2610 = vsub.f32 %v2419, %v2602
        %v2611 = vmul.f32 %v2603, %v2603
        %v2612 = vmul.f32 %v2604, %v2604
        %v2613 = vmul.f32 %v2605, %v2605
        %v2614 = vmul.f32 %v2606, %v2606
        %v2615 = vmul.f32 %v2607, %v2607
        %v2616 = vmul.f32 %v2608, %v2608
        %v2617 = vmul.f32 %v2609, %v2609
        %v2618 = vmul.f32 %v2610, %v2610
        %v2619 = vadd.f32 %v2611, %v2612
        %v2620 = vadd.f32 %v2619, %v2613
        %v2621 = vadd.f32 %v2620, %v2614
        %v2622 = vadd.f32 %v2621, %v2615
        %v2623 = vadd.f32 %v2622, %v2616
        %v2624 = vadd.f32 %v2623, %v2617
        %v2625 = vadd.f32 %v2624, %v2618
        %v2626 = vrot.slane %v2625, 4
        %v2627 = vadd.f32 %v2625, %v2626
        %v2628 = vrot.slane %v2627, 2
        %v2629 = vadd.f32 %v2627, %v2628
        %v2630 = vrot.slane %v2629, 1
        %v2631 = vadd.f32 %v2629, %v2630
        %2632 = vmatprep.subr.mxu0 0.0
        %2633 = vmatpush1.msra.mxu0 %v2437
        %2634 = vmatprep.subr.mxu0 0.0
        %2635 = vmatpush1.msra.mxu0 %v2436
        %2636 = vmatprep.subr.mxu0 0.0
        %2637 = vmatpush1.msra.mxu0 %v2435
        %2638 = vmatprep.subr.mxu0 0.0
        %2639 = vmatpush1.msra.mxu0 %v2434
        %2640 = vmatprep.subr.mxu0 0.0
        %2641 = vmatpush1.msra.mxu0 %v2433
        %2642 = vmatprep.subr.mxu0 0.0
        %2643 = vmatpush1.msra.mxu0 %v2432
        %2644 = vmatprep.subr.mxu0 0.0
        %2645 = vmatpush1.msra.mxu0 %v2431
        %2646 = vmatprep.subr.mxu0 0.0
        %2647 = vmatpush1.msra.mxu0 %v2430
        %2648 = vmatprep.subr.mxu0 0.0
        %2649 = vmatpush1.msra.mxu0 %v2429
        %2650 = vmatprep.subr.mxu0 0.0
        %2651 = vmatpush1.msra.mxu0 %v2428
        %2652 = vmatprep.subr.mxu0 0.0
        %2653 = vmatpush1.msra.mxu0 %v2427
        %2654 = vmatprep.subr.mxu0 0.0
        %2655 = vmatpush1.msra.mxu0 %v2426
        %2656 = vmatprep.subr.mxu0 0.0
        %2657 = vmatpush1.msra.mxu0 %v2425
        %2658 = vmatprep.subr.mxu0 0.0
        %2659 = vmatpush1.msra.mxu0 %v2424
        %2660 = vmatprep.subr.mxu0 0.0
        %2661 = vmatpush1.msra.mxu0 %v2423
        %2662 = vmatprep.subr.mxu0 0.0
        %2663 = vmatpush1.msra.mxu0 %v2422
        %2664 = vmatprep.subr.mxu0 0.0
        %2665 = vmatpush2.msra.mxu0 0.0
        %2666 = vmatprep.subr.mxu0 0.0
        %2667 = vmatpush2.msra.mxu0 0.0
        %2668 = vmatprep.subr.mxu0 0.0
        %2669 = vmatpush2.msra.mxu0 0.0
        %2670 = vmatprep.subr.mxu0 0.0
        %2671 = vmatpush2.msra.mxu0 0.0
        %2672 = vmatprep.subr.mxu0 0.0
        %2673 = vmatpush2.msra.mxu0 0.0
        %2674 = vmatprep.subr.mxu0 0.0
        %2675 = vmatpush2.msra.mxu0 0.0
        %2676 = vmatprep.subr.mxu0 0.0
        %2677 = vmatpush2.msra.mxu0 0.0
        %2678 = vmatprep.subr.mxu0 0.0
        %2679 = vmatpush2.msra.mxu0 0.0
        %2680 = vmatprep.subr.mxu0 0.0
        %2681 = vmatpush2.msra.mxu0 0.0
        %2682 = vmatprep.subr.mxu0 0.0
        %2683 = vmatpush2.msra.mxu0 0.0
        %2684 = vmatprep.subr.mxu0 0.0
        %2685 = vmatpush2.msra.mxu0 0.0
        %2686 = vmatprep.subr.mxu0 0.0
        %2687 = vmatpush2.msra.mxu0 0.0
        %2688 = vmatprep.subr.mxu0 0.0
        %2689 = vmatpush2.msra.mxu0 0.0
        %2690 = vmatprep.subr.mxu0 0.0
        %2691 = vmatpush2.msra.mxu0 0.0
        %2692 = vmatprep.subr.mxu0 0.0
        %2693 = vmatpush2.msra.mxu0 0.0
        %2694 = vmatprep.subr.mxu0 0.0
        %2695 = vmatpush2.msra.mxu0 0.0
        %2696 = vmatprep.mubr.f32.mxu0 0.0
        %2697 = vmatmul.mubr.f32.gmra.mxu0 %v2631
        %v2698 = vpop.f32.mrf.mxu0
        %v2699 = vadd.f32 0.0, %v2698
        %v2700 = vpop.f32.mrf.mxu0
        %2701 = vdwg.mxu0
        %v2702 = vmul.f32 %v2699, 0.0078125
        %v2703 = vadd.f32 %v2702, 1e-06
        %v2704 = vrsqrt.pop %v2703
        %v2706 = vsel %vm880, %v2704, 0
        %2708 = vmatprep.subr.mxu0 0.0
        %2709 = vmatpush1.msra.mxu0 0.0
        %2710 = vmatprep.subr.mxu0 0.0
        %2711 = vmatpush1.msra.mxu0 0.0
        %2712 = vmatprep.subr.mxu0 0.0
        %2713 = vmatpush1.msra.mxu0 0.0
        %2714 = vmatprep.subr.mxu0 0.0
        %2715 = vmatpush1.msra.mxu0 0.0
        %2716 = vmatprep.subr.mxu0 0.0
        %2717 = vmatpush1.msra.mxu0 0.0
        %2718 = vmatprep.subr.mxu0 0.0
        %2719 = vmatpush1.msra.mxu0 0.0
        %2720 = vmatprep.subr.mxu0 0.0
        %2721 = vmatpush1.msra.mxu0 0.0
        %2722 = vmatprep.subr.mxu0 0.0
        %2723 = vmatpush1.msra.mxu0 0.0
        %2724 = vmatprep.subr.mxu0 0.0
        %2725 = vmatpush1.msra.mxu0 0.0
        %2726 = vmatprep.subr.mxu0 0.0
        %2727 = vmatpush1.msra.mxu0 0.0
        %2728 = vmatprep.subr.mxu0 0.0
        %2729 = vmatpush1.msra.mxu0 0.0
        %2730 = vmatprep.subr.mxu0 0.0
        %2731 = vmatpush1.msra.mxu0 0.0
        %2732 = vmatprep.subr.mxu0 0.0
        %2733 = vmatpush1.msra.mxu0 %v2441
        %2734 = vmatprep.subr.mxu0 0.0
        %2735 = vmatpush1.msra.mxu0 %v2440
        %2736 = vmatprep.subr.mxu0 0.0
        %2737 = vmatpush1.msra.mxu0 %v2439
        %2738 = vmatprep.subr.mxu0 0.0
        %2739 = vmatpush1.msra.mxu0 %v2438
        %2740 = vmatprep.subr.mxu0 0.0
        %2741 = vmatpush2.msra.mxu0 0.0
        %2742 = vmatprep.subr.mxu0 0.0
        %2743 = vmatpush2.msra.mxu0 0.0
        %2744 = vmatprep.subr.mxu0 0.0
        %2745 = vmatpush2.msra.mxu0 0.0
        %2746 = vmatprep.subr.mxu0 0.0
        %2747 = vmatpush2.msra.mxu0 0.0
        %2748 = vmatprep.subr.mxu0 0.0
        %2749 = vmatpush2.msra.mxu0 0.0
        %2750 = vmatprep.subr.mxu0 0.0
        %2751 = vmatpush2.msra.mxu0 0.0
        %2752 = vmatprep.subr.mxu0 0.0
        %2753 = vmatpush2.msra.mxu0 0.0
        %2754 = vmatprep.subr.mxu0 0.0
        %2755 = vmatpush2.msra.mxu0 0.0
        %2756 = vmatprep.subr.mxu0 0.0
        %2757 = vmatpush2.msra.mxu0 0.0
        %2758 = vmatprep.subr.mxu0 0.0
        %2759 = vmatpush2.msra.mxu0 0.0
        %2760 = vmatprep.subr.mxu0 0.0
        %2761 = vmatpush2.msra.mxu0 0.0
        %2762 = vmatprep.subr.mxu0 0.0
        %2763 = vmatpush2.msra.mxu0 0.0
        %2764 = vmatprep.subr.mxu0 0.0
        %2765 = vmatpush2.msra.mxu0 0.0
        %2766 = vmatprep.subr.mxu0 0.0
        %2767 = vmatpush2.msra.mxu0 0.0
        %2768 = vmatprep.subr.mxu0 0.0
        %2769 = vmatpush2.msra.mxu0 0.0
        %2770 = vmatprep.subr.mxu0 0.0
        %2771 = vmatpush2.msra.mxu0 0.0
        %2772 = vmatprep.mubr.f32.mxu0 0.0
        %2773 = vmatmul.mubr.f32.gmra.mxu0 %v2706
        %v2774 = vpop.f32.mrf.mxu0
        %v2775 = vadd.f32 0.0, %v2774
        %v2776 = vpop.f32.mrf.mxu0
        %2777 = vdwg.mxu0
        %v2778 = vmul.f32 %v2775, %v2420
        %v2779 = vlaneseq
        %v2780 = vshrl.u32 %v2779, 7
        %v2781 = vsub.s32 0, %v2780
        %v2782 = vrot.slane %v2778, %v2781
        %v2783 = vmul.f32 %v2603, %v2782
        %v2784 = vmul.f32 %v2604, %v2782
        %v2785 = vmul.f32 %v2605, %v2782
        %v2786 = vmul.f32 %v2606, %v2782
        %v2787 = vmul.f32 %v2607, %v2782
        %v2788 = vmul.f32 %v2608, %v2782
        %v2789 = vmul.f32 %v2609, %v2782
        %v2790 = vmul.f32 %v2610, %v2782
        %v2792 = vlaneseq
        %v2793 = vshrl.u32 %v2792, 7
        %v2794 = vsub.s32 0, %v2793
        %v2795 = vrot.slane %v2421, %v2794
        %v2797 = vadd.f32 %v2783, %v2795
        %v2798 = vadd.f32 %v2784, %v2795
        %v2799 = vadd.f32 %v2785, %v2795
        %v2800 = vadd.f32 %v2786, %v2795
        %v2801 = vadd.f32 %v2787, %v2795
        %v2802 = vadd.f32 %v2788, %v2795
        %v2803 = vadd.f32 %v2789, %v2795
        %v2804 = vadd.f32 %v2790, %v2795
        %v2805 = vxor.u32 %v2797, 2147483648
        %v2806 = vxor.u32 %v2798, 2147483648
        %v2807 = vxor.u32 %v2799, 2147483648
        %v2808 = vxor.u32 %v2800, 2147483648
        %v2809 = vxor.u32 %v2801, 2147483648
        %v2810 = vxor.u32 %v2802, 2147483648
        %v2811 = vxor.u32 %v2803, 2147483648
        %v2812 = vxor.u32 %v2804, 2147483648
        %v2813 = vmul.f32 %v2805, 1.442695
        %v2814 = vpow.pop %v2813
        %v2815 = vmul.f32 %v2806, 1.442695
        %v2816 = vpow.pop %v2815
        %v2817 = vmul.f32 %v2807, 1.442695
        %v2818 = vpow.pop %v2817
        %v2819 = vmul.f32 %v2808, 1.442695
        %v2820 = vpow.pop %v2819
        %v2821 = vmul.f32 %v2809, 1.442695
        %v2822 = vpow.pop %v2821
        %v2823 = vmul.f32 %v2810, 1.442695
        %v2824 = vpow.pop %v2823
        %v2825 = vmul.f32 %v2811, 1.442695
        %v2826 = vpow.pop %v2825
        %v2827 = vmul.f32 %v2812, 1.442695
        %v2828 = vpow.pop %v2827
        %v2829 = vadd.f32 %v2814, 1.0
        %v2830 = vadd.f32 %v2816, 1.0
        %v2831 = vadd.f32 %v2818, 1.0
        %v2832 = vadd.f32 %v2820, 1.0
        %v2833 = vadd.f32 %v2822, 1.0
        %v2834 = vadd.f32 %v2824, 1.0
        %v2835 = vadd.f32 %v2826, 1.0
        %v2836 = vadd.f32 %v2828, 1.0
        %v2837 = vrcp.pop %v2829
        %v2838 = vmul.f32 1.0, %v2837
        %v2839 = vrcp.pop %v2830
        %v2840 = vmul.f32 1.0, %v2839
        %v2841 = vrcp.pop %v2831
        %v2842 = vmul.f32 1.0, %v2841
        %v2843 = vrcp.pop %v2832
        %v2844 = vmul.f32 1.0, %v2843
        %v2845 = vrcp.pop %v2833
        %v2846 = vmul.f32 1.0, %v2845
        %v2847 = vrcp.pop %v2834
        %v2848 = vmul.f32 1.0, %v2847
        %v2849 = vrcp.pop %v2835
        %v2850 = vmul.f32 1.0, %v2849
        %v2851 = vrcp.pop %v2836
        %v2852 = vmul.f32 1.0, %v2851
        %v2853 = vmul.f32 %v2797, %v2838
        %v2854 = vmul.f32 %v2798, %v2840
        %v2855 = vmul.f32 %v2799, %v2842
        %v2856 = vmul.f32 %v2800, %v2844
        %v2857 = vmul.f32 %v2801, %v2846
        %v2858 = vmul.f32 %v2802, %v2848
        %v2859 = vmul.f32 %v2803, %v2850
        %v2860 = vmul.f32 %v2804, %v2852
        %v2861 = vld [vmem:[%s13] sm:$0x1]
        %v2862 = vmul.f32 %v2860, %v694
        %v2863 = vmul.f32 %v2853, %v695
        %v2864 = vmul.f32 %v2854, %v696
        %v2865 = vmul.f32 %v2855, %v697
        %v2866 = vmul.f32 %v2856, %v698
        %v2867 = vmul.f32 %v2857, %v699
        %v2868 = vmul.f32 %v2858, %v700
        %v2869 = vmul.f32 %v2859, %v701
        %v2870 = vld [vmem:[#allocation5] sm:$0xf]
        %v2871 = vld [vmem:[#allocation5 + $0x4] sm:$0xf]
        %v2872 = vld [vmem:[#allocation5 + $0x8] sm:$0xf]
        %v2873 = vld [vmem:[#allocation5 + $0xc] sm:$0xf]
        %v2874 = vld [vmem:[#allocation5 + $0x10] sm:$0xf]
        %v2875 = vld [vmem:[#allocation5 + $0x14] sm:$0xf]
        %v2876 = vld [vmem:[#allocation5 + $0x18] sm:$0xf]
        %v2877 = vld [vmem:[#allocation5 + $0x1c] sm:$0xf]
        %v2878 = vld [vmem:[#allocation5 + $0x20] sm:$0xf]
        %v2879 = vld [vmem:[#allocation5 + $0x24] sm:$0xf]
        %v2880 = vld [vmem:[#allocation5 + $0x28] sm:$0xf]
        %v2881 = vld [vmem:[#allocation5 + $0x2c] sm:$0xf]
        %v2882 = vld [vmem:[#allocation5 + $0x30] sm:$0xf]
        %v2883 = vld [vmem:[#allocation5 + $0x34] sm:$0xf]
        %v2884 = vld [vmem:[#allocation5 + $0x38] sm:$0xf]
        %v2885 = vld [vmem:[#allocation5 + $0x3c] sm:$0xf]
        %v2886 = vld [vmem:[#allocation5 + $0x40] sm:$0xf]
        %v2887 = vld [vmem:[#allocation5 + $0x44] sm:$0xf]
        %v2888 = vld [vmem:[#allocation5 + $0x48] sm:$0xf]
        %v2889 = vld [vmem:[#allocation5 + $0x4c] sm:$0xf]
        %v2890 = vld [vmem:[#allocation5 + $0x50] sm:$0xf]
        %v2891 = vld [vmem:[#allocation5 + $0x54] sm:$0xf]
        %v2892 = vld [vmem:[#allocation5 + $0x58] sm:$0xf]
        %v2893 = vld [vmem:[#allocation5 + $0x5c] sm:$0xf]
        %v2894 = vld [vmem:[#allocation5 + $0x60] sm:$0xf]
        %v2895 = vld [vmem:[#allocation5 + $0x64] sm:$0xf]
        %v2896 = vld [vmem:[#allocation5 + $0x68] sm:$0xf]
        %v2897 = vld [vmem:[#allocation5 + $0x6c] sm:$0xf]
        %v2898 = vld [vmem:[#allocation5 + $0x70] sm:$0xf]
        %v2899 = vld [vmem:[#allocation5 + $0x74] sm:$0xf]
        %v2900 = vld [vmem:[#allocation5 + $0x78] sm:$0xf]
        %v2901 = vld [vmem:[#allocation5 + $0x7c] sm:$0xf]
        %v2902 = vld [vmem:[#allocation5 + $0x80] sm:$0xf]
        %v2903 = vld [vmem:[#allocation5 + $0x84] sm:$0xf]
        %v2904 = vld [vmem:[#allocation5 + $0x88] sm:$0xf]
        %v2905 = vld [vmem:[#allocation5 + $0x8c] sm:$0xf]
        %v2906 = vld [vmem:[#allocation5 + $0x90] sm:$0xf]
        %v2907 = vld [vmem:[#allocation5 + $0x94] sm:$0xf]
        %v2908 = vld [vmem:[#allocation5 + $0x98] sm:$0xf]
        %v2909 = vld [vmem:[#allocation5 + $0x9c] sm:$0xf]
        %v2910 = vld [vmem:[#allocation5 + $0xa0] sm:$0xf]
        %v2911 = vld [vmem:[#allocation5 + $0xa4] sm:$0xf]
        %v2912 = vld [vmem:[#allocation5 + $0xa8] sm:$0xf]
        %v2913 = vld [vmem:[#allocation5 + $0xac] sm:$0xf]
        %v2914 = vld [vmem:[#allocation5 + $0xb0] sm:$0xf]
        %v2915 = vld [vmem:[#allocation5 + $0xb4] sm:$0xf]
        %v2916 = vld [vmem:[#allocation5 + $0xb8] sm:$0xf]
        %v2917 = vld [vmem:[#allocation5 + $0xbc] sm:$0xf]
        %v2918 = vrot.slane %v2862, 7
        %v2919 = vrot.slane %v2863, 7
        %v2920 = vrot.slane %v2864, 7
        %v2921 = vrot.slane %v2865, 7
        %v2922 = vrot.slane %v2866, 7
        %v2923 = vrot.slane %v2867, 7
        %v2924 = vrot.slane %v2868, 7
        %v2925 = vrot.slane %v2869, 7
        %v2926 = vsel %vm1281, %v2924, %v2925
        %v2927 = vsel %vm1281, %v2923, %v2924
        %v2928 = vsel %vm1281, %v2922, %v2923
        %v2929 = vsel %vm1281, %v2921, %v2922
        %v2930 = vsel %vm1281, %v2920, %v2921
        %v2931 = vsel %vm1281, %v2919, %v2920
        %v2932 = vsel %vm1281, %v2918, %v2919
        %v2933 = vsel %vm1281, %v2925, %v2918
        %v2934 = vmul.f32 %v2933, %v742
        %v2935 = vmul.f32 %v2932, %v743
        %v2936 = vmul.f32 %v2931, %v744
        %v2937 = vmul.f32 %v2930, %v745
        %v2938 = vmul.f32 %v2929, %v746
        %v2939 = vmul.f32 %v2928, %v747
        %v2940 = vmul.f32 %v2927, %v748
        %v2941 = vmul.f32 %v2926, %v749
        %v2942 = vpack.c.bf16 %v2935, %v2934
        %v2943 = vpack.c.bf16 %v2937, %v2936
        %v2944 = vpack.c.bf16 %v2939, %v2938
        %v2945 = vpack.c.bf16 %v2941, %v2940
        %v2946 = vpack.c.bf16 %v2863, %v2862
        %v2947 = vpack.c.bf16 %v2865, %v2864
        %v2948 = vpack.c.bf16 %v2867, %v2866
        %v2949 = vpack.c.bf16 %v2869, %v2868
        %v2950 = vrot.slane %v2862, 1
        %v2951 = vrot.slane %v2863, 1
        %v2952 = vrot.slane %v2864, 1
        %v2953 = vrot.slane %v2865, 1
        %v2954 = vrot.slane %v2866, 1
        %v2955 = vrot.slane %v2867, 1
        %v2956 = vrot.slane %v2868, 1
        %v2957 = vrot.slane %v2869, 1
        %v2958 = vsel %vm1314, %v2956, %v2957
        %v2959 = vsel %vm1314, %v2955, %v2956
        %v2960 = vsel %vm1314, %v2954, %v2955
        %v2961 = vsel %vm1314, %v2953, %v2954
        %v2962 = vsel %vm1314, %v2952, %v2953
        %v2963 = vsel %vm1314, %v2951, %v2952
        %v2964 = vsel %vm1314, %v2950, %v2951
        %v2965 = vsel %vm1314, %v2957, %v2950
        %v2966 = vmul.f32 %v2964, %v766
        %v2967 = vmul.f32 %v2963, %v767
        %v2968 = vmul.f32 %v2962, %v768
        %v2969 = vmul.f32 %v2961, %v769
        %v2970 = vmul.f32 %v2960, %v770
        %v2971 = vmul.f32 %v2959, %v771
        %v2972 = vmul.f32 %v2958, %v772
        %v2973 = vmul.f32 %v2965, %v773
        %v2974 = vpack.c.bf16 %v2967, %v2966
        %v2975 = vpack.c.bf16 %v2969, %v2968
        %v2976 = vpack.c.bf16 %v2971, %v2970
        %v2977 = vpack.c.bf16 %v2973, %v2972
        %s2978 = scalar_lea.vmem [#allocation5], 192
        %v2979 = vld [vmem:[%s2978] sm:$0xf]
        %v2980 = vld [vmem:[%s2978 + $0x4] sm:$0xf]
        %v2981 = vld [vmem:[%s2978 + $0x8] sm:$0xf]
        %v2982 = vld [vmem:[%s2978 + $0xc] sm:$0xf]
        %v2983 = vld [vmem:[%s2978 + $0x10] sm:$0xf]
        %v2984 = vld [vmem:[%s2978 + $0x14] sm:$0xf]
        %v2985 = vld [vmem:[%s2978 + $0x18] sm:$0xf]
        %v2986 = vld [vmem:[%s2978 + $0x1c] sm:$0xf]
        %v2987 = vld [vmem:[%s2978 + $0x20] sm:$0xf]
        %v2988 = vld [vmem:[%s2978 + $0x24] sm:$0xf]
        %v2989 = vld [vmem:[%s2978 + $0x28] sm:$0xf]
        %v2990 = vld [vmem:[%s2978 + $0x2c] sm:$0xf]
        %v2991 = vld [vmem:[%s2978 + $0x30] sm:$0xf]
        %v2992 = vld [vmem:[%s2978 + $0x34] sm:$0xf]
        %v2993 = vld [vmem:[%s2978 + $0x38] sm:$0xf]
        %v2994 = vld [vmem:[%s2978 + $0x3c] sm:$0xf]
        %v2995 = vld [vmem:[%s2978 + $0x40] sm:$0xf]
        %v2996 = vld [vmem:[%s2978 + $0x44] sm:$0xf]
        %v2997 = vld [vmem:[%s2978 + $0x48] sm:$0xf]
        %v2998 = vld [vmem:[%s2978 + $0x4c] sm:$0xf]
        %v2999 = vld [vmem:[%s2978 + $0x50] sm:$0xf]
        %v3000 = vld [vmem:[%s2978 + $0x54] sm:$0xf]
        %v3001 = vld [vmem:[%s2978 + $0x58] sm:$0xf]
        %v3002 = vld [vmem:[%s2978 + $0x5c] sm:$0xf]
        %v3003 = vld [vmem:[%s2978 + $0x60] sm:$0xf]
        %v3004 = vld [vmem:[%s2978 + $0x64] sm:$0xf]
        %v3005 = vld [vmem:[%s2978 + $0x68] sm:$0xf]
        %v3006 = vld [vmem:[%s2978 + $0x6c] sm:$0xf]
        %v3007 = vld [vmem:[%s2978 + $0x70] sm:$0xf]
        %v3008 = vld [vmem:[%s2978 + $0x74] sm:$0xf]
        %v3009 = vld [vmem:[%s2978 + $0x78] sm:$0xf]
        %v3010 = vld [vmem:[%s2978 + $0x7c] sm:$0xf]
        %v3011 = vld [vmem:[%s2978 + $0x80] sm:$0xf]
        %v3012 = vld [vmem:[%s2978 + $0x84] sm:$0xf]
        %v3013 = vld [vmem:[%s2978 + $0x88] sm:$0xf]
        %v3014 = vld [vmem:[%s2978 + $0x8c] sm:$0xf]
        %v3015 = vld [vmem:[%s2978 + $0x90] sm:$0xf]
        %v3016 = vld [vmem:[%s2978 + $0x94] sm:$0xf]
        %v3017 = vld [vmem:[%s2978 + $0x98] sm:$0xf]
        %v3018 = vld [vmem:[%s2978 + $0x9c] sm:$0xf]
        %v3019 = vld [vmem:[%s2978 + $0xa0] sm:$0xf]
        %v3020 = vld [vmem:[%s2978 + $0xa4] sm:$0xf]
        %v3021 = vld [vmem:[%s2978 + $0xa8] sm:$0xf]
        %v3022 = vld [vmem:[%s2978 + $0xac] sm:$0xf]
        %v3023 = vld [vmem:[%s2978 + $0xb0] sm:$0xf]
        %v3024 = vld [vmem:[%s2978 + $0xb4] sm:$0xf]
        %v3025 = vld [vmem:[%s2978 + $0xb8] sm:$0xf]
        %v3026 = vld [vmem:[%s2978 + $0xbc] sm:$0xf]
        %v3027 = vrot.slane %v2853, 7
        %v3028 = vrot.slane %v2854, 7
        %v3029 = vrot.slane %v2855, 7
        %v3030 = vrot.slane %v2856, 7
        %v3031 = vrot.slane %v2857, 7
        %v3032 = vrot.slane %v2858, 7
        %v3033 = vrot.slane %v2859, 7
        %v3034 = vrot.slane %v2860, 7
        %v3035 = vsel %vm1281, %v3033, %v3034
        %v3036 = vsel %vm1281, %v3032, %v3033
        %v3037 = vsel %vm1281, %v3031, %v3032
        %v3038 = vsel %vm1281, %v3030, %v3031
        %v3039 = vsel %vm1281, %v3029, %v3030
        %v3040 = vsel %vm1281, %v3028, %v3029
        %v3041 = vsel %vm1281, %v3027, %v3028
        %v3042 = vsel %vm1281, %v3034, %v3027
        %v3043 = vmul.f32 %v3042, %v742
        %v3044 = vmul.f32 %v3041, %v743
        %v3045 = vmul.f32 %v3040, %v744
        %v3046 = vmul.f32 %v3039, %v745
        %v3047 = vmul.f32 %v3038, %v746
        %v3048 = vmul.f32 %v3037, %v747
        %v3049 = vmul.f32 %v3036, %v748
        %v3050 = vmul.f32 %v3035, %v749
        %v3051 = vpack.c.bf16 %v3044, %v3043
        %v3052 = vpack.c.bf16 %v3046, %v3045
        %v3053 = vpack.c.bf16 %v3048, %v3047
        %v3054 = vpack.c.bf16 %v3050, %v3049
        %v3055 = vpack.c.bf16 %v2854, %v2853
        %v3056 = vpack.c.bf16 %v2856, %v2855
        %v3057 = vpack.c.bf16 %v2858, %v2857
        %v3058 = vpack.c.bf16 %v2860, %v2859
        %v3059 = vrot.slane %v2853, 1
        %v3060 = vrot.slane %v2854, 1
        %v3061 = vrot.slane %v2855, 1
        %v3062 = vrot.slane %v2856, 1
        %v3063 = vrot.slane %v2857, 1
        %v3064 = vrot.slane %v2858, 1
        %v3065 = vrot.slane %v2859, 1
        %v3066 = vrot.slane %v2860, 1
        %v3067 = vsel %vm1314, %v3065, %v3066
        %v3068 = vsel %vm1314, %v3064, %v3065
        %v3069 = vsel %vm1314, %v3063, %v3064
        %v3070 = vsel %vm1314, %v3062, %v3063
        %v3071 = vsel %vm1314, %v3061, %v3062
        %v3072 = vsel %vm1314, %v3060, %v3061
        %v3073 = vsel %vm1314, %v3059, %v3060
        %v3074 = vsel %vm1314, %v3066, %v3059
        %v3075 = vmul.f32 %v3073, %v766
        %v3076 = vmul.f32 %v3072, %v767
        %v3077 = vmul.f32 %v3071, %v768
        %v3078 = vmul.f32 %v3070, %v769
        %v3079 = vmul.f32 %v3069, %v770
        %v3080 = vmul.f32 %v3068, %v771
        %v3081 = vmul.f32 %v3067, %v772
        %v3082 = vmul.f32 %v3074, %v773
        %v3083 = vpack.c.bf16 %v3076, %v3075
        %v3084 = vpack.c.bf16 %v3078, %v3077
        %v3085 = vpack.c.bf16 %v3080, %v3079
        %v3086 = vpack.c.bf16 %v3082, %v3081
        %v3135 = vunpack.c.l.b16 %v2979
        %v3136 = vunpack.c.l.b16 %v2980
        %v3137 = vunpack.c.l.b16 %v2981
        %v3138 = vunpack.c.l.b16 %v2982
        %v3139 = vunpack.c.l.b16 %v2983
        %v3140 = vunpack.c.l.b16 %v2984
        %v3141 = vunpack.c.l.b16 %v2985
        %v3142 = vunpack.c.l.b16 %v2986
        %v3143 = vunpack.c.l.b16 %v2987
        %v3144 = vunpack.c.l.b16 %v2988
        %v3145 = vunpack.c.l.b16 %v2989
        %v3146 = vunpack.c.l.b16 %v2990
        %v3147 = vunpack.c.l.b16 %v2991
        %v3148 = vunpack.c.l.b16 %v2992
        %v3149 = vunpack.c.l.b16 %v2993
        %v3150 = vunpack.c.l.b16 %v2994
        %v3151 = vunpack.c.l.b16 %v2995
        %v3152 = vunpack.c.l.b16 %v2996
        %v3153 = vunpack.c.l.b16 %v2997
        %v3154 = vunpack.c.l.b16 %v2998
        %v3155 = vunpack.c.l.b16 %v2999
        %v3156 = vunpack.c.l.b16 %v3000
        %v3157 = vunpack.c.l.b16 %v3001
        %v3158 = vunpack.c.l.b16 %v3002
        %v3159 = vunpack.c.l.b16 %v3003
        %v3160 = vunpack.c.l.b16 %v3004
        %v3161 = vunpack.c.l.b16 %v3005
        %v3162 = vunpack.c.l.b16 %v3006
        %v3163 = vunpack.c.l.b16 %v3007
        %v3164 = vunpack.c.l.b16 %v3008
        %v3165 = vunpack.c.l.b16 %v3009
        %v3166 = vunpack.c.l.b16 %v3010
        %v3167 = vunpack.c.l.b16 %v3011
        %v3168 = vunpack.c.l.b16 %v3012
        %v3169 = vunpack.c.l.b16 %v3013
        %v3170 = vunpack.c.l.b16 %v3014
        %v3171 = vunpack.c.l.b16 %v3015
        %v3172 = vunpack.c.l.b16 %v3016
        %v3173 = vunpack.c.l.b16 %v3017
        %v3174 = vunpack.c.l.b16 %v3018
        %v3175 = vunpack.c.l.b16 %v3019
        %v3176 = vunpack.c.l.b16 %v3020
        %v3177 = vunpack.c.l.b16 %v3021
        %v3178 = vunpack.c.l.b16 %v3022
        %v3179 = vunpack.c.l.b16 %v3023
        %v3180 = vunpack.c.l.b16 %v3024
        %v3181 = vunpack.c.l.b16 %v3025
        %v3182 = vunpack.c.l.b16 %v3026
        %v3183 = vpack.c.b16 %v3136, %v3135
        %v3184 = vpack.c.b16 %v3138, %v3137
        %v3185 = vpack.c.b16 %v3140, %v3139
        %v3186 = vpack.c.b16 %v3142, %v3141
        %v3187 = vpack.c.b16 %v3144, %v3143
        %v3188 = vpack.c.b16 %v3146, %v3145
        %v3189 = vpack.c.b16 %v3148, %v3147
        %v3190 = vpack.c.b16 %v3150, %v3149
        %v3191 = vpack.c.b16 %v3152, %v3151
        %v3192 = vpack.c.b16 %v3154, %v3153
        %v3193 = vpack.c.b16 %v3156, %v3155
        %v3194 = vpack.c.b16 %v3158, %v3157
        %v3195 = vpack.c.b16 %v3160, %v3159
        %v3196 = vpack.c.b16 %v3162, %v3161
        %v3197 = vpack.c.b16 %v3164, %v3163
        %v3198 = vpack.c.b16 %v3166, %v3165
        %v3199 = vpack.c.b16 %v3168, %v3167
        %v3200 = vpack.c.b16 %v3170, %v3169
        %v3201 = vpack.c.b16 %v3172, %v3171
        %v3202 = vpack.c.b16 %v3174, %v3173
        %v3203 = vpack.c.b16 %v3176, %v3175
        %v3204 = vpack.c.b16 %v3178, %v3177
        %v3205 = vpack.c.b16 %v3180, %v3179
        %v3206 = vpack.c.b16 %v3182, %v3181
        %3231 = vmatprep.subr.bf16.mxu0 0
        %3232 = vmatpush1.bf16.msra.mxu0 %v3190
        %3233 = vmatprep.subr.bf16.mxu0 0
        %3234 = vmatpush1.bf16.msra.mxu0 %v3189
        %3235 = vmatprep.subr.bf16.mxu0 0
        %3236 = vmatpush1.bf16.msra.mxu0 %v3188
        %3237 = vmatprep.subr.bf16.mxu0 0
        %3238 = vmatpush1.bf16.msra.mxu0 %v3187
        %3239 = vmatprep.subr.bf16.mxu0 0
        %3240 = vmatpush1.bf16.msra.mxu0 %v3186
        %3241 = vmatprep.subr.bf16.mxu0 0
        %3242 = vmatpush1.bf16.msra.mxu0 %v3185
        %3243 = vmatprep.subr.bf16.mxu0 0
        %3244 = vmatpush1.bf16.msra.mxu0 %v3184
        %3245 = vmatprep.subr.bf16.mxu0 0
        %3246 = vmatpush1.bf16.msra.mxu0 %v3183
        %3247 = vmatprep.subr.bf16.mxu0 0
        %3248 = vmatpush2.bf16.msra.mxu0 %v3198
        %3249 = vmatprep.subr.bf16.mxu0 0
        %3250 = vmatpush2.bf16.msra.mxu0 %v3197
        %3251 = vmatprep.subr.bf16.mxu0 0
        %3252 = vmatpush2.bf16.msra.mxu0 %v3196
        %3253 = vmatprep.subr.bf16.mxu0 0
        %3254 = vmatpush2.bf16.msra.mxu0 %v3195
        %3255 = vmatprep.subr.bf16.mxu0 0
        %3256 = vmatpush2.bf16.msra.mxu0 %v3194
        %3257 = vmatprep.subr.bf16.mxu0 0
        %3258 = vmatpush2.bf16.msra.mxu0 %v3193
        %3259 = vmatprep.subr.bf16.mxu0 0
        %3260 = vmatpush2.bf16.msra.mxu0 %v3192
        %3261 = vmatprep.subr.bf16.mxu0 0
        %3262 = vmatpush2.bf16.msra.mxu0 %v3191
        %3263 = vmatprep.mubr.bf16.mxu0 %v3055
        %3264 = vmatmul.mubr.bf16.gmra.mxu0 %v3051
        %v3265 = vpop.f32.mrf.mxu0
        %v3266 = vadd.f32 0.0, %v3265
        %v3267 = vpop.f32.mrf.mxu0
        %v3268 = vpop.f32.mrf.mxu0
        %v3269 = vadd.f32 0.0, %v3268
        %v3270 = vpop.f32.mrf.mxu0
        %3271 = vmatprep.mubr.bf16.mxu0 %v3056
        %3272 = vmatmul.mubr.bf16.gmra.mxu0 %v3052
        %v3273 = vpop.f32.mrf.mxu0
        %v3274 = vadd.f32 0.0, %v3273
        %v3275 = vpop.f32.mrf.mxu0
        %v3276 = vpop.f32.mrf.mxu0
        %v3277 = vadd.f32 0.0, %v3276
        %v3278 = vpop.f32.mrf.mxu0
        %3279 = vmatprep.mubr.bf16.mxu0 %v3057
        %3280 = vmatmul.mubr.bf16.gmra.mxu0 %v3053
        %v3281 = vpop.f32.mrf.mxu0
        %v3282 = vadd.f32 0.0, %v3281
        %v3283 = vpop.f32.mrf.mxu0
        %v3284 = vpop.f32.mrf.mxu0
        %v3285 = vadd.f32 0.0, %v3284
        %v3286 = vpop.f32.mrf.mxu0
        %3287 = vmatprep.mubr.bf16.mxu0 %v3058
        %3288 = vmatmul.mubr.bf16.gmra.mxu0 %v3054
        %v3289 = vpop.f32.mrf.mxu0
        %v3290 = vadd.f32 0.0, %v3289
        %v3291 = vpop.f32.mrf.mxu0
        %v3292 = vpop.f32.mrf.mxu0
        %v3293 = vadd.f32 0.0, %v3292
        %v3294 = vpop.f32.mrf.mxu0
        %3295 = vdwg.mxu0
        %3296 = vmatprep.subr.bf16.mxu0 0
        %3297 = vmatpush1.bf16.msra.mxu0 %v3206
        %3298 = vmatprep.subr.bf16.mxu0 0
        %3299 = vmatpush1.bf16.msra.mxu0 %v3205
        %3300 = vmatprep.subr.bf16.mxu0 0
        %3301 = vmatpush1.bf16.msra.mxu0 %v3204
        %3302 = vmatprep.subr.bf16.mxu0 0
        %3303 = vmatpush1.bf16.msra.mxu0 %v3203
        %3304 = vmatprep.subr.bf16.mxu0 0
        %3305 = vmatpush1.bf16.msra.mxu0 %v3202
        %3306 = vmatprep.subr.bf16.mxu0 0
        %3307 = vmatpush1.bf16.msra.mxu0 %v3201
        %3308 = vmatprep.subr.bf16.mxu0 0
        %3309 = vmatpush1.bf16.msra.mxu0 %v3200
        %3310 = vmatprep.subr.bf16.mxu0 0
        %3311 = vmatpush1.bf16.msra.mxu0 %v3199
        %3312 = vmatprep.subr.bf16.mxu0 0
        %3313 = vmatpush2.bf16.msra.mxu0 0
        %3314 = vmatprep.subr.bf16.mxu0 0
        %3315 = vmatpush2.bf16.msra.mxu0 0
        %3316 = vmatprep.subr.bf16.mxu0 0
        %3317 = vmatpush2.bf16.msra.mxu0 0
        %3318 = vmatprep.subr.bf16.mxu0 0
        %3319 = vmatpush2.bf16.msra.mxu0 0
        %3320 = vmatprep.subr.bf16.mxu0 0
        %3321 = vmatpush2.bf16.msra.mxu0 0
        %3322 = vmatprep.subr.bf16.mxu0 0
        %3323 = vmatpush2.bf16.msra.mxu0 0
        %3324 = vmatprep.subr.bf16.mxu0 0
        %3325 = vmatpush2.bf16.msra.mxu0 0
        %3326 = vmatprep.subr.bf16.mxu0 0
        %3327 = vmatpush2.bf16.msra.mxu0 0
        %3328 = vmatprep.mubr.bf16.mxu0 0
        %3329 = vmatmul.mubr.bf16.gmra.mxu0 %v3083
        %v3330 = vpop.f32.mrf.mxu0
        %v3331 = vadd.f32 %v3266, %v3330
        %v3332 = vpop.f32.mrf.mxu0
        %v3333 = vpop.f32.mrf.mxu0
        %v3334 = vadd.f32 %v3269, %v3333
        %v3335 = vpop.f32.mrf.mxu0
        %3336 = vmatprep.mubr.bf16.mxu0 0
        %3337 = vmatmul.mubr.bf16.gmra.mxu0 %v3084
        %v3338 = vpop.f32.mrf.mxu0
        %v3339 = vadd.f32 %v3274, %v3338
        %v3340 = vpop.f32.mrf.mxu0
        %v3341 = vpop.f32.mrf.mxu0
        %v3342 = vadd.f32 %v3277, %v3341
        %v3343 = vpop.f32.mrf.mxu0
        %3344 = vmatprep.mubr.bf16.mxu0 0
        %3345 = vmatmul.mubr.bf16.gmra.mxu0 %v3085
        %v3346 = vpop.f32.mrf.mxu0
        %v3347 = vadd.f32 %v3282, %v3346
        %v3348 = vpop.f32.mrf.mxu0
        %v3349 = vpop.f32.mrf.mxu0
        %v3350 = vadd.f32 %v3285, %v3349
        %v3351 = vpop.f32.mrf.mxu0
        %3352 = vmatprep.mubr.bf16.mxu0 0
        %3353 = vmatmul.mubr.bf16.gmra.mxu0 %v3086
        %v3354 = vpop.f32.mrf.mxu0
        %v3355 = vadd.f32 %v3290, %v3354
        %v3356 = vpop.f32.mrf.mxu0
        %v3357 = vpop.f32.mrf.mxu0
        %v3358 = vadd.f32 %v3293, %v3357
        %v3359 = vpop.f32.mrf.mxu0
        %3360 = vdwg.mxu0
        %v3409 = vunpack.c.l.b16 %v2870
        %v3410 = vunpack.c.l.b16 %v2871
        %v3411 = vunpack.c.l.b16 %v2872
        %v3412 = vunpack.c.l.b16 %v2873
        %v3413 = vunpack.c.l.b16 %v2874
        %v3414 = vunpack.c.l.b16 %v2875
        %v3415 = vunpack.c.l.b16 %v2876
        %v3416 = vunpack.c.l.b16 %v2877
        %v3417 = vunpack.c.l.b16 %v2878
        %v3418 = vunpack.c.l.b16 %v2879
        %v3419 = vunpack.c.l.b16 %v2880
        %v3420 = vunpack.c.l.b16 %v2881
        %v3421 = vunpack.c.l.b16 %v2882
        %v3422 = vunpack.c.l.b16 %v2883
        %v3423 = vunpack.c.l.b16 %v2884
        %v3424 = vunpack.c.l.b16 %v2885
        %v3425 = vunpack.c.l.b16 %v2886
        %v3426 = vunpack.c.l.b16 %v2887
        %v3427 = vunpack.c.l.b16 %v2888
        %v3428 = vunpack.c.l.b16 %v2889
        %v3429 = vunpack.c.l.b16 %v2890
        %v3430 = vunpack.c.l.b16 %v2891
        %v3431 = vunpack.c.l.b16 %v2892
        %v3432 = vunpack.c.l.b16 %v2893
        %v3433 = vunpack.c.l.b16 %v2894
        %v3434 = vunpack.c.l.b16 %v2895
        %v3435 = vunpack.c.l.b16 %v2896
        %v3436 = vunpack.c.l.b16 %v2897
        %v3437 = vunpack.c.l.b16 %v2898
        %v3438 = vunpack.c.l.b16 %v2899
        %v3439 = vunpack.c.l.b16 %v2900
        %v3440 = vunpack.c.l.b16 %v2901
        %v3441 = vunpack.c.l.b16 %v2902
        %v3442 = vunpack.c.l.b16 %v2903
        %v3443 = vunpack.c.l.b16 %v2904
        %v3444 = vunpack.c.l.b16 %v2905
        %v3445 = vunpack.c.l.b16 %v2906
        %v3446 = vunpack.c.l.b16 %v2907
        %v3447 = vunpack.c.l.b16 %v2908
        %v3448 = vunpack.c.l.b16 %v2909
        %v3449 = vunpack.c.l.b16 %v2910
        %v3450 = vunpack.c.l.b16 %v2911
        %v3451 = vunpack.c.l.b16 %v2912
        %v3452 = vunpack.c.l.b16 %v2913
        %v3453 = vunpack.c.l.b16 %v2914
        %v3454 = vunpack.c.l.b16 %v2915
        %v3455 = vunpack.c.l.b16 %v2916
        %v3456 = vunpack.c.l.b16 %v2917
        %v3457 = vpack.c.b16 %v3410, %v3409
        %v3458 = vpack.c.b16 %v3412, %v3411
        %v3459 = vpack.c.b16 %v3414, %v3413
        %v3460 = vpack.c.b16 %v3416, %v3415
        %v3461 = vpack.c.b16 %v3418, %v3417
        %v3462 = vpack.c.b16 %v3420, %v3419
        %v3463 = vpack.c.b16 %v3422, %v3421
        %v3464 = vpack.c.b16 %v3424, %v3423
        %v3465 = vpack.c.b16 %v3426, %v3425
        %v3466 = vpack.c.b16 %v3428, %v3427
        %v3467 = vpack.c.b16 %v3430, %v3429
        %v3468 = vpack.c.b16 %v3432, %v3431
        %v3469 = vpack.c.b16 %v3434, %v3433
        %v3470 = vpack.c.b16 %v3436, %v3435
        %v3471 = vpack.c.b16 %v3438, %v3437
        %v3472 = vpack.c.b16 %v3440, %v3439
        %v3473 = vpack.c.b16 %v3442, %v3441
        %v3474 = vpack.c.b16 %v3444, %v3443
        %v3475 = vpack.c.b16 %v3446, %v3445
        %v3476 = vpack.c.b16 %v3448, %v3447
        %v3477 = vpack.c.b16 %v3450, %v3449
        %v3478 = vpack.c.b16 %v3452, %v3451
        %v3479 = vpack.c.b16 %v3454, %v3453
        %v3480 = vpack.c.b16 %v3456, %v3455
        %3505 = vmatprep.subr.bf16.mxu0 0
        %3506 = vmatpush1.bf16.msra.mxu0 %v3464
        %3507 = vmatprep.subr.bf16.mxu0 0
        %3508 = vmatpush1.bf16.msra.mxu0 %v3463
        %3509 = vmatprep.subr.bf16.mxu0 0
        %3510 = vmatpush1.bf16.msra.mxu0 %v3462
        %3511 = vmatprep.subr.bf16.mxu0 0
        %3512 = vmatpush1.bf16.msra.mxu0 %v3461
        %3513 = vmatprep.subr.bf16.mxu0 0
        %3514 = vmatpush1.bf16.msra.mxu0 %v3460
        %3515 = vmatprep.subr.bf16.mxu0 0
        %3516 = vmatpush1.bf16.msra.mxu0 %v3459
        %3517 = vmatprep.subr.bf16.mxu0 0
        %3518 = vmatpush1.bf16.msra.mxu0 %v3458
        %3519 = vmatprep.subr.bf16.mxu0 0
        %3520 = vmatpush1.bf16.msra.mxu0 %v3457
        %3521 = vmatprep.subr.bf16.mxu0 0
        %3522 = vmatpush2.bf16.msra.mxu0 %v3472
        %3523 = vmatprep.subr.bf16.mxu0 0
        %3524 = vmatpush2.bf16.msra.mxu0 %v3471
        %3525 = vmatprep.subr.bf16.mxu0 0
        %3526 = vmatpush2.bf16.msra.mxu0 %v3470
        %3527 = vmatprep.subr.bf16.mxu0 0
        %3528 = vmatpush2.bf16.msra.mxu0 %v3469
        %3529 = vmatprep.subr.bf16.mxu0 0
        %3530 = vmatpush2.bf16.msra.mxu0 %v3468
        %3531 = vmatprep.subr.bf16.mxu0 0
        %3532 = vmatpush2.bf16.msra.mxu0 %v3467
        %3533 = vmatprep.subr.bf16.mxu0 0
        %3534 = vmatpush2.bf16.msra.mxu0 %v3466
        %3535 = vmatprep.subr.bf16.mxu0 0
        %3536 = vmatpush2.bf16.msra.mxu0 %v3465
        %3537 = vmatprep.mubr.bf16.mxu0 %v2946
        %3538 = vmatmul.mubr.bf16.gmra.mxu0 %v2942
        %v3539 = vpop.f32.mrf.mxu0
        %v3540 = vadd.f32 %v3331, %v3539
        %v3541 = vpop.f32.mrf.mxu0
        %v3542 = vpop.f32.mrf.mxu0
        %v3543 = vadd.f32 %v3334, %v3542
        %v3544 = vpop.f32.mrf.mxu0
        %3545 = vmatprep.mubr.bf16.mxu0 %v2947
        %3546 = vmatmul.mubr.bf16.gmra.mxu0 %v2943
        %v3547 = vpop.f32.mrf.mxu0
        %v3548 = vadd.f32 %v3339, %v3547
        %v3549 = vpop.f32.mrf.mxu0
        %v3550 = vpop.f32.mrf.mxu0
        %v3551 = vadd.f32 %v3342, %v3550
        %v3552 = vpop.f32.mrf.mxu0
        %3553 = vmatprep.mubr.bf16.mxu0 %v2948
        %3554 = vmatmul.mubr.bf16.gmra.mxu0 %v2944
        %v3555 = vpop.f32.mrf.mxu0
        %v3556 = vadd.f32 %v3347, %v3555
        %v3557 = vpop.f32.mrf.mxu0
        %v3558 = vpop.f32.mrf.mxu0
        %v3559 = vadd.f32 %v3350, %v3558
        %v3560 = vpop.f32.mrf.mxu0
        %3561 = vmatprep.mubr.bf16.mxu0 %v2949
        %3562 = vmatmul.mubr.bf16.gmra.mxu0 %v2945
        %v3563 = vpop.f32.mrf.mxu0
        %v3564 = vadd.f32 %v3355, %v3563
        %v3565 = vpop.f32.mrf.mxu0
        %v3566 = vpop.f32.mrf.mxu0
        %v3567 = vadd.f32 %v3358, %v3566
        %v3568 = vpop.f32.mrf.mxu0
        %3569 = vdwg.mxu0
        %3570 = vmatprep.subr.bf16.mxu0 0
        %3571 = vmatpush1.bf16.msra.mxu0 %v3480
        %3572 = vmatprep.subr.bf16.mxu0 0
        %3573 = vmatpush1.bf16.msra.mxu0 %v3479
        %3574 = vmatprep.subr.bf16.mxu0 0
        %3575 = vmatpush1.bf16.msra.mxu0 %v3478
        %3576 = vmatprep.subr.bf16.mxu0 0
        %3577 = vmatpush1.bf16.msra.mxu0 %v3477
        %3578 = vmatprep.subr.bf16.mxu0 0
        %3579 = vmatpush1.bf16.msra.mxu0 %v3476
        %3580 = vmatprep.subr.bf16.mxu0 0
        %3581 = vmatpush1.bf16.msra.mxu0 %v3475
        %3582 = vmatprep.subr.bf16.mxu0 0
        %3583 = vmatpush1.bf16.msra.mxu0 %v3474
        %3584 = vmatprep.subr.bf16.mxu0 0
        %3585 = vmatpush1.bf16.msra.mxu0 %v3473
        %3586 = vmatprep.subr.bf16.mxu0 0
        %3587 = vmatpush2.bf16.msra.mxu0 0
        %3588 = vmatprep.subr.bf16.mxu0 0
        %3589 = vmatpush2.bf16.msra.mxu0 0
        %3590 = vmatprep.subr.bf16.mxu0 0
        %3591 = vmatpush2.bf16.msra.mxu0 0
        %3592 = vmatprep.subr.bf16.mxu0 0
        %3593 = vmatpush2.bf16.msra.mxu0 0
        %3594 = vmatprep.subr.bf16.mxu0 0
        %3595 = vmatpush2.bf16.msra.mxu0 0
        %3596 = vmatprep.subr.bf16.mxu0 0
        %3597 = vmatpush2.bf16.msra.mxu0 0
        %3598 = vmatprep.subr.bf16.mxu0 0
        %3599 = vmatpush2.bf16.msra.mxu0 0
        %3600 = vmatprep.subr.bf16.mxu0 0
        %3601 = vmatpush2.bf16.msra.mxu0 0
        %3602 = vmatprep.mubr.bf16.mxu0 0
        %3603 = vmatmul.mubr.bf16.gmra.mxu0 %v2974
        %v3604 = vpop.f32.mrf.mxu0
        %v3605 = vadd.f32 %v3540, %v3604
        %v3606 = vpop.f32.mrf.mxu0
        %v3607 = vpop.f32.mrf.mxu0
        %v3608 = vadd.f32 %v3543, %v3607
        %v3609 = vpop.f32.mrf.mxu0
        %3610 = vmatprep.mubr.bf16.mxu0 0
        %3611 = vmatmul.mubr.bf16.gmra.mxu0 %v2975
        %v3612 = vpop.f32.mrf.mxu0
        %v3613 = vadd.f32 %v3548, %v3612
        %v3614 = vpop.f32.mrf.mxu0
        %v3615 = vpop.f32.mrf.mxu0
        %v3616 = vadd.f32 %v3551, %v3615
        %v3617 = vpop.f32.mrf.mxu0
        %3618 = vmatprep.mubr.bf16.mxu0 0
        %3619 = vmatmul.mubr.bf16.gmra.mxu0 %v2976
        %v3620 = vpop.f32.mrf.mxu0
        %v3621 = vadd.f32 %v3556, %v3620
        %v3622 = vpop.f32.mrf.mxu0
        %v3623 = vpop.f32.mrf.mxu0
        %v3624 = vadd.f32 %v3559, %v3623
        %v3625 = vpop.f32.mrf.mxu0
        %3626 = vmatprep.mubr.bf16.mxu0 0
        %3627 = vmatmul.mubr.bf16.gmra.mxu0 %v2977
        %v3628 = vpop.f32.mrf.mxu0
        %v3629 = vadd.f32 %v3564, %v3628
        %v3630 = vpop.f32.mrf.mxu0
        %v3631 = vpop.f32.mrf.mxu0
        %v3632 = vadd.f32 %v3567, %v3631
        %v3633 = vpop.f32.mrf.mxu0
        %3634 = vdwg.mxu0
        %v3635 = vmul.f32 %v2854, %v718
        %v3636 = vmul.f32 %v2855, %v719
        %v3637 = vmul.f32 %v2856, %v720
        %v3638 = vmul.f32 %v2857, %v721
        %v3639 = vmul.f32 %v2858, %v722
        %v3640 = vmul.f32 %v2859, %v723
        %v3641 = vmul.f32 %v2860, %v724
        %v3642 = vmul.f32 %v2853, %v725
        %s3643 = scalar_lea.vmem [#allocation5], 384
        %v3644 = vld [vmem:[%s3643] sm:$0xf]
        %v3645 = vld [vmem:[%s3643 + $0x4] sm:$0xf]
        %v3646 = vld [vmem:[%s3643 + $0x8] sm:$0xf]
        %v3647 = vld [vmem:[%s3643 + $0xc] sm:$0xf]
        %v3648 = vld [vmem:[%s3643 + $0x10] sm:$0xf]
        %v3649 = vld [vmem:[%s3643 + $0x14] sm:$0xf]
        %v3650 = vld [vmem:[%s3643 + $0x18] sm:$0xf]
        %v3651 = vld [vmem:[%s3643 + $0x1c] sm:$0xf]
        %v3652 = vld [vmem:[%s3643 + $0x20] sm:$0xf]
        %v3653 = vld [vmem:[%s3643 + $0x24] sm:$0xf]
        %v3654 = vld [vmem:[%s3643 + $0x28] sm:$0xf]
        %v3655 = vld [vmem:[%s3643 + $0x2c] sm:$0xf]
        %v3656 = vld [vmem:[%s3643 + $0x30] sm:$0xf]
        %v3657 = vld [vmem:[%s3643 + $0x34] sm:$0xf]
        %v3658 = vld [vmem:[%s3643 + $0x38] sm:$0xf]
        %v3659 = vld [vmem:[%s3643 + $0x3c] sm:$0xf]
        %v3660 = vld [vmem:[%s3643 + $0x40] sm:$0xf]
        %v3661 = vld [vmem:[%s3643 + $0x44] sm:$0xf]
        %v3662 = vld [vmem:[%s3643 + $0x48] sm:$0xf]
        %v3663 = vld [vmem:[%s3643 + $0x4c] sm:$0xf]
        %v3664 = vld [vmem:[%s3643 + $0x50] sm:$0xf]
        %v3665 = vld [vmem:[%s3643 + $0x54] sm:$0xf]
        %v3666 = vld [vmem:[%s3643 + $0x58] sm:$0xf]
        %v3667 = vld [vmem:[%s3643 + $0x5c] sm:$0xf]
        %v3668 = vld [vmem:[%s3643 + $0x60] sm:$0xf]
        %v3669 = vld [vmem:[%s3643 + $0x64] sm:$0xf]
        %v3670 = vld [vmem:[%s3643 + $0x68] sm:$0xf]
        %v3671 = vld [vmem:[%s3643 + $0x6c] sm:$0xf]
        %v3672 = vld [vmem:[%s3643 + $0x70] sm:$0xf]
        %v3673 = vld [vmem:[%s3643 + $0x74] sm:$0xf]
        %v3674 = vld [vmem:[%s3643 + $0x78] sm:$0xf]
        %v3675 = vld [vmem:[%s3643 + $0x7c] sm:$0xf]
        %v3676 = vld [vmem:[%s3643 + $0x80] sm:$0xf]
        %v3677 = vld [vmem:[%s3643 + $0x84] sm:$0xf]
        %v3678 = vld [vmem:[%s3643 + $0x88] sm:$0xf]
        %v3679 = vld [vmem:[%s3643 + $0x8c] sm:$0xf]
        %v3680 = vld [vmem:[%s3643 + $0x90] sm:$0xf]
        %v3681 = vld [vmem:[%s3643 + $0x94] sm:$0xf]
        %v3682 = vld [vmem:[%s3643 + $0x98] sm:$0xf]
        %v3683 = vld [vmem:[%s3643 + $0x9c] sm:$0xf]
        %v3684 = vld [vmem:[%s3643 + $0xa0] sm:$0xf]
        %v3685 = vld [vmem:[%s3643 + $0xa4] sm:$0xf]
        %v3686 = vld [vmem:[%s3643 + $0xa8] sm:$0xf]
        %v3687 = vld [vmem:[%s3643 + $0xac] sm:$0xf]
        %v3688 = vld [vmem:[%s3643 + $0xb0] sm:$0xf]
        %v3689 = vld [vmem:[%s3643 + $0xb4] sm:$0xf]
        %v3690 = vld [vmem:[%s3643 + $0xb8] sm:$0xf]
        %v3691 = vld [vmem:[%s3643 + $0xbc] sm:$0xf]
        %v3692 = vrot.slane %v3635, 7
        %v3693 = vrot.slane %v3636, 7
        %v3694 = vrot.slane %v3637, 7
        %v3695 = vrot.slane %v3638, 7
        %v3696 = vrot.slane %v3639, 7
        %v3697 = vrot.slane %v3640, 7
        %v3698 = vrot.slane %v3641, 7
        %v3699 = vrot.slane %v3642, 7
        %v3700 = vsel %vm1281, %v3698, %v3699
        %v3701 = vsel %vm1281, %v3697, %v3698
        %v3702 = vsel %vm1281, %v3696, %v3697
        %v3703 = vsel %vm1281, %v3695, %v3696
        %v3704 = vsel %vm1281, %v3694, %v3695
        %v3705 = vsel %vm1281, %v3693, %v3694
        %v3706 = vsel %vm1281, %v3692, %v3693
        %v3707 = vsel %vm1281, %v3699, %v3692
        %v3708 = vmul.f32 %v3707, %v742
        %v3709 = vmul.f32 %v3706, %v743
        %v3710 = vmul.f32 %v3705, %v744
        %v3711 = vmul.f32 %v3704, %v745
        %v3712 = vmul.f32 %v3703, %v746
        %v3713 = vmul.f32 %v3702, %v747
        %v3714 = vmul.f32 %v3701, %v748
        %v3715 = vmul.f32 %v3700, %v749
        %v3716 = vpack.c.bf16 %v3709, %v3708
        %v3717 = vpack.c.bf16 %v3711, %v3710
        %v3718 = vpack.c.bf16 %v3713, %v3712
        %v3719 = vpack.c.bf16 %v3715, %v3714
        %v3720 = vpack.c.bf16 %v3636, %v3635
        %v3721 = vpack.c.bf16 %v3638, %v3637
        %v3722 = vpack.c.bf16 %v3640, %v3639
        %v3723 = vpack.c.bf16 %v3642, %v3641
        %v3724 = vrot.slane %v3635, 1
        %v3725 = vrot.slane %v3636, 1
        %v3726 = vrot.slane %v3637, 1
        %v3727 = vrot.slane %v3638, 1
        %v3728 = vrot.slane %v3639, 1
        %v3729 = vrot.slane %v3640, 1
        %v3730 = vrot.slane %v3641, 1
        %v3731 = vrot.slane %v3642, 1
        %v3732 = vsel %vm1314, %v3730, %v3731
        %v3733 = vsel %vm1314, %v3729, %v3730
        %v3734 = vsel %vm1314, %v3728, %v3729
        %v3735 = vsel %vm1314, %v3727, %v3728
        %v3736 = vsel %vm1314, %v3726, %v3727
        %v3737 = vsel %vm1314, %v3725, %v3726
        %v3738 = vsel %vm1314, %v3724, %v3725
        %v3739 = vsel %vm1314, %v3731, %v3724
        %v3740 = vmul.f32 %v3738, %v766
        %v3741 = vmul.f32 %v3737, %v767
        %v3742 = vmul.f32 %v3736, %v768
        %v3743 = vmul.f32 %v3735, %v769
        %v3744 = vmul.f32 %v3734, %v770
        %v3745 = vmul.f32 %v3733, %v771
        %v3746 = vmul.f32 %v3732, %v772
        %v3747 = vmul.f32 %v3739, %v773
        %v3748 = vpack.c.bf16 %v3741, %v3740
        %v3749 = vpack.c.bf16 %v3743, %v3742
        %v3750 = vpack.c.bf16 %v3745, %v3744
        %v3751 = vpack.c.bf16 %v3747, %v3746
        %v3800 = vunpack.c.l.b16 %v3644
        %v3801 = vunpack.c.l.b16 %v3645
        %v3802 = vunpack.c.l.b16 %v3646
        %v3803 = vunpack.c.l.b16 %v3647
        %v3804 = vunpack.c.l.b16 %v3648
        %v3805 = vunpack.c.l.b16 %v3649
        %v3806 = vunpack.c.l.b16 %v3650
        %v3807 = vunpack.c.l.b16 %v3651
        %v3808 = vunpack.c.l.b16 %v3652
        %v3809 = vunpack.c.l.b16 %v3653
        %v3810 = vunpack.c.l.b16 %v3654
        %v3811 = vunpack.c.l.b16 %v3655
        %v3812 = vunpack.c.l.b16 %v3656
        %v3813 = vunpack.c.l.b16 %v3657
        %v3814 = vunpack.c.l.b16 %v3658
        %v3815 = vunpack.c.l.b16 %v3659
        %v3816 = vunpack.c.l.b16 %v3660
        %v3817 = vunpack.c.l.b16 %v3661
        %v3818 = vunpack.c.l.b16 %v3662
        %v3819 = vunpack.c.l.b16 %v3663
        %v3820 = vunpack.c.l.b16 %v3664
        %v3821 = vunpack.c.l.b16 %v3665
        %v3822 = vunpack.c.l.b16 %v3666
        %v3823 = vunpack.c.l.b16 %v3667
        %v3824 = vunpack.c.l.b16 %v3668
        %v3825 = vunpack.c.l.b16 %v3669
        %v3826 = vunpack.c.l.b16 %v3670
        %v3827 = vunpack.c.l.b16 %v3671
        %v3828 = vunpack.c.l.b16 %v3672
        %v3829 = vunpack.c.l.b16 %v3673
        %v3830 = vunpack.c.l.b16 %v3674
        %v3831 = vunpack.c.l.b16 %v3675
        %v3832 = vunpack.c.l.b16 %v3676
        %v3833 = vunpack.c.l.b16 %v3677
        %v3834 = vunpack.c.l.b16 %v3678
        %v3835 = vunpack.c.l.b16 %v3679
        %v3836 = vunpack.c.l.b16 %v3680
        %v3837 = vunpack.c.l.b16 %v3681
        %v3838 = vunpack.c.l.b16 %v3682
        %v3839 = vunpack.c.l.b16 %v3683
        %v3840 = vunpack.c.l.b16 %v3684
        %v3841 = vunpack.c.l.b16 %v3685
        %v3842 = vunpack.c.l.b16 %v3686
        %v3843 = vunpack.c.l.b16 %v3687
        %v3844 = vunpack.c.l.b16 %v3688
        %v3845 = vunpack.c.l.b16 %v3689
        %v3846 = vunpack.c.l.b16 %v3690
        %v3847 = vunpack.c.l.b16 %v3691
        %v3848 = vpack.c.b16 %v3801, %v3800
        %v3849 = vpack.c.b16 %v3803, %v3802
        %v3850 = vpack.c.b16 %v3805, %v3804
        %v3851 = vpack.c.b16 %v3807, %v3806
        %v3852 = vpack.c.b16 %v3809, %v3808
        %v3853 = vpack.c.b16 %v3811, %v3810
        %v3854 = vpack.c.b16 %v3813, %v3812
        %v3855 = vpack.c.b16 %v3815, %v3814
        %v3856 = vpack.c.b16 %v3817, %v3816
        %v3857 = vpack.c.b16 %v3819, %v3818
        %v3858 = vpack.c.b16 %v3821, %v3820
        %v3859 = vpack.c.b16 %v3823, %v3822
        %v3860 = vpack.c.b16 %v3825, %v3824
        %v3861 = vpack.c.b16 %v3827, %v3826
        %v3862 = vpack.c.b16 %v3829, %v3828
        %v3863 = vpack.c.b16 %v3831, %v3830
        %v3864 = vpack.c.b16 %v3833, %v3832
        %v3865 = vpack.c.b16 %v3835, %v3834
        %v3866 = vpack.c.b16 %v3837, %v3836
        %v3867 = vpack.c.b16 %v3839, %v3838
        %v3868 = vpack.c.b16 %v3841, %v3840
        %v3869 = vpack.c.b16 %v3843, %v3842
        %v3870 = vpack.c.b16 %v3845, %v3844
        %v3871 = vpack.c.b16 %v3847, %v3846
        %3896 = vmatprep.subr.bf16.mxu0 0
        %3897 = vmatpush1.bf16.msra.mxu0 %v3855
        %3898 = vmatprep.subr.bf16.mxu0 0
        %3899 = vmatpush1.bf16.msra.mxu0 %v3854
        %3900 = vmatprep.subr.bf16.mxu0 0
        %3901 = vmatpush1.bf16.msra.mxu0 %v3853
        %3902 = vmatprep.subr.bf16.mxu0 0
        %3903 = vmatpush1.bf16.msra.mxu0 %v3852
        %3904 = vmatprep.subr.bf16.mxu0 0
        %3905 = vmatpush1.bf16.msra.mxu0 %v3851
        %3906 = vmatprep.subr.bf16.mxu0 0
        %3907 = vmatpush1.bf16.msra.mxu0 %v3850
        %3908 = vmatprep.subr.bf16.mxu0 0
        %3909 = vmatpush1.bf16.msra.mxu0 %v3849
        %3910 = vmatprep.subr.bf16.mxu0 0
        %3911 = vmatpush1.bf16.msra.mxu0 %v3848
        %3912 = vmatprep.subr.bf16.mxu0 0
        %3913 = vmatpush2.bf16.msra.mxu0 %v3863
        %3914 = vmatprep.subr.bf16.mxu0 0
        %3915 = vmatpush2.bf16.msra.mxu0 %v3862
        %3916 = vmatprep.subr.bf16.mxu0 0
        %3917 = vmatpush2.bf16.msra.mxu0 %v3861
        %3918 = vmatprep.subr.bf16.mxu0 0
        %3919 = vmatpush2.bf16.msra.mxu0 %v3860
        %3920 = vmatprep.subr.bf16.mxu0 0
        %3921 = vmatpush2.bf16.msra.mxu0 %v3859
        %3922 = vmatprep.subr.bf16.mxu0 0
        %3923 = vmatpush2.bf16.msra.mxu0 %v3858
        %3924 = vmatprep.subr.bf16.mxu0 0
        %3925 = vmatpush2.bf16.msra.mxu0 %v3857
        %3926 = vmatprep.subr.bf16.mxu0 0
        %3927 = vmatpush2.bf16.msra.mxu0 %v3856
        %3928 = vmatprep.mubr.bf16.mxu0 %v3720
        %3929 = vmatmul.mubr.bf16.gmra.mxu0 %v3716
        %v3930 = vpop.f32.mrf.mxu0
        %v3931 = vadd.f32 0.0, %v3930
        %v3932 = vpop.f32.mrf.mxu0
        %v3933 = vpop.f32.mrf.mxu0
        %v3934 = vadd.f32 0.0, %v3933
        %v3935 = vpop.f32.mrf.mxu0
        %3936 = vmatprep.mubr.bf16.mxu0 %v3721
        %3937 = vmatmul.mubr.bf16.gmra.mxu0 %v3717
        %v3938 = vpop.f32.mrf.mxu0
        %v3939 = vadd.f32 0.0, %v3938
        %v3940 = vpop.f32.mrf.mxu0
        %v3941 = vpop.f32.mrf.mxu0
        %v3942 = vadd.f32 0.0, %v3941
        %v3943 = vpop.f32.mrf.mxu0
        %3944 = vmatprep.mubr.bf16.mxu0 %v3722
        %3945 = vmatmul.mubr.bf16.gmra.mxu0 %v3718
        %v3946 = vpop.f32.mrf.mxu0
        %v3947 = vadd.f32 0.0, %v3946
        %v3948 = vpop.f32.mrf.mxu0
        %v3949 = vpop.f32.mrf.mxu0
        %v3950 = vadd.f32 0.0, %v3949
        %v3951 = vpop.f32.mrf.mxu0
        %3952 = vmatprep.mubr.bf16.mxu0 %v3723
        %3953 = vmatmul.mubr.bf16.gmra.mxu0 %v3719
        %v3954 = vpop.f32.mrf.mxu0
        %v3955 = vadd.f32 0.0, %v3954
        %v3956 = vpop.f32.mrf.mxu0
        %v3957 = vpop.f32.mrf.mxu0
        %v3958 = vadd.f32 0.0, %v3957
        %v3959 = vpop.f32.mrf.mxu0
        %3960 = vdwg.mxu0
        %3961 = vmatprep.subr.bf16.mxu0 0
        %3962 = vmatpush1.bf16.msra.mxu0 %v3871
        %3963 = vmatprep.subr.bf16.mxu0 0
        %3964 = vmatpush1.bf16.msra.mxu0 %v3870
        %3965 = vmatprep.subr.bf16.mxu0 0
        %3966 = vmatpush1.bf16.msra.mxu0 %v3869
        %3967 = vmatprep.subr.bf16.mxu0 0
        %3968 = vmatpush1.bf16.msra.mxu0 %v3868
        %3969 = vmatprep.subr.bf16.mxu0 0
        %3970 = vmatpush1.bf16.msra.mxu0 %v3867
        %3971 = vmatprep.subr.bf16.mxu0 0
        %3972 = vmatpush1.bf16.msra.mxu0 %v3866
        %3973 = vmatprep.subr.bf16.mxu0 0
        %3974 = vmatpush1.bf16.msra.mxu0 %v3865
        %3975 = vmatprep.subr.bf16.mxu0 0
        %3976 = vmatpush1.bf16.msra.mxu0 %v3864
        %3977 = vmatprep.subr.bf16.mxu0 0
        %3978 = vmatpush2.bf16.msra.mxu0 0
        %3979 = vmatprep.subr.bf16.mxu0 0
        %3980 = vmatpush2.bf16.msra.mxu0 0
        %3981 = vmatprep.subr.bf16.mxu0 0
        %3982 = vmatpush2.bf16.msra.mxu0 0
        %3983 = vmatprep.subr.bf16.mxu0 0
        %3984 = vmatpush2.bf16.msra.mxu0 0
        %3985 = vmatprep.subr.bf16.mxu0 0
        %3986 = vmatpush2.bf16.msra.mxu0 0
        %3987 = vmatprep.subr.bf16.mxu0 0
        %3988 = vmatpush2.bf16.msra.mxu0 0
        %3989 = vmatprep.subr.bf16.mxu0 0
        %3990 = vmatpush2.bf16.msra.mxu0 0
        %3991 = vmatprep.subr.bf16.mxu0 0
        %3992 = vmatpush2.bf16.msra.mxu0 0
        %3993 = vmatprep.mubr.bf16.mxu0 0
        %3994 = vmatmul.mubr.bf16.gmra.mxu0 %v3748
        %v3995 = vpop.f32.mrf.mxu0
        %v3996 = vadd.f32 %v3931, %v3995
        %v3997 = vpop.f32.mrf.mxu0
        %v3998 = vpop.f32.mrf.mxu0
        %v3999 = vadd.f32 %v3934, %v3998
        %v4000 = vpop.f32.mrf.mxu0
        %4001 = vmatprep.mubr.bf16.mxu0 0
        %4002 = vmatmul.mubr.bf16.gmra.mxu0 %v3749
        %v4003 = vpop.f32.mrf.mxu0
        %v4004 = vadd.f32 %v3939, %v4003
        %v4005 = vpop.f32.mrf.mxu0
        %v4006 = vpop.f32.mrf.mxu0
        %v4007 = vadd.f32 %v3942, %v4006
        %v4008 = vpop.f32.mrf.mxu0
        %4009 = vmatprep.mubr.bf16.mxu0 0
        %4010 = vmatmul.mubr.bf16.gmra.mxu0 %v3750
        %v4011 = vpop.f32.mrf.mxu0
        %v4012 = vadd.f32 %v3947, %v4011
        %v4013 = vpop.f32.mrf.mxu0
        %v4014 = vpop.f32.mrf.mxu0
        %v4015 = vadd.f32 %v3950, %v4014
        %v4016 = vpop.f32.mrf.mxu0
        %4017 = vmatprep.mubr.bf16.mxu0 0
        %4018 = vmatmul.mubr.bf16.gmra.mxu0 %v3751
        %v4019 = vpop.f32.mrf.mxu0
        %v4020 = vadd.f32 %v3955, %v4019
        %v4021 = vpop.f32.mrf.mxu0
        %v4022 = vpop.f32.mrf.mxu0
        %v4023 = vadd.f32 %v3958, %v4022
        %v4024 = vpop.f32.mrf.mxu0
        %4025 = vdwg.mxu0
        %v4026 = vadd.f32 %v3605, %v3996
        %v4027 = vadd.f32 %v3608, %v3999
        %v4028 = vadd.f32 %v3613, %v4004
        %v4029 = vadd.f32 %v3616, %v4007
        %v4030 = vadd.f32 %v3621, %v4012
        %v4031 = vadd.f32 %v3624, %v4015
        %v4032 = vadd.f32 %v3629, %v4020
        %v4033 = vadd.f32 %v3632, %v4023
        %v4035 = vlaneseq
        %v4036 = vshrl.u32 %v4035, 7
        %v4037 = vsub.s32 0, %v4036
        %v4038 = vrot.slane %v2861, %v4037
        %v4040 = vadd.f32 %v4026, %v4038
        %v4041 = vadd.f32 %v4027, %v4038
        %v4042 = vadd.f32 %v4028, %v4038
        %v4043 = vadd.f32 %v4029, %v4038
        %v4044 = vadd.f32 %v4030, %v4038
        %v4045 = vadd.f32 %v4031, %v4038
        %v4046 = vadd.f32 %v4032, %v4038
        %v4047 = vadd.f32 %v4033, %v4038
        %v4048 = vpack.c.bf16 %v566, %v565
        %v4049 = vpack.c.bf16 %v568, %v567
        %v4050 = vpack.c.bf16 %v570, %v569
        %v4051 = vpack.c.bf16 %v572, %v571
        %v4052 = vld [vmem:[%s14] sm:$0xf]
        %v4053 = vld [vmem:[%s14 + $0x4] sm:$0xf]
        %v4054 = vld [vmem:[%s14 + $0x8] sm:$0xf]
        %v4055 = vld [vmem:[%s14 + $0xc] sm:$0xf]
        %v4056 = vld [vmem:[%s14 + $0x10] sm:$0xf]
        %v4057 = vld [vmem:[%s14 + $0x14] sm:$0xf]
        %v4058 = vld [vmem:[%s14 + $0x18] sm:$0xf]
        %v4059 = vld [vmem:[%s14 + $0x1c] sm:$0xf]
        %v4060 = vld [vmem:[%s14 + $0x20] sm:$0xf]
        %v4061 = vld [vmem:[%s14 + $0x24] sm:$0xf]
        %v4062 = vld [vmem:[%s14 + $0x28] sm:$0xf]
        %v4063 = vld [vmem:[%s14 + $0x2c] sm:$0xf]
        %v4064 = vld [vmem:[%s14 + $0x30] sm:$0xf]
        %v4065 = vld [vmem:[%s14 + $0x34] sm:$0xf]
        %v4066 = vld [vmem:[%s14 + $0x38] sm:$0xf]
        %v4067 = vld [vmem:[%s14 + $0x3c] sm:$0xf]
        %v4068 = vld [vmem:[%s15] sm:$0x1]
        %v4070 = vlaneseq
        %v4071 = vshrl.u32 %v4070, 7
        %v4072 = vsub.s32 0, %v4071
        %v4073 = vrot.slane %v4068, %v4072
        %v4091 = vunpack.c.l.b16 %v4052
        %v4092 = vunpack.c.l.b16 %v4053
        %v4093 = vunpack.c.l.b16 %v4054
        %v4094 = vunpack.c.l.b16 %v4055
        %v4095 = vunpack.c.l.b16 %v4056
        %v4096 = vunpack.c.l.b16 %v4057
        %v4097 = vunpack.c.l.b16 %v4058
        %v4098 = vunpack.c.l.b16 %v4059
        %v4099 = vunpack.c.l.b16 %v4060
        %v4100 = vunpack.c.l.b16 %v4061
        %v4101 = vunpack.c.l.b16 %v4062
        %v4102 = vunpack.c.l.b16 %v4063
        %v4103 = vunpack.c.l.b16 %v4064
        %v4104 = vunpack.c.l.b16 %v4065
        %v4105 = vunpack.c.l.b16 %v4066
        %v4106 = vunpack.c.l.b16 %v4067
        %v4107 = vpack.c.b16 %v4092, %v4091
        %v4108 = vpack.c.b16 %v4094, %v4093
        %v4109 = vpack.c.b16 %v4096, %v4095
        %v4110 = vpack.c.b16 %v4098, %v4097
        %v4111 = vpack.c.b16 %v4100, %v4099
        %v4112 = vpack.c.b16 %v4102, %v4101
        %v4113 = vpack.c.b16 %v4104, %v4103
        %v4114 = vpack.c.b16 %v4106, %v4105
        %4123 = vmatprep.subr.bf16.mxu0 0
        %4124 = vmatpush1.bf16.msra.mxu0 %v4114
        %4125 = vmatprep.subr.bf16.mxu0 0
        %4126 = vmatpush1.bf16.msra.mxu0 %v4113
        %4127 = vmatprep.subr.bf16.mxu0 0
        %4128 = vmatpush1.bf16.msra.mxu0 %v4112
        %4129 = vmatprep.subr.bf16.mxu0 0
        %4130 = vmatpush1.bf16.msra.mxu0 %v4111
        %4131 = vmatprep.subr.bf16.mxu0 0
        %4132 = vmatpush1.bf16.msra.mxu0 %v4110
        %4133 = vmatprep.subr.bf16.mxu0 0
        %4134 = vmatpush1.bf16.msra.mxu0 %v4109
        %4135 = vmatprep.subr.bf16.mxu0 0
        %4136 = vmatpush1.bf16.msra.mxu0 %v4108
        %4137 = vmatprep.subr.bf16.mxu0 0
        %4138 = vmatpush1.bf16.msra.mxu0 %v4107
        %4139 = vmatprep.subr.bf16.mxu0 0
        %4140 = vmatpush2.bf16.msra.mxu0 0
        %4141 = vmatprep.subr.bf16.mxu0 0
        %4142 = vmatpush2.bf16.msra.mxu0 0
        %4143 = vmatprep.subr.bf16.mxu0 0
        %4144 = vmatpush2.bf16.msra.mxu0 0
        %4145 = vmatprep.subr.bf16.mxu0 0
        %4146 = vmatpush2.bf16.msra.mxu0 0
        %4147 = vmatprep.subr.bf16.mxu0 0
        %4148 = vmatpush2.bf16.msra.mxu0 0
        %4149 = vmatprep.subr.bf16.mxu0 0
        %4150 = vmatpush2.bf16.msra.mxu0 0
        %4151 = vmatprep.subr.bf16.mxu0 0
        %4152 = vmatpush2.bf16.msra.mxu0 0
        %4153 = vmatprep.subr.bf16.mxu0 0
        %4154 = vmatpush2.bf16.msra.mxu0 0
        %4155 = vmatprep.mubr.bf16.mxu0 0
        %4156 = vmatmul.mubr.bf16.gmra.mxu0 %v4048
        %v4157 = vpop.f32.mrf.mxu0
        %v4158 = vadd.f32 %v4073, %v4157
        %v4159 = vpop.f32.mrf.mxu0
        %v4160 = vpop.f32.mrf.mxu0
        %v4161 = vadd.f32 %v4073, %v4160
        %v4162 = vpop.f32.mrf.mxu0
        %4163 = vmatprep.mubr.bf16.mxu0 0
        %4164 = vmatmul.mubr.bf16.gmra.mxu0 %v4049
        %v4165 = vpop.f32.mrf.mxu0
        %v4166 = vadd.f32 %v4073, %v4165
        %v4167 = vpop.f32.mrf.mxu0
        %v4168 = vpop.f32.mrf.mxu0
        %v4169 = vadd.f32 %v4073, %v4168
        %v4170 = vpop.f32.mrf.mxu0
        %4171 = vmatprep.mubr.bf16.mxu0 0
        %4172 = vmatmul.mubr.bf16.gmra.mxu0 %v4050
        %v4173 = vpop.f32.mrf.mxu0
        %v4174 = vadd.f32 %v4073, %v4173
        %v4175 = vpop.f32.mrf.mxu0
        %v4176 = vpop.f32.mrf.mxu0
        %v4177 = vadd.f32 %v4073, %v4176
        %v4178 = vpop.f32.mrf.mxu0
        %4179 = vmatprep.mubr.bf16.mxu0 0
        %4180 = vmatmul.mubr.bf16.gmra.mxu0 %v4051
        %v4181 = vpop.f32.mrf.mxu0
        %v4182 = vadd.f32 %v4073, %v4181
        %v4183 = vpop.f32.mrf.mxu0
        %v4184 = vpop.f32.mrf.mxu0
        %v4185 = vadd.f32 %v4073, %v4184
        %v4186 = vpop.f32.mrf.mxu0
        %4187 = vdwg.mxu0
        %v4188 = vadd.f32 %v4158, %v4040
        %v4189 = vadd.f32 %v4161, %v4041
        %v4190 = vadd.f32 %v4166, %v4042
        %v4191 = vadd.f32 %v4169, %v4043
        %v4192 = vadd.f32 %v4174, %v4044
        %v4193 = vadd.f32 %v4177, %v4045
        %v4194 = vadd.f32 %v4182, %v4046
        %v4195 = vadd.f32 %v4185, %v4047
        %4196 = vst [vmem:[%s555] sm:$0xff] %v4188
        %4197 = vst [vmem:[%s555 + $0x8] sm:$0xff] %v4189
        %4198 = vst [vmem:[%s555 + $0x10] sm:$0xff] %v4190
        %4199 = vst [vmem:[%s555 + $0x18] sm:$0xff] %v4191
        %4200 = vst [vmem:[%s555 + $0x20] sm:$0xff] %v4192
        %4201 = vst [vmem:[%s555 + $0x28] sm:$0xff] %v4193
        %4202 = vst [vmem:[%s555 + $0x30] sm:$0xff] %v4194
        %4203 = vst [vmem:[%s555 + $0x38] sm:$0xff] %v4195
        %s4204 = sand.u32 %s386, 1
        %s4205 = scalar_lea.sflag [#allocation4], %s4204
        %s4206 = sand.u32 %s386, 1
        %s4207 = smul.addr %s4206, 64
        %s4208 = scalar_lea.vmem [#allocation7], %s4207
        // Predicated region
        $region93: #{tpu_custom_call.1} parent=83 // pred_check
          %p4209 = pneg %p396
        $region94: #{tpu_custom_call.1} parent=83 // pred_check_branch
          %4211 = sbr.rel (%p4209) target = $region96
        $region95: #{tpu_custom_call.1} parent=83 // pred_region
          %s4213 = ssub.s32 1024, 1024
          %4214 = vsyncadd %s4205, %s4213
          %s4215 = smul.addr %s32, 8
          %s4216 = smul.addr %s4215, 128
          %s4217 = scalar_lea.hbm %s16, %s4216
          %s4218 = sshll.u32 %s4208, 4
          %s4219 = int_to_ptr.vmem [resolvable:$true] %s4218
          %4224 = dma.vmem_to_hbm [thread:$0]  %s4219, 1024, %s4217, %s4205, 128, 128, 8
        $region96: #{tpu_custom_call.1} parent=83 // pred_fallthru
          _
      $region84: #{tpu_custom_call.1} parent=5 // pred_fallthru
        _
      %p4225 = scmp.le.s32.totalorder 2, %s27
      // Predicated region
      $region97: #{tpu_custom_call.1} parent=5 // pred_check
        %p4226 = pneg %p4225
      $region98: #{tpu_custom_call.1} parent=5 // pred_check_branch
        %4228 = sbr.rel (%p4226) target = $region100
      $region99: #{tpu_custom_call.1} parent=5 // pred_region
        %s4229 = ssub.s32 %s27, 2
        // Predicated region
        $region101: #{tpu_custom_call.1} parent=99 // pred_check
          %p4230 = pneg %p402
        $region102: #{tpu_custom_call.1} parent=99 // pred_check_branch
          %4232 = sbr.rel (%p4230) target = $region104
        $region103: #{tpu_custom_call.1} parent=99 // pred_region
          %s4233 = sand.u32 %s387, 1
          %s4234 = scalar_lea.sflag [#allocation4], %s4233
          %s4235 = sand.u32 %s387, 1
          %s4236 = smul.addr %s4235, 64
          %s4237 = scalar_lea.vmem [#allocation7], %s4236
          %4238 = dma.done %s4234, 1024
        $region104: #{tpu_custom_call.1} parent=99 // pred_fallthru
          _
      $region100: #{tpu_custom_call.1} parent=5 // pred_fallthru
        _
    $region6: #{tpu_custom_call.1} parent=1 // loop_footer
      %s31 = sadd.s32 1, %s27
    $region7: #{tpu_custom_call.1} parent=1 // loop_footer_branch
      %26 = sbr.rel target = $region3
    $region8: #{tpu_custom_call.1} parent=1 // loop_exit
      _
    %4239 = vsyncpa [#allocation3], 1
    %s4240 = scalar_lea.sflag [#allocation3], 1
    %4241 = vsyncpa %s4240, 1
    %4242 = vsyncpa [#allocation6], 1
    %4243 = vsyncpa [#allocation4], 1
    %s4244 = scalar_lea.sflag [#allocation4], 1
    %4245 = vsyncpa %s4244, 1

</llo_original>
